<compile_context>
chip_gen: v6e
topology: v6e:2x2x1
jax: 0.10.0
libtpu: 0.0.40
codegen_flags: <defaults>
</compile_context>

<pallas_src>
from functools import partial

import jax
import jax.numpy as jnp
from jax import lax
from jax.experimental import pallas as pl
from jax.experimental.pallas import tpu as pltpu

# Finite "minus infinity": exp underflows to exactly 0 for masked/padded keys,
# so padded rows never produce NaNs that could leak through reductions.
_NEG_INF = -1e30


def _siglip_attention_kernel(x_ref, wqkv_ref, bqkv_ref, wo_ref, bo_ref, *rest,
                             num_heads_per_group, head_dim, compute_dtype,
                             has_mask, has_kpad, with_attnw):
    # Variable tail: [mask?] [kpad?] out [attnw?] acc_scratch (flags are static).
    idx = 0
    mask_ref = None
    if has_mask:
        mask_ref = rest[idx]; idx += 1
    kpad_ref = None
    if has_kpad:
        kpad_ref = rest[idx]; idx += 1
    out_ref = rest[idx]; idx += 1
    attnw_ref = None
    if with_attnw:
        attnw_ref = rest[idx]; idx += 1
    acc_ref = rest[idx]

    G = num_heads_per_group
    hd = head_dim
    GH = G * hd

    g = pl.program_id(1)
    last_g = pl.num_programs(1) - 1

    # ---- fused Q/K/V projection for this head group -------------------------
    # One lane-dense (S, D) x (D, 3*G*hd) MXU matmul replaces 3*G narrow
    # (D, head_dim) matmuls.  x / weights already arrive in compute_dtype
    # (host-side cast), so there is no per-head VPU cast of x either.
    # Softmax scale is pre-folded into the Q columns of wqkv/bqkv on the host.
    x = x_ref[0]                                               # (S, D)  compute_dtype
    w = wqkv_ref[0]                                            # (D, 3*GH) compute_dtype
    qkv = jnp.dot(x, w, preferred_element_type=jnp.float32) + bqkv_ref[0]   # (S, 3*GH) f32

    ctx_parts = []
    for gi in range(G):                                        # static unroll over the group
        q = qkv[:, gi * hd:(gi + 1) * hd]                      # (S, hd) f32 (scale folded in)
        k = qkv[:, GH + gi * hd: GH + (gi + 1) * hd]
        v = qkv[:, 2 * GH + gi * hd: 2 * GH + (gi + 1) * hd]

        # scores = q @ k^T; dot_general contracting on the last dims (no XLU transpose).
        scores = lax.dot_general(
            q.astype(compute_dtype), k.astype(compute_dtype),
            (((1,), (1,)), ((), ())),
            preferred_element_type=jnp.float32)                # (S, S) f32
        if has_mask:
            scores = scores + mask_ref[0, 0]                   # user additive mask
        if has_kpad:
            scores = scores + kpad_ref[...]                    # (1, S) padded-key bias

        # f32 softmax (max-subtracted).  EUP approximate reciprocal + one
        # Newton step instead of an S-wide divide (perf feedback).
        m = jnp.max(scores, axis=-1, keepdims=True)
        e = jnp.exp(scores - m)
        denom = jnp.sum(e, axis=-1, keepdims=True)
        r = pl.reciprocal(denom, approx=True)
        r = r * (2.0 - denom * r)                              # Newton refinement
        p = e * r                                              # (S, S) f32

        if with_attnw:
            attnw_ref[0, gi] = p.astype(attnw_ref.dtype)

        # attn_output_h = p @ v_h (probabilities cast to compute_dtype like HF).
        ctx_parts.append(
            jnp.dot(p.astype(compute_dtype), v.astype(compute_dtype),
                    preferred_element_type=jnp.float32))       # (S, hd) f32

    # ---- output projection contribution of this head group ------------------
    # Concatenating the group's heads makes the contraction dim G*hd (>= 256 at
    # real Siglip shapes) instead of head_dim.
    ctx = jnp.concatenate(ctx_parts, axis=-1).astype(compute_dtype)        # (S, GH)
    contrib = jnp.dot(ctx, wo_ref[0], preferred_element_type=jnp.float32)  # (S, D) f32

    @pl.when(g == 0)
    def _():
        # Seed the accumulator with the out-proj bias so the epilogue is a plain store.
        acc_ref[...] = jnp.broadcast_to(bo_ref[...].astype(jnp.float32), acc_ref.shape)

    @pl.when(g != last_g)
    def _():
        acc_ref[...] += contrib

    @pl.when(g == last_g)
    def _():
        out_ref[0] = (acc_ref[...] + contrib).astype(out_ref.dtype)


def _pick_head_group(num_heads, head_dim, requested=None):
    """Smallest divisor G of num_heads with G*head_dim >= 256 (v6e/v7x MXU width)."""
    if requested is not None:
        if num_heads % requested != 0:
            raise ValueError("head_group_size must divide num_heads")
        return requested
    for g in range(1, num_heads + 1):
        if num_heads % g == 0 and g * head_dim >= 256:
            return g
    return num_heads


def _vmem_limit_bytes(Sp, D, GH, G, cd_bytes, out_bytes, attnw_bytes,
                      has_mask, has_kpad, with_attnw):
    """Footprint-derived scoped-VMEM budget (double-buffered blocks + scratch + temporaries)."""
    blocks = 0
    blocks += 2 * Sp * D * cd_bytes            # x
    blocks += 2 * D * 3 * GH * cd_bytes        # fused QKV weight slab
    blocks += 2 * 3 * GH * 4                   # fused QKV bias
    blocks += 2 * GH * D * cd_bytes            # out-proj weight slab
    blocks += 2 * D * 4                        # out-proj bias
    if has_mask:
        blocks += 2 * Sp * Sp * 4
    if has_kpad:
        blocks += 2 * Sp * 4
    blocks += 2 * Sp * D * out_bytes           # out
    if with_attnw:
        blocks += 2 * G * Sp * Sp * attnw_bytes
    blocks += Sp * D * 4                       # f32 accumulator scratch
    blocks += 4 * Sp * Sp * 4                  # softmax temporaries / spill headroom
    blocks += 2 * Sp * 3 * GH * 4              # qkv / ctx f32 intermediates
    try:
        info = pltpu.get_tpu_info()
        phys = int(getattr(info, "vmem_capacity_bytes", 0)) or (64 << 20)
    except Exception:
        phys = 64 << 20                        # assume the smallest (v7x: 64 MiB)
    return int(min(phys * 3 // 4, max(blocks, 32 << 20)))


def siglip_attention(x, params, num_heads, attention_mask=None,
                     compute_dtype=None, attn_weights_dtype=None,
                     return_attn_weights=True, head_group_size=None):
    """Pallas forward for SiglipAttention.

    x:      (B, S, D) activations.
    params: dict with 'wq','wk','wv','wo' as (in, out) matrices (PyTorch weight
            transposed) and 'bq','bk','bv','bo' as (1, D) biases, all f32.
    attention_mask: optional additive mask of shape (B, 1, S, S).
    compute_dtype:  MXU input dtype.  Defaults to bfloat16 (perf feedback);
            softmax and accumulation stay f32.  Pass jnp.float32 for strict
            parity with the eval-mode PyTorch module.
    attn_weights_dtype: dtype of the returned attention maps (default:
            compute_dtype) — bf16 halves the dominant HBM writeback.
    return_attn_weights: skip the O(H*S^2) writeback entirely when not needed.
    head_group_size: heads processed per grid step (default: auto, G*hd >= 256).
    """
    B, S, D = x.shape
    head_dim = D // num_heads
    if head_dim * num_heads != D:
        raise ValueError("hidden size must be divisible by num_heads")
    scale = head_dim ** -0.5
    compute_dtype = jnp.bfloat16 if compute_dtype is None else compute_dtype
    attnw_dtype = compute_dtype if attn_weights_dtype is None else attn_weights_dtype
    out_dtype = x.dtype

    G = _pick_head_group(num_heads, head_dim, head_group_size)
    NG = num_heads // G
    GH = G * head_dim

    # ---- host-side (jit-fused, one-time) weight prep -------------------------
    def grp_w(w):   # (D, D) -> (NG, D, GH): contiguous per-group column slabs
        return w.reshape(D, NG, GH).transpose(1, 0, 2)

    def grp_b(b):   # (1, D) -> (NG, 1, GH)
        return b.reshape(NG, 1, GH)

    # Softmax scale folded into the Q projection (perf feedback).
    wqkv = jnp.concatenate(
        [grp_w(params["wq"] * scale), grp_w(params["wk"]), grp_w(params["wv"])],
        axis=2).astype(compute_dtype)                             # (NG, D, 3*GH)
    bqkv = jnp.concatenate(
        [grp_b(params["bq"] * scale), grp_b(params["bk"]), grp_b(params["bv"])],
        axis=2).astype(jnp.float32)                               # (NG, 1, 3*GH)
    wo = params["wo"].reshape(NG, GH, D).astype(compute_dtype)    # (NG, GH, D)
    bo = params["bo"].astype(jnp.float32)                         # (1, D)

    # ---- pad the sequence to a lane-dense multiple of 128 ---------------------
    Sp = ((S + 127) // 128) * 128
    pad = Sp - S
    x_in = x.astype(compute_dtype)                                # host cast (halves DMA)
    if pad:
        x_in = jnp.pad(x_in, ((0, 0), (0, pad), (0, 0)))
    has_kpad = pad > 0
    has_mask = attention_mask is not None
    if has_mask:
        mask_in = attention_mask.astype(jnp.float32)
        if pad:
            mask_in = jnp.pad(mask_in, ((0, 0), (0, 0), (0, pad), (0, pad)))
    if has_kpad:
        kpad = jnp.where(jnp.arange(Sp)[None, :] < S, 0.0, _NEG_INF).astype(jnp.float32)

    in_specs = [
        pl.BlockSpec((1, Sp, D), lambda b, g: (b, 0, 0)),          # x
        pl.BlockSpec((1, D, 3 * GH), lambda b, g: (g, 0, 0)),      # fused QKV weights
        pl.BlockSpec((1, 1, 3 * GH), lambda b, g: (g, 0, 0)),      # fused QKV bias
        pl.BlockSpec((1, GH, D), lambda b, g: (g, 0, 0)),          # out-proj weights
        pl.BlockSpec((1, D), lambda b, g: (0, 0)),                 # out-proj bias
    ]
    inputs = [x_in, wqkv, bqkv, wo, bo]
    if has_mask:
        in_specs.append(pl.BlockSpec((1, 1, Sp, Sp), lambda b, g: (b, 0, 0, 0)))
        inputs.append(mask_in)
    if has_kpad:
        in_specs.append(pl.BlockSpec((1, Sp), lambda b, g: (0, 0)))
        inputs.append(kpad)

    out_shape = [jax.ShapeDtypeStruct((B, Sp, D), out_dtype)]
    out_specs = [pl.BlockSpec((1, Sp, D), lambda b, g: (b, 0, 0))]
    if return_attn_weights:
        out_shape.append(jax.ShapeDtypeStruct((B, num_heads, Sp, Sp), attnw_dtype))
        out_specs.append(pl.BlockSpec((1, G, Sp, Sp), lambda b, g: (b, g, 0, 0)))

    kernel = partial(_siglip_attention_kernel,
                     num_heads_per_group=G, head_dim=head_dim,
                     compute_dtype=compute_dtype,
                     has_mask=has_mask, has_kpad=has_kpad,
                     with_attnw=return_attn_weights)

    vmem_limit = _vmem_limit_bytes(
        Sp, D, GH, G,
        jnp.dtype(compute_dtype).itemsize, jnp.dtype(out_dtype).itemsize,
        jnp.dtype(attnw_dtype).itemsize, has_mask, has_kpad, return_attn_weights)

    results = pl.pallas_call(
        kernel,
        out_shape=tuple(out_shape),
        grid_spec=pltpu.PrefetchScalarGridSpec(
            num_scalar_prefetch=0,
            grid=(B, NG),
            in_specs=in_specs,
            out_specs=out_specs,
            scratch_shapes=[pltpu.VMEM((Sp, D), jnp.float32)],     # out-proj accumulator
        ),
        compiler_params=pltpu.CompilerParams(
            # Batch is megacore-parallel; the group axis carries the output
            # accumulator so it must stay sequential.
            dimension_semantics=("parallel", "arbitrary"),
            vmem_limit_bytes=vmem_limit,
        ),
    )(*inputs)

    if return_attn_weights:
        out, attnw = results
        if pad:
            out = out[:, :S, :]
            attnw = attnw[:, :, :S, :S]
        return out, attnw
    out = results[0]
    if pad:
        out = out[:, :S, :]
    return out, None


def _reference(x, params, num_heads, attention_mask=None):
    """Pure-JAX reference mirroring the PyTorch forward (eval-mode dropout)."""
    B, S, D = x.shape
    head_dim = D // num_heads
    scale = head_dim ** -0.5

    def proj(w, b):
        return x @ w + b[0]

    q = proj(params["wq"], params["bq"]).reshape(B, S, num_heads, head_dim).transpose(0, 2, 1, 3)
    k = proj(params["wk"], params["bk"]).reshape(B, S, num_heads, head_dim).transpose(0, 2, 1, 3)
    v = proj(params["wv"], params["bv"]).reshape(B, S, num_heads, head_dim).transpose(0, 2, 1, 3)

    scores = jnp.einsum("bhqd,bhkd->bhqk", q, k) * scale
    if attention_mask is not None:
        scores = scores + attention_mask
    attnw = jax.nn.softmax(scores.astype(jnp.float32), axis=-1).astype(q.dtype)
    attn_out = jnp.einsum("bhqk,bhkd->bhqd", attnw, v)
    attn_out = attn_out.transpose(0, 2, 1, 3).reshape(B, S, D)
    out = attn_out @ params["wo"] + params["bo"][0]
    return out, attnw


if __name__ == "__main__":
    # Small SiglipVisionConfig-like setup: hidden_size=32, num_attention_heads=4.
    B, S, D, H = 2, 8, 32, 4

    key = jax.random.PRNGKey(0)
    keys = jax.random.split(key, 12)

    # PyTorch nn.Linear stores W as (out, in); generate in that layout and
    # transpose to (in, out) so y = x @ W.T + b is reproduced.
    def make_linear(kw, kb):
        w_pt = jax.random.normal(kw, (D, D), jnp.float32) * 0.05
        b = jax.random.normal(kb, (D,), jnp.float32) * 0.05
        return w_pt.T, b.reshape(1, D)

    wq, bq = make_linear(keys[0], keys[1])
    wk, bk = make_linear(keys[2], keys[3])
    wv, bv = make_linear(keys[4], keys[5])
    wo, bo = make_linear(keys[6], keys[7])
    params = dict(wq=wq, bq=bq, wk=wk, bk=bk, wv=wv, bv=bv, wo=wo, bo=bo)

    x = jax.random.normal(keys[8], (B, S, D), jnp.float32)
    mask = 0.1 * jax.random.normal(keys[9], (B, 1, S, S), jnp.float32)
    out_ref, attnw_ref = _reference(x, params, H)

    # 1) f32 compute, no mask: tight parity (attnw tolerance reflects the
    #    Newton-refined approximate reciprocal, ~1e-5 relative).
    out, attnw = siglip_attention(x, params, H, compute_dtype=jnp.float32)
    out = jax.block_until_ready(out); attnw = jax.block_until_ready(attnw)
    assert out.shape == (B, S, D) and attnw.shape == (B, H, S, S)
    assert jnp.allclose(out, out_ref, atol=2e-5, rtol=2e-5)
    assert jnp.allclose(attnw, attnw_ref, atol=1e-4, rtol=1e-4)

    # 2) Additive attention mask, f32 compute.
    out_m, attnw_m = siglip_attention(x, params, H, attention_mask=mask,
                                      compute_dtype=jnp.float32)
    out_m = jax.block_until_ready(out_m)
    out_mr, attnw_mr = _reference(x, params, H, attention_mask=mask)
    assert jnp.allclose(out_m, out_mr, atol=2e-5, rtol=2e-5)
    assert jnp.allclose(attnw_m, attnw_mr, atol=1e-4, rtol=1e-4)

    # 3) Default (bf16 MXU) path: sanity-check vs the f32 reference.
    out_bf, attnw_bf = siglip_attention(x, params, H)
    out_bf = jax.block_until_ready(out_bf)
    assert attnw_bf.dtype == jnp.bfloat16
    assert jnp.allclose(out_bf, out_ref, atol=3e-2, rtol=3e-2)

    # 4) Attention weights not materialized (drops the O(H*S^2) store).
    out_nw, attnw_nw = siglip_attention(x, params, H, compute_dtype=jnp.float32,
                                        return_attn_weights=False)
    out_nw = jax.block_until_ready(out_nw)
    assert attnw_nw is None
    assert jnp.allclose(out_nw, out_ref, atol=2e-5, rtol=2e-5)

    # 5) Ragged sequence length (exercises the pad-to-128 + key-masking path).
    S2 = 10
    x2 = jax.random.normal(keys[10], (B, S2, D), jnp.float32)
    out2, attnw2 = siglip_attention(x2, params, H, compute_dtype=jnp.float32)
    out2 = jax.block_until_ready(out2)
    out2_ref, attnw2_ref = _reference(x2, params, H)
    assert out2.shape == (B, S2, D) and attnw2.shape == (B, H, S2, S2)
    assert jnp.allclose(out2, out2_ref, atol=2e-5, rtol=2e-5)
    assert jnp.allclose(attnw2, attnw2_ref, atol=1e-4, rtol=1e-4)

    print("KERNEL_OK")
</pallas_src>

<mosaic_0001>
module attributes {stable_mosaic.version = 11 : i64} {
  func.func @_siglip_attention_kernel(%arg0: i32, %arg1: i32, %arg2: memref<1x128x32xf32, #tpu.memory_space<vmem>>, %arg3: memref<1x32x96xf32, #tpu.memory_space<vmem>>, %arg4: memref<1x1x96xf32, #tpu.memory_space<vmem>>, %arg5: memref<1x32x32xf32, #tpu.memory_space<vmem>>, %arg6: memref<1x32xf32, #tpu.memory_space<vmem>>, %arg7: memref<1x128xf32, #tpu.memory_space<vmem>>, %arg8: memref<1x128x32xf32, #tpu.memory_space<vmem>>, %arg9: memref<1x4x128x128xf32, #tpu.memory_space<vmem>>, %arg10: memref<128x32xf32, #tpu.memory_space<vmem>>) attributes {dimension_semantics = [#tpu.dimension_semantics<parallel>, #tpu.dimension_semantics<arbitrary>], iteration_bounds = array<i64: 2, 1>, scalar_prefetch = 0 : i64, scratch_operands = 1 : i64, tpu.core_type = #tpu.core_type<tc>, window_params = [{transform_indices = @transform_0, window_bounds = array<i64: 1, 128, 32>}, {transform_indices = @transform_1, window_bounds = array<i64: 1, 32, 96>}, {transform_indices = @transform_2, window_bounds = array<i64: 1, 1, 96>}, {transform_indices = @transform_3, window_bounds = array<i64: 1, 32, 32>}, {pipeline_mode = #tpu.pipeline_mode<synchronous>, transform_indices = @transform_4, window_bounds = array<i64: 1, 32>}, {pipeline_mode = #tpu.pipeline_mode<synchronous>, transform_indices = @transform_5, window_bounds = array<i64: 1, 128>}, {transform_indices = @transform_6, window_bounds = array<i64: 1, 128, 32>}, {transform_indices = @transform_7, window_bounds = array<i64: 1, 4, 128, 128>}]} {
    %c0 = arith.constant 0 : index
    %c0_0 = arith.constant 0 : index
    %c0_1 = arith.constant 0 : index
    %0 = vector.load %arg2[%c0, %c0_0, %c0_1] : memref<1x128x32xf32, #tpu.memory_space<vmem>>, vector<1x128x32xf32>
    %1 = vector.shape_cast %0 : vector<1x128x32xf32> to vector<128x32xf32>
    %c0_2 = arith.constant 0 : index
    %c0_3 = arith.constant 0 : index
    %c0_4 = arith.constant 0 : index
    %2 = vector.load %arg3[%c0_2, %c0_3, %c0_4] : memref<1x32x96xf32, #tpu.memory_space<vmem>>, vector<1x32x96xf32>
    %3 = vector.shape_cast %2 : vector<1x32x96xf32> to vector<32x96xf32>
    %cst = arith.constant dense<0.000000e+00> : vector<128x96xf32>
    %4 = tpu.matmul %1, %3, %cst {dimension_numbers = #tpu.dot_dimension_numbers<[1], [0], [0], [1], [0, 0, 1, 1], [], []>} : vector<128x32xf32>, vector<32x96xf32>, vector<128x96xf32> -> vector<128x96xf32>
    %c0_5 = arith.constant 0 : index
    %c0_6 = arith.constant 0 : index
    %c0_7 = arith.constant 0 : index
    %5 = vector.load %arg4[%c0_5, %c0_6, %c0_7] : memref<1x1x96xf32, #tpu.memory_space<vmem>>, vector<1x1x96xf32>
    %6 = vector.shape_cast %5 : vector<1x1x96xf32> to vector<1x96xf32>
    %7 = vector.broadcast %6 : vector<1x96xf32> to vector<128x96xf32>
    %8 = arith.addf %4, %7 : vector<128x96xf32>
    %9 = vector.extract_strided_slice %8 {offsets = [0, 0], sizes = [128, 8], strides = [1, 1]} : vector<128x96xf32> to vector<128x8xf32>
    %10 = vector.extract_strided_slice %8 {offsets = [0, 32], sizes = [128, 8], strides = [1, 1]} : vector<128x96xf32> to vector<128x8xf32>
    %11 = vector.extract_strided_slice %8 {offsets = [0, 64], sizes = [128, 8], strides = [1, 1]} : vector<128x96xf32> to vector<128x8xf32>
    %cst_8 = arith.constant dense<0.000000e+00> : vector<128x128xf32>
    %12 = tpu.matmul %9, %10, %cst_8 {dimension_numbers = #tpu.dot_dimension_numbers<[1], [1], [0], [0], [0, 0, 1, 0], [], []>} : vector<128x8xf32>, vector<128x8xf32>, vector<128x128xf32> -> vector<128x128xf32>
    %c0_9 = arith.constant 0 : index
    %c0_10 = arith.constant 0 : index
    %13 = vector.load %arg7[%c0_9, %c0_10] : memref<1x128xf32, #tpu.memory_space<vmem>>, vector<1x128xf32>
    %14 = vector.broadcast %13 : vector<1x128xf32> to vector<128x128xf32>
    %15 = arith.addf %12, %14 : vector<128x128xf32>
    %cst_11 = arith.constant dense<0xFF800000> : vector<128xf32>
    %16 = vector.multi_reduction <maximumf>, %15, %cst_11 [1] : vector<128x128xf32> to vector<128xf32>
    %17 = vector.shape_cast %16 : vector<128xf32> to vector<128x1xf32>
    %18 = vector.broadcast %17 : vector<128x1xf32> to vector<128x128xf32>
    %19 = arith.subf %15, %18 : vector<128x128xf32>
    %20 = math.exp %19 : vector<128x128xf32>
    %cst_12 = arith.constant dense<0.000000e+00> : vector<128xf32>
    %21 = vector.multi_reduction <add>, %20, %cst_12 [1] : vector<128x128xf32> to vector<128xf32>
    %22 = vector.shape_cast %21 : vector<128xf32> to vector<128x1xf32>
    %23 = tpu.reciprocal %22 {approx = true} : vector<128x1xf32> -> vector<128x1xf32>
    %24 = arith.mulf %22, %23 : vector<128x1xf32>
    %cst_13 = arith.constant 2.000000e+00 : f32
    %25 = vector.broadcast %cst_13 : f32 to vector<128x1xf32>
    %26 = arith.subf %25, %24 : vector<128x1xf32>
    %27 = arith.mulf %23, %26 : vector<128x1xf32>
    %28 = vector.broadcast %27 : vector<128x1xf32> to vector<128x128xf32>
    %29 = arith.mulf %20, %28 : vector<128x128xf32>
    %c0_14 = arith.constant 0 : index
    %c0_15 = arith.constant 0 : index
    %c0_16 = arith.constant 0 : index
    %c0_17 = arith.constant 0 : index
    %30 = vector.load %arg9[%c0_14, %c0_15, %c0_16, %c0_17] : memref<1x4x128x128xf32, #tpu.memory_space<vmem>>, vector<1x1x128x128xf32>
    %31 = vector.shape_cast %30 : vector<1x1x128x128xf32> to vector<128x128xf32>
    %32 = vector.shape_cast %29 : vector<128x128xf32> to vector<1x1x128x128xf32>
    tpu.vector_store %arg9[%c0_14, %c0_15, %c0_16, %c0_17], %32 {strides = array<i32>} : memref<1x4x128x128xf32, #tpu.memory_space<vmem>>, vector<1x1x128x128xf32>,
    %cst_18 = arith.constant dense<0.000000e+00> : vector<128x8xf32>
    %33 = tpu.matmul %29, %11, %cst_18 {dimension_numbers = #tpu.dot_dimension_numbers<[1], [0], [0], [1], [0, 0, 1, 1], [], []>} : vector<128x128xf32>, vector<128x8xf32>, vector<128x8xf32> -> vector<128x8xf32>
    %34 = vector.extract_strided_slice %8 {offsets = [0, 8], sizes = [128, 8], strides = [1, 1]} : vector<128x96xf32> to vector<128x8xf32>
    %35 = vector.extract_strided_slice %8 {offsets = [0, 40], sizes = [128, 8], strides = [1, 1]} : vector<128x96xf32> to vector<128x8xf32>
    %36 = vector.extract_strided_slice %8 {offsets = [0, 72], sizes = [128, 8], strides = [1, 1]} : vector<128x96xf32> to vector<128x8xf32>
    %cst_19 = arith.constant dense<0.000000e+00> : vector<128x128xf32>
    %37 = tpu.matmul %34, %35, %cst_19 {dimension_numbers = #tpu.dot_dimension_numbers<[1], [1], [0], [0], [0, 0, 1, 0], [], []>} : vector<128x8xf32>, vector<128x8xf32>, vector<128x128xf32> -> vector<128x128xf32>
    %c0_20 = arith.constant 0 : index
    %c0_21 = arith.constant 0 : index
    %38 = vector.load %arg7[%c0_20, %c0_21] : memref<1x128xf32, #tpu.memory_space<vmem>>, vector<1x128xf32>
    %39 = vector.broadcast %38 : vector<1x128xf32> to vector<128x128xf32>
    %40 = arith.addf %37, %39 : vector<128x128xf32>
    %cst_22 = arith.constant dense<0xFF800000> : vector<128xf32>
    %41 = vector.multi_reduction <maximumf>, %40, %cst_22 [1] : vector<128x128xf32> to vector<128xf32>
    %42 = vector.shape_cast %41 : vector<128xf32> to vector<128x1xf32>
    %43 = vector.broadcast %42 : vector<128x1xf32> to vector<128x128xf32>
    %44 = arith.subf %40, %43 : vector<128x128xf32>
    %45 = math.exp %44 : vector<128x128xf32>
    %cst_23 = arith.constant dense<0.000000e+00> : vector<128xf32>
    %46 = vector.multi_reduction <add>, %45, %cst_23 [1] : vector<128x128xf32> to vector<128xf32>
    %47 = vector.shape_cast %46 : vector<128xf32> to vector<128x1xf32>
    %48 = tpu.reciprocal %47 {approx = true} : vector<128x1xf32> -> vector<128x1xf32>
    %49 = arith.mulf %47, %48 : vector<128x1xf32>
    %cst_24 = arith.constant 2.000000e+00 : f32
    %50 = vector.broadcast %cst_24 : f32 to vector<128x1xf32>
    %51 = arith.subf %50, %49 : vector<128x1xf32>
    %52 = arith.mulf %48, %51 : vector<128x1xf32>
    %53 = vector.broadcast %52 : vector<128x1xf32> to vector<128x128xf32>
    %54 = arith.mulf %45, %53 : vector<128x128xf32>
    %c0_25 = arith.constant 0 : index
    %c1 = arith.constant 1 : index
    %c0_26 = arith.constant 0 : index
    %c0_27 = arith.constant 0 : index
    %55 = vector.load %arg9[%c0_25, %c1, %c0_26, %c0_27] : memref<1x4x128x128xf32, #tpu.memory_space<vmem>>, vector<1x1x128x128xf32>
    %56 = vector.shape_cast %55 : vector<1x1x128x128xf32> to vector<128x128xf32>
    %57 = vector.shape_cast %54 : vector<128x128xf32> to vector<1x1x128x128xf32>
    tpu.vector_store %arg9[%c0_25, %c1, %c0_26, %c0_27], %57 {strides = array<i32>} : memref<1x4x128x128xf32, #tpu.memory_space<vmem>>, vector<1x1x128x128xf32>,
    %cst_28 = arith.constant dense<0.000000e+00> : vector<128x8xf32>
    %58 = tpu.matmul %54, %36, %cst_28 {dimension_numbers = #tpu.dot_dimension_numbers<[1], [0], [0], [1], [0, 0, 1, 1], [], []>} : vector<128x128xf32>, vector<128x8xf32>, vector<128x8xf32> -> vector<128x8xf32>
    %59 = vector.extract_strided_slice %8 {offsets = [0, 16], sizes = [128, 8], strides = [1, 1]} : vector<128x96xf32> to vector<128x8xf32>
    %60 = vector.extract_strided_slice %8 {offsets = [0, 48], sizes = [128, 8], strides = [1, 1]} : vector<128x96xf32> to vector<128x8xf32>
    %61 = vector.extract_strided_slice %8 {offsets = [0, 80], sizes = [128, 8], strides = [1, 1]} : vector<128x96xf32> to vector<128x8xf32>
    %cst_29 = arith.constant dense<0.000000e+00> : vector<128x128xf32>
    %62 = tpu.matmul %59, %60, %cst_29 {dimension_numbers = #tpu.dot_dimension_numbers<[1], [1], [0], [0], [0, 0, 1, 0], [], []>} : vector<128x8xf32>, vector<128x8xf32>, vector<128x128xf32> -> vector<128x128xf32>
    %c0_30 = arith.constant 0 : index
    %c0_31 = arith.constant 0 : index
    %63 = vector.load %arg7[%c0_30, %c0_31] : memref<1x128xf32, #tpu.memory_space<vmem>>, vector<1x128xf32>
    %64 = vector.broadcast %63 : vector<1x128xf32> to vector<128x128xf32>
    %65 = arith.addf %62, %64 : vector<128x128xf32>
    %cst_32 = arith.constant dense<0xFF800000> : vector<128xf32>
    %66 = vector.multi_reduction <maximumf>, %65, %cst_32 [1] : vector<128x128xf32> to vector<128xf32>
    %67 = vector.shape_cast %66 : vector<128xf32> to vector<128x1xf32>
    %68 = vector.broadcast %67 : vector<128x1xf32> to vector<128x128xf32>
    %69 = arith.subf %65, %68 : vector<128x128xf32>
    %70 = math.exp %69 : vector<128x128xf32>
    %cst_33 = arith.constant dense<0.000000e+00> : vector<128xf32>
    %71 = vector.multi_reduction <add>, %70, %cst_33 [1] : vector<128x128xf32> to vector<128xf32>
    %72 = vector.shape_cast %71 : vector<128xf32> to vector<128x1xf32>
    %73 = tpu.reciprocal %72 {approx = true} : vector<128x1xf32> -> vector<128x1xf32>
    %74 = arith.mulf %72, %73 : vector<128x1xf32>
    %cst_34 = arith.constant 2.000000e+00 : f32
    %75 = vector.broadcast %cst_34 : f32 to vector<128x1xf32>
    %76 = arith.subf %75, %74 : vector<128x1xf32>
    %77 = arith.mulf %73, %76 : vector<128x1xf32>
    %78 = vector.broadcast %77 : vector<128x1xf32> to vector<128x128xf32>
    %79 = arith.mulf %70, %78 : vector<128x128xf32>
    %c0_35 = arith.constant 0 : index
    %c2 = arith.constant 2 : index
    %c0_36 = arith.constant 0 : index
    %c0_37 = arith.constant 0 : index
    %80 = vector.load %arg9[%c0_35, %c2, %c0_36, %c0_37] : memref<1x4x128x128xf32, #tpu.memory_space<vmem>>, vector<1x1x128x128xf32>
    %81 = vector.shape_cast %80 : vector<1x1x128x128xf32> to vector<128x128xf32>
    %82 = vector.shape_cast %79 : vector<128x128xf32> to vector<1x1x128x128xf32>
    tpu.vector_store %arg9[%c0_35, %c2, %c0_36, %c0_37], %82 {strides = array<i32>} : memref<1x4x128x128xf32, #tpu.memory_space<vmem>>, vector<1x1x128x128xf32>,
    %cst_38 = arith.constant dense<0.000000e+00> : vector<128x8xf32>
    %83 = tpu.matmul %79, %61, %cst_38 {dimension_numbers = #tpu.dot_dimension_numbers<[1], [0], [0], [1], [0, 0, 1, 1], [], []>} : vector<128x128xf32>, vector<128x8xf32>, vector<128x8xf32> -> vector<128x8xf32>
    %84 = vector.extract_strided_slice %8 {offsets = [0, 24], sizes = [128, 8], strides = [1, 1]} : vector<128x96xf32> to vector<128x8xf32>
    %85 = vector.extract_strided_slice %8 {offsets = [0, 56], sizes = [128, 8], strides = [1, 1]} : vector<128x96xf32> to vector<128x8xf32>
    %86 = vector.extract_strided_slice %8 {offsets = [0, 88], sizes = [128, 8], strides = [1, 1]} : vector<128x96xf32> to vector<128x8xf32>
    %cst_39 = arith.constant dense<0.000000e+00> : vector<128x128xf32>
    %87 = tpu.matmul %84, %85, %cst_39 {dimension_numbers = #tpu.dot_dimension_numbers<[1], [1], [0], [0], [0, 0, 1, 0], [], []>} : vector<128x8xf32>, vector<128x8xf32>, vector<128x128xf32> -> vector<128x128xf32>
    %c0_40 = arith.constant 0 : index
    %c0_41 = arith.constant 0 : index
    %88 = vector.load %arg7[%c0_40, %c0_41] : memref<1x128xf32, #tpu.memory_space<vmem>>, vector<1x128xf32>
    %89 = vector.broadcast %88 : vector<1x128xf32> to vector<128x128xf32>
    %90 = arith.addf %87, %89 : vector<128x128xf32>
    %cst_42 = arith.constant dense<0xFF800000> : vector<128xf32>
    %91 = vector.multi_reduction <maximumf>, %90, %cst_42 [1] : vector<128x128xf32> to vector<128xf32>
    %92 = vector.shape_cast %91 : vector<128xf32> to vector<128x1xf32>
    %93 = vector.broadcast %92 : vector<128x1xf32> to vector<128x128xf32>
    %94 = arith.subf %90, %93 : vector<128x128xf32>
    %95 = math.exp %94 : vector<128x128xf32>
    %cst_43 = arith.constant dense<0.000000e+00> : vector<128xf32>
    %96 = vector.multi_reduction <add>, %95, %cst_43 [1] : vector<128x128xf32> to vector<128xf32>
    %97 = vector.shape_cast %96 : vector<128xf32> to vector<128x1xf32>
    %98 = tpu.reciprocal %97 {approx = true} : vector<128x1xf32> -> vector<128x1xf32>
    %99 = arith.mulf %97, %98 : vector<128x1xf32>
    %cst_44 = arith.constant 2.000000e+00 : f32
    %100 = vector.broadcast %cst_44 : f32 to vector<128x1xf32>
    %101 = arith.subf %100, %99 : vector<128x1xf32>
    %102 = arith.mulf %98, %101 : vector<128x1xf32>
    %103 = vector.broadcast %102 : vector<128x1xf32> to vector<128x128xf32>
    %104 = arith.mulf %95, %103 : vector<128x128xf32>
    %c0_45 = arith.constant 0 : index
    %c3 = arith.constant 3 : index
    %c0_46 = arith.constant 0 : index
    %c0_47 = arith.constant 0 : index
    %105 = vector.load %arg9[%c0_45, %c3, %c0_46, %c0_47] : memref<1x4x128x128xf32, #tpu.memory_space<vmem>>, vector<1x1x128x128xf32>
    %106 = vector.shape_cast %105 : vector<1x1x128x128xf32> to vector<128x128xf32>
    %107 = vector.shape_cast %104 : vector<128x128xf32> to vector<1x1x128x128xf32>
    tpu.vector_store %arg9[%c0_45, %c3, %c0_46, %c0_47], %107 {strides = array<i32>} : memref<1x4x128x128xf32, #tpu.memory_space<vmem>>, vector<1x1x128x128xf32>,
    %cst_48 = arith.constant dense<0.000000e+00> : vector<128x8xf32>
    %108 = tpu.matmul %104, %86, %cst_48 {dimension_numbers = #tpu.dot_dimension_numbers<[1], [0], [0], [1], [0, 0, 1, 1], [], []>} : vector<128x128xf32>, vector<128x8xf32>, vector<128x8xf32> -> vector<128x8xf32>
    %109 = tpu.concatenate %33, %58, %83, %108 in 1 : vector<128x8xf32>, vector<128x8xf32>, vector<128x8xf32>, vector<128x8xf32> -> vector<128x32xf32>
    %c0_49 = arith.constant 0 : index
    %c0_50 = arith.constant 0 : index
    %c0_51 = arith.constant 0 : index
    %110 = vector.load %arg5[%c0_49, %c0_50, %c0_51] : memref<1x32x32xf32, #tpu.memory_space<vmem>>, vector<1x32x32xf32>
    %111 = vector.shape_cast %110 : vector<1x32x32xf32> to vector<32x32xf32>
    %cst_52 = arith.constant dense<0.000000e+00> : vector<128x32xf32>
    %112 = tpu.matmul %109, %111, %cst_52 {dimension_numbers = #tpu.dot_dimension_numbers<[1], [0], [0], [1], [0, 0, 1, 1], [], []>} : vector<128x32xf32>, vector<32x32xf32>, vector<128x32xf32> -> vector<128x32xf32>
    %c0_i32 = arith.constant 0 : i32
    %113 = arith.cmpi eq, %arg1, %c0_i32 : i32
    %114 = arith.extui %113 : i1 to i32
    %c0_i32_53 = arith.constant 0 : i32
    %115 = arith.cmpi ne, %114, %c0_i32_53 : i32
    scf.if %115 {
      %c0_58 = arith.constant 0 : index
      %c0_59 = arith.constant 0 : index
      %122 = vector.load %arg6[%c0_58, %c0_59] : memref<1x32xf32, #tpu.memory_space<vmem>>, vector<1x32xf32>
      %123 = vector.shape_cast %122 : vector<1x32xf32> to vector<1x32xf32>
      %124 = vector.broadcast %123 : vector<1x32xf32> to vector<128x32xf32>
      %c0_60 = arith.constant 0 : index
      %c0_61 = arith.constant 0 : index
      %125 = vector.load %arg10[%c0_60, %c0_61] : memref<128x32xf32, #tpu.memory_space<vmem>>, vector<128x32xf32>
      tpu.vector_store %arg10[%c0_60, %c0_61], %124 {strides = array<i32>} : memref<128x32xf32, #tpu.memory_space<vmem>>, vector<128x32xf32>,
    } else {
    }
    %c0_i32_54 = arith.constant 0 : i32
    %116 = arith.cmpi ne, %arg1, %c0_i32_54 : i32
    %117 = arith.extui %116 : i1 to i32
    %c0_i32_55 = arith.constant 0 : i32
    %118 = arith.cmpi ne, %117, %c0_i32_55 : i32
    scf.if %118 {
      %c0_58 = arith.constant 0 : index
      %c0_59 = arith.constant 0 : index
      %122 = vector.load %arg10[%c0_58, %c0_59] : memref<128x32xf32, #tpu.memory_space<vmem>>, vector<128x32xf32>
      %123 = arith.addf %122, %112 : vector<128x32xf32>
      %c0_60 = arith.constant 0 : index
      %c0_61 = arith.constant 0 : index
      %124 = vector.load %arg10[%c0_60, %c0_61] : memref<128x32xf32, #tpu.memory_space<vmem>>, vector<128x32xf32>
      tpu.vector_store %arg10[%c0_60, %c0_61], %123 {strides = array<i32>} : memref<128x32xf32, #tpu.memory_space<vmem>>, vector<128x32xf32>,
    } else {
    }
    %c0_i32_56 = arith.constant 0 : i32
    %119 = arith.cmpi eq, %arg1, %c0_i32_56 : i32
    %120 = arith.extui %119 : i1 to i32
    %c0_i32_57 = arith.constant 0 : i32
    %121 = arith.cmpi ne, %120, %c0_i32_57 : i32
    scf.if %121 {
      %c0_58 = arith.constant 0 : index
      %c0_59 = arith.constant 0 : index
      %122 = vector.load %arg10[%c0_58, %c0_59] : memref<128x32xf32, #tpu.memory_space<vmem>>, vector<128x32xf32>
      %123 = arith.addf %122, %112 : vector<128x32xf32>
      %c0_60 = arith.constant 0 : index
      %c0_61 = arith.constant 0 : index
      %c0_62 = arith.constant 0 : index
      %124 = vector.load %arg8[%c0_60, %c0_61, %c0_62] : memref<1x128x32xf32, #tpu.memory_space<vmem>>, vector<1x128x32xf32>
      %125 = vector.shape_cast %124 : vector<1x128x32xf32> to vector<128x32xf32>
      %126 = vector.shape_cast %123 : vector<128x32xf32> to vector<1x128x32xf32>
      tpu.vector_store %arg8[%c0_60, %c0_61, %c0_62], %126 {strides = array<i32>} : memref<1x128x32xf32, #tpu.memory_space<vmem>>, vector<1x128x32xf32>,
    } else {
    }
    return
  }
  func.func @transform_0(%arg0: i32, %arg1: i32) -> (i32, i32, i32) {
    %c0_i32 = arith.constant 0 : i32
    %c0_i32_0 = arith.constant 0 : i32
    %c0_i32_1 = arith.constant 0 : i32
    return %arg0, %c0_i32, %c0_i32_0 : i32, i32, i32
  }
  func.func @transform_1(%arg0: i32, %arg1: i32) -> (i32, i32, i32) {
    %c0_i32 = arith.constant 0 : i32
    %c0_i32_0 = arith.constant 0 : i32
    %c0_i32_1 = arith.constant 0 : i32
    return %arg1, %c0_i32, %c0_i32_0 : i32, i32, i32
  }
  func.func @transform_2(%arg0: i32, %arg1: i32) -> (i32, i32, i32) {
    %c0_i32 = arith.constant 0 : i32
    %c0_i32_0 = arith.constant 0 : i32
    %c0_i32_1 = arith.constant 0 : i32
    return %arg1, %c0_i32, %c0_i32_0 : i32, i32, i32
  }
  func.func @transform_3(%arg0: i32, %arg1: i32) -> (i32, i32, i32) {
    %c0_i32 = arith.constant 0 : i32
    %c0_i32_0 = arith.constant 0 : i32
    %c0_i32_1 = arith.constant 0 : i32
    return %arg1, %c0_i32, %c0_i32_0 : i32, i32, i32
  }
  func.func @transform_4(%arg0: i32, %arg1: i32) -> (i32, i32) {
    %c0_i32 = arith.constant 0 : i32
    %c0_i32_0 = arith.constant 0 : i32
    %c0_i32_1 = arith.constant 0 : i32
    return %c0_i32, %c0_i32_0 : i32, i32
  }
  func.func @transform_5(%arg0: i32, %arg1: i32) -> (i32, i32) {
    %c0_i32 = arith.constant 0 : i32
    %c0_i32_0 = arith.constant 0 : i32
    %c0_i32_1 = arith.constant 0 : i32
    return %c0_i32, %c0_i32_0 : i32, i32
  }
  func.func @transform_6(%arg0: i32, %arg1: i32) -> (i32, i32, i32) {
    %c0_i32 = arith.constant 0 : i32
    %c0_i32_0 = arith.constant 0 : i32
    %c0_i32_1 = arith.constant 0 : i32
    return %arg0, %c0_i32, %c0_i32_0 : i32, i32, i32
  }
  func.func @transform_7(%arg0: i32, %arg1: i32) -> (i32, i32, i32, i32) {
    %c0_i32 = arith.constant 0 : i32
    %c0_i32_0 = arith.constant 0 : i32
    %c0_i32_1 = arith.constant 0 : i32
    return %arg0, %arg1, %c0_i32, %c0_i32_0 : i32, i32, i32, i32
  }
}

</mosaic_0001>

<llo_original>
// kernel: tpu_custom_call.1
$region0: #{tpu_custom_call.1}
  #allocation0 [shape = 'u32[]', space=smem, size = 0x4, offset = 0x4, fixed_abs, tag = 'smem constant byte address 0x4 - core index']
  #allocation1 [shape = 'u32[144,128]{1,0:T(1,128)}', space=vmem, size = 0x12000, scoped, tag = 'internal scratch']
  #allocation2 [shape = 'f32[128,32]{1,0:T(8,128)}', space=vmem, size = 0x10000, scoped, tag = 'scratch operand']
  %s0 = inlined_call_operand.vmem [shape: f32[2,128,32], index: 0, kind: input, shape index: {}]
  %s1 = inlined_call_operand.vmem [shape: f32[1,32,96], index: 1, kind: input, shape index: {}]
  %s2 = inlined_call_operand.vmem [shape: f32[1,1,96], index: 2, kind: input, shape index: {}]
  %s3 = inlined_call_operand.vmem [shape: f32[1,32,32], index: 3, kind: input, shape index: {}]
  %s4 = inlined_call_operand.vmem [shape: f32[1,32], index: 4, kind: input, shape index: {}]
  %s5 = inlined_call_operand.vmem [shape: f32[1,128], index: 5, kind: input, shape index: {}]
  %s6 = inlined_call_operand.vmem [shape: f32[2,128,32], index: 6, kind: output, shape index: {0}]
  %s7 = inlined_call_operand.hbm [shape: f32[2,4,128,128], index: 7, kind: output, shape index: {1}]
  %8 = xla_tuple %s6, %s7
  %s9 = sld [smem:[#allocation0]]
  $region77: #{tpu_custom_call.1} parent=0
    _
  %s11 = ssub.s32 1, %s9
  %s12 = scalar_select 0, %s11, %s9
  $region1: #{tpu_custom_call.1} parent=0
    #allocation3 [shape = 'u8[524288]{0}', space=vmem, size = 0x80000, scoped, tag = 'output window, operand 1']
    #allocation4 [shape = 's32[2]{0}', space=sflag, size = 0x8, scoped, tag = 'scoped memory for tpu_custom_call.1']
    %13 = vsyncpa [#allocation4], 0
    %s14 = scalar_lea.sflag [#allocation4], 1
    %15 = vsyncpa %s14, 0
    loop: start=0, step=1, limit=4
    $region2: #{tpu_custom_call.1} parent=1 // loop_pre_header
      _
    $region3: #{tpu_custom_call.1} parent=1 // loop_header
      %s17 = sphi 0, %s21
      %p18 = scmp.ge.s32.totalorder %s17, 4
      %s24 = sphi 0, %s36
      %s25 = sphi 0, %s32
      %s26 = sphi 0, %s24
      %s27 = sphi 0, %s25
      %s28 = sphi 0, %s26
      %s29 = sphi 0, %s27
      %s39 = sphi 0, %s41
      %s42 = sphi 0, %s39
      %s43 = sphi 0, %s42
      %s59 = sphi 0, %s43
      %s65 = sphi 0, %s67
      %s68 = sphi 0, %s65
      %s69 = sphi 0, %s68
      %s85 = sphi 0, %s69
      %s91 = sphi 0, %s93
      %s94 = sphi 0, %s91
      %s95 = sphi 0, %s94
      %s111 = sphi 0, %s95
      %s117 = sphi 0, %s119
      %s120 = sphi 0, %s117
      %s121 = sphi 0, %s120
      %s137 = sphi 0, %s121
      %s141 = sphi 0, %s141
      %s143 = sphi 0, %s141
      %s144 = sphi 0, %s143
      %s158 = sphi 0, %s144
      %s162 = sphi 0, %s162
      %s164 = sphi 0, %s162
      %s165 = sphi 0, %s164
      %s179 = sphi 0, %s165
      %s185 = sphi 0, %s187
      %s188 = sphi 0, %s185
      %s189 = sphi 0, %s188
      %s205 = sphi 0, %s189
      %s213 = sphi 0, %s215
      %s216 = sphi 0, %s213
      %s217 = sphi 0, %s216
      %s233 = sphi 0, %s217
    $region4: #{tpu_custom_call.1} parent=1 // loop_header_branch
      %20 = sbr.rel (%p18) target = $region8
    $region5: #{tpu_custom_call.1} parent=1 // loop_body
      %s22 = ssub.s32 %s17, 1
      %s23 = ssub.s32 %s17, 2
      %s30 = sadd.s32 1, %s25
      %p31 = scmp.ge.s32.totalorder %s30, 1
      %s32 = scalar_select %p31, 0, %s30
      %s33 = sadd.s32 1, %s24
      %s34 = scalar_select %p31, %s33, %s24
      %p35 = scmp.ge.s32.totalorder %s34, 2
      %s36 = scalar_select %p35, 0, %s34
      %s37 = ssub.s32 %s24, %s36
      %p38 = scmp.eq.s32.totalorder %s37, 0
      %s40 = sadd.s32 %s39, 1
      %s41 = scalar_select %p38, %s39, %s40
      %p44 = pneg %p38
      %p45 = scmp.eq.s32.totalorder %s17, 1
      %p46 = por %p44, %p45
      %p47 = scmp.ne.s32.totalorder %s39, %s42
      %p48 = scmp.eq.s32.totalorder %s17, 0
      %p49 = por %p47, %p48
      %p50 = scmp.ne.s32.totalorder %s39, %s42
      %p51 = scmp.eq.s32.totalorder %s22, 1
      %p52 = por %p50, %p51
      %p53 = scmp.ne.s32.totalorder %s42, %s43
      %p54 = scmp.eq.s32.totalorder %s22, 0
      %p55 = por %p53, %p54
      %p56 = scmp.ne.s32.totalorder %s42, %s43
      %p57 = scmp.eq.s32.totalorder %s23, 1
      %p58 = por %p56, %p57
      %p60 = scmp.ne.s32.totalorder %s43, %s59
      %p61 = scmp.eq.s32.totalorder %s23, 0
      %p62 = por %p60, %p61
      %s63 = ssub.s32 %s25, %s32
      %p64 = scmp.eq.s32.totalorder %s63, 0
      %s66 = sadd.s32 %s65, 1
      %s67 = scalar_select %p64, %s65, %s66
      %p70 = pneg %p64
      %p71 = scmp.eq.s32.totalorder %s17, 1
      %p72 = por %p70, %p71
      %p73 = scmp.ne.s32.totalorder %s65, %s68
      %p74 = scmp.eq.s32.totalorder %s17, 0
      %p75 = por %p73, %p74
      %p76 = scmp.ne.s32.totalorder %s65, %s68
      %p77 = scmp.eq.s32.totalorder %s22, 1
      %p78 = por %p76, %p77
      %p79 = scmp.ne.s32.totalorder %s68, %s69
      %p80 = scmp.eq.s32.totalorder %s22, 0
      %p81 = por %p79, %p80
      %p82 = scmp.ne.s32.totalorder %s68, %s69
      %p83 = scmp.eq.s32.totalorder %s23, 1
      %p84 = por %p82, %p83
      %p86 = scmp.ne.s32.totalorder %s69, %s85
      %p87 = scmp.eq.s32.totalorder %s23, 0
      %p88 = por %p86, %p87
      %s89 = ssub.s32 %s25, %s32
      %p90 = scmp.eq.s32.totalorder %s89, 0
      %s92 = sadd.s32 %s91, 1
      %s93 = scalar_select %p90, %s91, %s92
      %p96 = pneg %p90
      %p97 = scmp.eq.s32.totalorder %s17, 1
      %p98 = por %p96, %p97
      %p99 = scmp.ne.s32.totalorder %s91, %s94
      %p100 = scmp.eq.s32.totalorder %s17, 0
      %p101 = por %p99, %p100
      %p102 = scmp.ne.s32.totalorder %s91, %s94
      %p103 = scmp.eq.s32.totalorder %s22, 1
      %p104 = por %p102, %p103
      %p105 = scmp.ne.s32.totalorder %s94, %s95
      %p106 = scmp.eq.s32.totalorder %s22, 0
      %p107 = por %p105, %p106
      %p108 = scmp.ne.s32.totalorder %s94, %s95
      %p109 = scmp.eq.s32.totalorder %s23, 1
      %p110 = por %p108, %p109
      %p112 = scmp.ne.s32.totalorder %s95, %s111
      %p113 = scmp.eq.s32.totalorder %s23, 0
      %p114 = por %p112, %p113
      %s115 = ssub.s32 %s25, %s32
      %p116 = scmp.eq.s32.totalorder %s115, 0
      %s118 = sadd.s32 %s117, 1
      %s119 = scalar_select %p116, %s117, %s118
      %p122 = pneg %p116
      %p123 = scmp.eq.s32.totalorder %s17, 1
      %p124 = por %p122, %p123
      %p125 = scmp.ne.s32.totalorder %s117, %s120
      %p126 = scmp.eq.s32.totalorder %s17, 0
      %p127 = por %p125, %p126
      %p128 = scmp.ne.s32.totalorder %s117, %s120
      %p129 = scmp.eq.s32.totalorder %s22, 1
      %p130 = por %p128, %p129
      %p131 = scmp.ne.s32.totalorder %s120, %s121
      %p132 = scmp.eq.s32.totalorder %s22, 0
      %p133 = por %p131, %p132
      %p134 = scmp.ne.s32.totalorder %s120, %s121
      %p135 = scmp.eq.s32.totalorder %s23, 1
      %p136 = por %p134, %p135
      %p138 = scmp.ne.s32.totalorder %s121, %s137
      %p139 = scmp.eq.s32.totalorder %s23, 0
      %p140 = por %p138, %p139
      %s142 = sadd.s32 %s141, 1
      %p145 = scmp.eq.s32.totalorder %s17, 1
      %p146 = scmp.ne.s32.totalorder %s141, %s143
      %p147 = scmp.eq.s32.totalorder %s17, 0
      %p148 = por %p146, %p147
      %p149 = scmp.ne.s32.totalorder %s141, %s143
      %p150 = scmp.eq.s32.totalorder %s22, 1
      %p151 = por %p149, %p150
      %p152 = scmp.ne.s32.totalorder %s143, %s144
      %p153 = scmp.eq.s32.totalorder %s22, 0
      %p154 = por %p152, %p153
      %p155 = scmp.ne.s32.totalorder %s143, %s144
      %p156 = scmp.eq.s32.totalorder %s23, 1
      %p157 = por %p155, %p156
      %p159 = scmp.ne.s32.totalorder %s144, %s158
      %p160 = scmp.eq.s32.totalorder %s23, 0
      %p161 = por %p159, %p160
      %s163 = sadd.s32 %s162, 1
      %p166 = scmp.eq.s32.totalorder %s17, 1
      %p167 = scmp.ne.s32.totalorder %s162, %s164
      %p168 = scmp.eq.s32.totalorder %s17, 0
      %p169 = por %p167, %p168
      %p170 = scmp.ne.s32.totalorder %s162, %s164
      %p171 = scmp.eq.s32.totalorder %s22, 1
      %p172 = por %p170, %p171
      %p173 = scmp.ne.s32.totalorder %s164, %s165
      %p174 = scmp.eq.s32.totalorder %s22, 0
      %p175 = por %p173, %p174
      %p176 = scmp.ne.s32.totalorder %s164, %s165
      %p177 = scmp.eq.s32.totalorder %s23, 1
      %p178 = por %p176, %p177
      %p180 = scmp.ne.s32.totalorder %s165, %s179
      %p181 = scmp.eq.s32.totalorder %s23, 0
      %p182 = por %p180, %p181
      %s183 = ssub.s32 %s24, %s36
      %p184 = scmp.eq.s32.totalorder %s183, 0
      %s186 = sadd.s32 %s185, 1
      %s187 = scalar_select %p184, %s185, %s186
      %p190 = pneg %p184
      %p191 = scmp.eq.s32.totalorder %s17, 1
      %p192 = por %p190, %p191
      %p193 = scmp.ne.s32.totalorder %s185, %s188
      %p194 = scmp.eq.s32.totalorder %s17, 0
      %p195 = por %p193, %p194
      %p196 = scmp.ne.s32.totalorder %s185, %s188
      %p197 = scmp.eq.s32.totalorder %s22, 1
      %p198 = por %p196, %p197
      %p199 = scmp.ne.s32.totalorder %s188, %s189
      %p200 = scmp.eq.s32.totalorder %s22, 0
      %p201 = por %p199, %p200
      %p202 = scmp.ne.s32.totalorder %s188, %s189
      %p203 = scmp.eq.s32.totalorder %s23, 1
      %p204 = por %p202, %p203
      %p206 = scmp.ne.s32.totalorder %s189, %s205
      %p207 = scmp.eq.s32.totalorder %s23, 0
      %p208 = por %p206, %p207
      %s209 = ssub.s32 %s24, %s36
      %s210 = ssub.s32 %s25, %s32
      %s211 = sor.u32 %s209, %s210
      %p212 = scmp.eq.s32.totalorder %s211, 0
      %s214 = sadd.s32 %s213, 1
      %s215 = scalar_select %p212, %s213, %s214
      %p218 = pneg %p212
      %p219 = scmp.eq.s32.totalorder %s17, 1
      %p220 = por %p218, %p219
      %p221 = scmp.ne.s32.totalorder %s213, %s216
      %p222 = scmp.eq.s32.totalorder %s17, 0
      %p223 = por %p221, %p222
      %p224 = scmp.ne.s32.totalorder %s213, %s216
      %p225 = scmp.eq.s32.totalorder %s22, 1
      %p226 = por %p224, %p225
      %p227 = scmp.ne.s32.totalorder %s216, %s217
      %p228 = scmp.eq.s32.totalorder %s22, 0
      %p229 = por %p227, %p228
      %p230 = scmp.ne.s32.totalorder %s216, %s217
      %p231 = scmp.eq.s32.totalorder %s23, 1
      %p232 = por %p230, %p231
      %p234 = scmp.ne.s32.totalorder %s217, %s233
      %p235 = scmp.eq.s32.totalorder %s23, 0
      %p236 = por %p234, %p235
      %p237 = scmp.le.s32.totalorder 1, %s17
      %p238 = scmp.lt.s32.totalorder %s17, 3
      %p239 = pnand %p237, %p238
      %p240 = pneg %p239
      // Predicated region
      $region9: #{tpu_custom_call.1} parent=5 // pred_check
        _
      $region10: #{tpu_custom_call.1} parent=5 // pred_check_branch
        %242 = sbr.rel (%p239) target = $region12
      $region11: #{tpu_custom_call.1} parent=5 // pred_region
        %s243 = ssub.s32 %s17, 1
        // Predicated region
        $region13: #{tpu_custom_call.1} parent=11 // pred_check
          %p244 = pneg %p81
        $region14: #{tpu_custom_call.1} parent=11 // pred_check_branch
          %246 = sbr.rel (%p244) target = $region16
        $region15: #{tpu_custom_call.1} parent=11 // pred_region
          %p247 = scmp.lt.s32.totalorder %s27, 0
          %s248 = scalar_select %p247, %s27, 0
          %s249 = smul.addr %s248, 4
          %s250 = smul.addr %s249, 8
          %s251 = scalar_lea.vmem %s1, %s250
        $region16: #{tpu_custom_call.1} parent=11 // pred_fallthru
          _
        // Predicated region
        $region17: #{tpu_custom_call.1} parent=11 // pred_check
          %p252 = pneg %p107
        $region18: #{tpu_custom_call.1} parent=11 // pred_check_branch
          %254 = sbr.rel (%p252) target = $region20
        $region19: #{tpu_custom_call.1} parent=11 // pred_region
          %p255 = scmp.lt.s32.totalorder %s27, 0
          %s256 = scalar_select %p255, %s27, 0
          %s257 = scalar_lea.vmem %s2, %s256
        $region20: #{tpu_custom_call.1} parent=11 // pred_fallthru
          _
        // Predicated region
        $region21: #{tpu_custom_call.1} parent=11 // pred_check
          %p258 = pneg %p133
        $region22: #{tpu_custom_call.1} parent=11 // pred_check_branch
          %260 = sbr.rel (%p258) target = $region24
        $region23: #{tpu_custom_call.1} parent=11 // pred_region
          %p261 = scmp.lt.s32.totalorder %s27, 0
          %s262 = scalar_select %p261, %s27, 0
          %s263 = smul.addr %s262, 4
          %s264 = smul.addr %s263, 8
          %s265 = scalar_lea.vmem %s3, %s264
        $region24: #{tpu_custom_call.1} parent=11 // pred_fallthru
          _
        // Predicated region
        $region25: #{tpu_custom_call.1} parent=11 // pred_check
          %p266 = pneg %p154
        $region26: #{tpu_custom_call.1} parent=11 // pred_check_branch
          %268 = sbr.rel (%p266) target = $region28
        $region27: #{tpu_custom_call.1} parent=11 // pred_region
          _
        $region28: #{tpu_custom_call.1} parent=11 // pred_fallthru
          _
        // Predicated region
        $region29: #{tpu_custom_call.1} parent=11 // pred_check
          %p269 = pneg %p175
        $region30: #{tpu_custom_call.1} parent=11 // pred_check_branch
          %271 = sbr.rel (%p269) target = $region32
        $region31: #{tpu_custom_call.1} parent=11 // pred_region
          _
        $region32: #{tpu_custom_call.1} parent=11 // pred_fallthru
          _
      $region12: #{tpu_custom_call.1} parent=5 // pred_fallthru
        _
      %p272 = scmp.lt.s32.totalorder %s17, 2
      // Predicated region
      $region33: #{tpu_custom_call.1} parent=5 // pred_check
        %p273 = pneg %p272
      $region34: #{tpu_custom_call.1} parent=5 // pred_check_branch
        %275 = sbr.rel (%p273) target = $region36
      $region35: #{tpu_custom_call.1} parent=5 // pred_region
        // Predicated region
        $region37: #{tpu_custom_call.1} parent=35 // pred_check
          %p276 = pneg %p49
        $region38: #{tpu_custom_call.1} parent=35 // pred_check_branch
          %278 = sbr.rel (%p276) target = $region40
        $region39: #{tpu_custom_call.1} parent=35 // pred_region
          %p279 = scmp.lt.s32.totalorder %s24, 1
          %s280 = scalar_select %p279, %s24, 1
          %s281 = smul.addr %s280, 16
          %s282 = smul.addr %s281, 8
          %s283 = scalar_lea.vmem %s0, %s282
        $region40: #{tpu_custom_call.1} parent=35 // pred_fallthru
          _
      $region36: #{tpu_custom_call.1} parent=5 // pred_fallthru
        _
      %p284 = scmp.le.s32.totalorder 1, %s17
      %p285 = scmp.lt.s32.totalorder %s17, 3
      %p286 = pnand %p284, %p285
      %p287 = pneg %p286
      // Predicated region
      $region41: #{tpu_custom_call.1} parent=5 // pred_check
        _
      $region42: #{tpu_custom_call.1} parent=5 // pred_check_branch
        %289 = sbr.rel (%p286) target = $region44
      $region43: #{tpu_custom_call.1} parent=5 // pred_region
        %s290 = ssub.s32 %s17, 1
        %p291 = scmp.lt.s32.totalorder %s26, 1
        %s292 = scalar_select %p291, %s26, 1
        %s293 = smul.addr %s292, 16
        %s294 = smul.addr %s293, 8
        %s295 = scalar_lea.vmem %s0, %s294
        %p296 = pneg %p55
        %p297 = pneg %p52
        %p298 = scmp.lt.s32.totalorder %s27, 0
        %s299 = scalar_select %p298, %s27, 0
        %s300 = smul.addr %s299, 4
        %s301 = smul.addr %s300, 8
        %s302 = scalar_lea.vmem %s1, %s301
        %p303 = pneg %p81
        %p304 = pneg %p78
        %p305 = scmp.lt.s32.totalorder %s27, 0
        %s306 = scalar_select %p305, %s27, 0
        %s307 = scalar_lea.vmem %s2, %s306
        %p308 = pneg %p107
        %p309 = pneg %p104
        %p310 = scmp.lt.s32.totalorder %s27, 0
        %s311 = scalar_select %p310, %s27, 0
        %s312 = smul.addr %s311, 4
        %s313 = smul.addr %s312, 8
        %s314 = scalar_lea.vmem %s3, %s313
        %p315 = pneg %p133
        %p316 = pneg %p130
        %p317 = pneg %p154
        %p318 = pneg %p151
        %p319 = pneg %p175
        %p320 = pneg %p172
        %p321 = pneg %p201
        %p322 = pneg %p198
        %p323 = scmp.lt.s32.totalorder %s26, 1
        %s324 = scalar_select %p323, %s26, 1
        %s325 = smul.addr %s324, 16
        %s326 = smul.addr %s325, 8
        %s327 = scalar_lea.vmem %s6, %s326
        %p328 = pneg %p229
        %p329 = pneg %p226
        %s330 = sand.u32 %s216, 1
        %s331 = scalar_lea.sflag [#allocation4], %s330
        %s332 = sand.u32 %s216, 1
        %s333 = smul.addr %s332, 512
        %s334 = scalar_lea.vmem [#allocation3], %s333
        %p335 = scmp.lt.s32.totalorder %s26, 1
        %s336 = scalar_select %p335, %s26, 1
        %s337 = smul.addr %s336, 16
        %s338 = smul.addr %s337, 8
        %s339 = scalar_lea.vmem %s0, %s338
        %p340 = scmp.lt.s32.totalorder %s27, 0
        %s341 = scalar_select %p340, %s27, 0
        %s342 = smul.addr %s341, 4
        %s343 = smul.addr %s342, 8
        %s344 = scalar_lea.vmem %s1, %s343
        %p345 = scmp.lt.s32.totalorder %s27, 0
        %s346 = scalar_select %p345, %s27, 0
        %s347 = scalar_lea.vmem %s2, %s346
        %p348 = scmp.lt.s32.totalorder %s27, 0
        %s349 = scalar_select %p348, %s27, 0
        %s350 = smul.addr %s349, 4
        %s351 = smul.addr %s350, 8
        %s352 = scalar_lea.vmem %s3, %s351
        %p353 = scmp.lt.s32.totalorder %s26, 1
        %s354 = scalar_select %p353, %s26, 1
        %s355 = smul.addr %s354, 16
        %s356 = smul.addr %s355, 8
        %s357 = scalar_lea.vmem %s6, %s356
        %s358 = smul.u32 4, %s27
        %v359 = vld [vmem:[%s339] sm:$0xff]
        %v360 = vld [vmem:[%s339 + $0x8] sm:$0xff]
        %v361 = vld [vmem:[%s339 + $0x10] sm:$0xff]
        %v362 = vld [vmem:[%s339 + $0x18] sm:$0xff]
        %v363 = vld [vmem:[%s339 + $0x20] sm:$0xff]
        %v364 = vld [vmem:[%s339 + $0x28] sm:$0xff]
        %v365 = vld [vmem:[%s339 + $0x30] sm:$0xff]
        %v366 = vld [vmem:[%s339 + $0x38] sm:$0xff]
        %v367 = vld [vmem:[%s339 + $0x40] sm:$0xff]
        %v368 = vld [vmem:[%s339 + $0x48] sm:$0xff]
        %v369 = vld [vmem:[%s339 + $0x50] sm:$0xff]
        %v370 = vld [vmem:[%s339 + $0x58] sm:$0xff]
        %v371 = vld [vmem:[%s339 + $0x60] sm:$0xff]
        %v372 = vld [vmem:[%s339 + $0x68] sm:$0xff]
        %v373 = vld [vmem:[%s339 + $0x70] sm:$0xff]
        %v374 = vld [vmem:[%s339 + $0x78] sm:$0xff]
        %v375 = vld [vmem:[%s344] sm:$0xff]
        %v376 = vld [vmem:[%s344 + $0x8] sm:$0xff]
        %v377 = vld [vmem:[%s344 + $0x10] sm:$0xff]
        %v378 = vld [vmem:[%s344 + $0x18] sm:$0xff]
        %v379 = vld [vmem:[%s347] sm:$0x1]
        %v381 = vlaneseq
        %v382 = vshrl.u32 %v381, 7
        %v383 = vsub.s32 0, %v382
        %v384 = vrot.slane %v379, %v383
        %vm386 = vcmask 261120
        %v388 = vsel %vm386, %v359, 0
        %v391 = vsel %vm386, %v360, 0
        %v394 = vsel %vm386, %v361, 0
        %v397 = vsel %vm386, %v362, 0
        %v400 = vsel %vm386, %v363, 0
        %v403 = vsel %vm386, %v364, 0
        %v406 = vsel %vm386, %v365, 0
        %v409 = vsel %vm386, %v366, 0
        %v412 = vsel %vm386, %v367, 0
        %v415 = vsel %vm386, %v368, 0
        %v418 = vsel %vm386, %v369, 0
        %v421 = vsel %vm386, %v370, 0
        %v424 = vsel %vm386, %v371, 0
        %v427 = vsel %vm386, %v372, 0
        %v430 = vsel %vm386, %v373, 0
        %v433 = vsel %vm386, %v374, 0
        %435 = vmatprep.subr.mxu0 0.0
        %436 = vmatpush1.msra.mxu0 0.0
        %437 = vmatprep.subr.mxu0 0.0
        %438 = vmatpush1.msra.mxu0 0.0
        %439 = vmatprep.subr.mxu0 0.0
        %440 = vmatpush1.msra.mxu0 0.0
        %441 = vmatprep.subr.mxu0 0.0
        %442 = vmatpush1.msra.mxu0 0.0
        %443 = vmatprep.subr.mxu0 0.0
        %444 = vmatpush1.msra.mxu0 0.0
        %445 = vmatprep.subr.mxu0 0.0
        %446 = vmatpush1.msra.mxu0 0.0
        %447 = vmatprep.subr.mxu0 0.0
        %448 = vmatpush1.msra.mxu0 0.0
        %449 = vmatprep.subr.mxu0 0.0
        %450 = vmatpush1.msra.mxu0 0.0
        %451 = vmatprep.subr.mxu0 0.0
        %452 = vmatpush1.msra.mxu0 0.0
        %453 = vmatprep.subr.mxu0 0.0
        %454 = vmatpush1.msra.mxu0 0.0
        %455 = vmatprep.subr.mxu0 0.0
        %456 = vmatpush1.msra.mxu0 0.0
        %457 = vmatprep.subr.mxu0 0.0
        %458 = vmatpush1.msra.mxu0 0.0
        %459 = vmatprep.subr.mxu0 0.0
        %460 = vmatpush1.msra.mxu0 %v378
        %461 = vmatprep.subr.mxu0 0.0
        %462 = vmatpush1.msra.mxu0 %v377
        %463 = vmatprep.subr.mxu0 0.0
        %464 = vmatpush1.msra.mxu0 %v376
        %465 = vmatprep.subr.mxu0 0.0
        %466 = vmatpush1.msra.mxu0 %v375
        %467 = vmatprep.subr.mxu0 0.0
        %468 = vmatpush2.msra.mxu0 0.0
        %469 = vmatprep.subr.mxu0 0.0
        %470 = vmatpush2.msra.mxu0 0.0
        %471 = vmatprep.subr.mxu0 0.0
        %472 = vmatpush2.msra.mxu0 0.0
        %473 = vmatprep.subr.mxu0 0.0
        %474 = vmatpush2.msra.mxu0 0.0
        %475 = vmatprep.subr.mxu0 0.0
        %476 = vmatpush2.msra.mxu0 0.0
        %477 = vmatprep.subr.mxu0 0.0
        %478 = vmatpush2.msra.mxu0 0.0
        %479 = vmatprep.subr.mxu0 0.0
        %480 = vmatpush2.msra.mxu0 0.0
        %481 = vmatprep.subr.mxu0 0.0
        %482 = vmatpush2.msra.mxu0 0.0
        %483 = vmatprep.subr.mxu0 0.0
        %484 = vmatpush2.msra.mxu0 0.0
        %485 = vmatprep.subr.mxu0 0.0
        %486 = vmatpush2.msra.mxu0 0.0
        %487 = vmatprep.subr.mxu0 0.0
        %488 = vmatpush2.msra.mxu0 0.0
        %489 = vmatprep.subr.mxu0 0.0
        %490 = vmatpush2.msra.mxu0 0.0
        %491 = vmatprep.subr.mxu0 0.0
        %492 = vmatpush2.msra.mxu0 0.0
        %493 = vmatprep.subr.mxu0 0.0
        %494 = vmatpush2.msra.mxu0 0.0
        %495 = vmatprep.subr.mxu0 0.0
        %496 = vmatpush2.msra.mxu0 0.0
        %497 = vmatprep.subr.mxu0 0.0
        %498 = vmatpush2.msra.mxu0 0.0
        %499 = vmatprep.mubr.f32.mxu0 0.0
        %500 = vmatmul.mubr.f32.gmra.mxu0 %v388
        %v501 = vpop.f32.mrf.mxu0
        %v502 = vadd.f32 %v384, %v501
        %v503 = vpop.f32.mrf.mxu0
        %504 = vmatprep.mubr.f32.mxu0 0.0
        %505 = vmatmul.mubr.f32.gmra.mxu0 %v391
        %v506 = vpop.f32.mrf.mxu0
        %v507 = vadd.f32 %v384, %v506
        %v508 = vpop.f32.mrf.mxu0
        %509 = vmatprep.mubr.f32.mxu0 0.0
        %510 = vmatmul.mubr.f32.gmra.mxu0 %v394
        %v511 = vpop.f32.mrf.mxu0
        %v512 = vadd.f32 %v384, %v511
        %v513 = vpop.f32.mrf.mxu0
        %514 = vmatprep.mubr.f32.mxu0 0.0
        %515 = vmatmul.mubr.f32.gmra.mxu0 %v397
        %v516 = vpop.f32.mrf.mxu0
        %v517 = vadd.f32 %v384, %v516
        %v518 = vpop.f32.mrf.mxu0
        %519 = vmatprep.mubr.f32.mxu0 0.0
        %520 = vmatmul.mubr.f32.gmra.mxu0 %v400
        %v521 = vpop.f32.mrf.mxu0
        %v522 = vadd.f32 %v384, %v521
        %v523 = vpop.f32.mrf.mxu0
        %524 = vmatprep.mubr.f32.mxu0 0.0
        %525 = vmatmul.mubr.f32.gmra.mxu0 %v403
        %v526 = vpop.f32.mrf.mxu0
        %v527 = vadd.f32 %v384, %v526
        %v528 = vpop.f32.mrf.mxu0
        %529 = vmatprep.mubr.f32.mxu0 0.0
        %530 = vmatmul.mubr.f32.gmra.mxu0 %v406
        %v531 = vpop.f32.mrf.mxu0
        %v532 = vadd.f32 %v384, %v531
        %v533 = vpop.f32.mrf.mxu0
        %534 = vmatprep.mubr.f32.mxu0 0.0
        %535 = vmatmul.mubr.f32.gmra.mxu0 %v409
        %v536 = vpop.f32.mrf.mxu0
        %v537 = vadd.f32 %v384, %v536
        %v538 = vpop.f32.mrf.mxu0
        %539 = vmatprep.mubr.f32.mxu0 0.0
        %540 = vmatmul.mubr.f32.gmra.mxu0 %v412
        %v541 = vpop.f32.mrf.mxu0
        %v542 = vadd.f32 %v384, %v541
        %v543 = vpop.f32.mrf.mxu0
        %544 = vmatprep.mubr.f32.mxu0 0.0
        %545 = vmatmul.mubr.f32.gmra.mxu0 %v415
        %v546 = vpop.f32.mrf.mxu0
        %v547 = vadd.f32 %v384, %v546
        %v548 = vpop.f32.mrf.mxu0
        %549 = vmatprep.mubr.f32.mxu0 0.0
        %550 = vmatmul.mubr.f32.gmra.mxu0 %v418
        %v551 = vpop.f32.mrf.mxu0
        %v552 = vadd.f32 %v384, %v551
        %v553 = vpop.f32.mrf.mxu0
        %554 = vmatprep.mubr.f32.mxu0 0.0
        %555 = vmatmul.mubr.f32.gmra.mxu0 %v421
        %v556 = vpop.f32.mrf.mxu0
        %v557 = vadd.f32 %v384, %v556
        %v558 = vpop.f32.mrf.mxu0
        %559 = vmatprep.mubr.f32.mxu0 0.0
        %560 = vmatmul.mubr.f32.gmra.mxu0 %v424
        %v561 = vpop.f32.mrf.mxu0
        %v562 = vadd.f32 %v384, %v561
        %v563 = vpop.f32.mrf.mxu0
        %564 = vmatprep.mubr.f32.mxu0 0.0
        %565 = vmatmul.mubr.f32.gmra.mxu0 %v427
        %v566 = vpop.f32.mrf.mxu0
        %v567 = vadd.f32 %v384, %v566
        %v568 = vpop.f32.mrf.mxu0
        %569 = vmatprep.mubr.f32.mxu0 0.0
        %570 = vmatmul.mubr.f32.gmra.mxu0 %v430
        %v571 = vpop.f32.mrf.mxu0
        %v572 = vadd.f32 %v384, %v571
        %v573 = vpop.f32.mrf.mxu0
        %574 = vmatprep.mubr.f32.mxu0 0.0
        %575 = vmatmul.mubr.f32.gmra.mxu0 %v433
        %v576 = vpop.f32.mrf.mxu0
        %v577 = vadd.f32 %v384, %v576
        %v578 = vpop.f32.mrf.mxu0
        %579 = vdwg.mxu0
        %v580 = vld [vmem:[%s5] sm:$0x1]
        %v582 = vlaneseq
        %v583 = vshrl.u32 %v582, 7
        %v584 = vsub.s32 0, %v583
        %v585 = vrot.slane %v580, %v584
        %603 = vrot.lane.b32.xlu0 %v502, 96
        %v604 = vpop.permute.xlu0 %603
        %605 = vrot.lane.b32.xlu0 %v507, 96
        %v606 = vpop.permute.xlu0 %605
        %607 = vrot.lane.b32.xlu0 %v512, 96
        %v608 = vpop.permute.xlu0 %607
        %609 = vrot.lane.b32.xlu0 %v517, 96
        %v610 = vpop.permute.xlu0 %609
        %611 = vrot.lane.b32.xlu0 %v522, 96
        %v612 = vpop.permute.xlu0 %611
        %613 = vrot.lane.b32.xlu0 %v527, 96
        %v614 = vpop.permute.xlu0 %613
        %615 = vrot.lane.b32.xlu0 %v532, 96
        %v616 = vpop.permute.xlu0 %615
        %617 = vrot.lane.b32.xlu0 %v537, 96
        %v618 = vpop.permute.xlu0 %617
        %619 = vrot.lane.b32.xlu0 %v542, 96
        %v620 = vpop.permute.xlu0 %619
        %621 = vrot.lane.b32.xlu0 %v547, 96
        %v622 = vpop.permute.xlu0 %621
        %623 = vrot.lane.b32.xlu0 %v552, 96
        %v624 = vpop.permute.xlu0 %623
        %625 = vrot.lane.b32.xlu0 %v557, 96
        %v626 = vpop.permute.xlu0 %625
        %627 = vrot.lane.b32.xlu0 %v562, 96
        %v628 = vpop.permute.xlu0 %627
        %629 = vrot.lane.b32.xlu0 %v567, 96
        %v630 = vpop.permute.xlu0 %629
        %631 = vrot.lane.b32.xlu0 %v572, 96
        %v632 = vpop.permute.xlu0 %631
        %633 = vrot.lane.b32.xlu0 %v577, 96
        %v634 = vpop.permute.xlu0 %633
        %vm635 = vcmask 64512
        %v636 = vsel %vm635, %v502, 0
        %v638 = vsel %vm635, %v507, 0
        %v640 = vsel %vm635, %v512, 0
        %v642 = vsel %vm635, %v517, 0
        %v644 = vsel %vm635, %v522, 0
        %v646 = vsel %vm635, %v527, 0
        %v648 = vsel %vm635, %v532, 0
        %v650 = vsel %vm635, %v537, 0
        %v652 = vsel %vm635, %v542, 0
        %v654 = vsel %vm635, %v547, 0
        %v656 = vsel %vm635, %v552, 0
        %v658 = vsel %vm635, %v557, 0
        %v660 = vsel %vm635, %v562, 0
        %v662 = vsel %vm635, %v567, 0
        %v664 = vsel %vm635, %v572, 0
        %v666 = vsel %vm635, %v577, 0
        %v668 = vsel %vm635, %v604, 0
        %v670 = vsel %vm635, %v606, 0
        %v672 = vsel %vm635, %v608, 0
        %v674 = vsel %vm635, %v610, 0
        %v676 = vsel %vm635, %v612, 0
        %v678 = vsel %vm635, %v614, 0
        %v680 = vsel %vm635, %v616, 0
        %v682 = vsel %vm635, %v618, 0
        %v684 = vsel %vm635, %v620, 0
        %v686 = vsel %vm635, %v622, 0
        %v688 = vsel %vm635, %v624, 0
        %v690 = vsel %vm635, %v626, 0
        %v692 = vsel %vm635, %v628, 0
        %v694 = vsel %vm635, %v630, 0
        %v696 = vsel %vm635, %v632, 0
        %v698 = vsel %vm635, %v634, 0
        %700 = vmatprep.subr.mxu0 0.0
        %701 = vmatpush1.xpose.msra.mxu0 %v698
        %702 = vmatprep.subr.mxu0 0.0
        %703 = vmatpush1.xpose.msra.mxu0 %v696
        %704 = vmatprep.subr.mxu0 0.0
        %705 = vmatpush1.xpose.msra.mxu0 %v694
        %706 = vmatprep.subr.mxu0 0.0
        %707 = vmatpush1.xpose.msra.mxu0 %v692
        %708 = vmatprep.subr.mxu0 0.0
        %709 = vmatpush1.xpose.msra.mxu0 %v690
        %710 = vmatprep.subr.mxu0 0.0
        %711 = vmatpush1.xpose.msra.mxu0 %v688
        %712 = vmatprep.subr.mxu0 0.0
        %713 = vmatpush1.xpose.msra.mxu0 %v686
        %714 = vmatprep.subr.mxu0 0.0
        %715 = vmatpush1.xpose.msra.mxu0 %v684
        %716 = vmatprep.subr.mxu0 0.0
        %717 = vmatpush1.xpose.msra.mxu0 %v682
        %718 = vmatprep.subr.mxu0 0.0
        %719 = vmatpush1.xpose.msra.mxu0 %v680
        %720 = vmatprep.subr.mxu0 0.0
        %721 = vmatpush1.xpose.msra.mxu0 %v678
        %722 = vmatprep.subr.mxu0 0.0
        %723 = vmatpush1.xpose.msra.mxu0 %v676
        %724 = vmatprep.subr.mxu0 0.0
        %725 = vmatpush1.xpose.msra.mxu0 %v674
        %726 = vmatprep.subr.mxu0 0.0
        %727 = vmatpush1.xpose.msra.mxu0 %v672
        %728 = vmatprep.subr.mxu0 0.0
        %729 = vmatpush1.xpose.msra.mxu0 %v670
        %730 = vmatprep.subr.mxu0 0.0
        %731 = vmatpush1.xpose.msra.mxu0 %v668
        %732 = vmatprep.subr.mxu0 0.0
        %733 = vmatpush2.xpose.msra.mxu0 0.0
        %734 = vmatprep.subr.mxu0 0.0
        %735 = vmatpush2.xpose.msra.mxu0 0.0
        %736 = vmatprep.subr.mxu0 0.0
        %737 = vmatpush2.xpose.msra.mxu0 0.0
        %738 = vmatprep.subr.mxu0 0.0
        %739 = vmatpush2.xpose.msra.mxu0 0.0
        %740 = vmatprep.subr.mxu0 0.0
        %741 = vmatpush2.xpose.msra.mxu0 0.0
        %742 = vmatprep.subr.mxu0 0.0
        %743 = vmatpush2.xpose.msra.mxu0 0.0
        %744 = vmatprep.subr.mxu0 0.0
        %745 = vmatpush2.xpose.msra.mxu0 0.0
        %746 = vmatprep.subr.mxu0 0.0
        %747 = vmatpush2.xpose.msra.mxu0 0.0
        %748 = vmatprep.subr.mxu0 0.0
        %749 = vmatpush2.xpose.msra.mxu0 0.0
        %750 = vmatprep.subr.mxu0 0.0
        %751 = vmatpush2.xpose.msra.mxu0 0.0
        %752 = vmatprep.subr.mxu0 0.0
        %753 = vmatpush2.xpose.msra.mxu0 0.0
        %754 = vmatprep.subr.mxu0 0.0
        %755 = vmatpush2.xpose.msra.mxu0 0.0
        %756 = vmatprep.subr.mxu0 0.0
        %757 = vmatpush2.xpose.msra.mxu0 0.0
        %758 = vmatprep.subr.mxu0 0.0
        %759 = vmatpush2.xpose.msra.mxu0 0.0
        %760 = vmatprep.subr.mxu0 0.0
        %761 = vmatpush2.xpose.msra.mxu0 0.0
        %762 = vmatprep.subr.mxu0 0.0
        %763 = vmatpush2.xpose.msra.mxu0 0.0
        %764 = vmatprep.mubr.f32.mxu0 0.0
        %765 = vmatmul.mubr.f32.gmra.mxu0 %v636
        %v766 = vpop.f32.mrf.mxu0
        %v767 = vadd.f32 %v585, %v766
        %v768 = vpop.f32.mrf.mxu0
        %769 = vmatprep.mubr.f32.mxu0 0.0
        %770 = vmatmul.mubr.f32.gmra.mxu0 %v638
        %v771 = vpop.f32.mrf.mxu0
        %v772 = vadd.f32 %v585, %v771
        %v773 = vpop.f32.mrf.mxu0
        %774 = vmatprep.mubr.f32.mxu0 0.0
        %775 = vmatmul.mubr.f32.gmra.mxu0 %v640
        %v776 = vpop.f32.mrf.mxu0
        %v777 = vadd.f32 %v585, %v776
        %v778 = vpop.f32.mrf.mxu0
        %779 = vmatprep.mubr.f32.mxu0 0.0
        %780 = vmatmul.mubr.f32.gmra.mxu0 %v642
        %v781 = vpop.f32.mrf.mxu0
        %v782 = vadd.f32 %v585, %v781
        %v783 = vpop.f32.mrf.mxu0
        %784 = vmatprep.mubr.f32.mxu0 0.0
        %785 = vmatmul.mubr.f32.gmra.mxu0 %v644
        %v786 = vpop.f32.mrf.mxu0
        %v787 = vadd.f32 %v585, %v786
        %v788 = vpop.f32.mrf.mxu0
        %789 = vmatprep.mubr.f32.mxu0 0.0
        %790 = vmatmul.mubr.f32.gmra.mxu0 %v646
        %v791 = vpop.f32.mrf.mxu0
        %v792 = vadd.f32 %v585, %v791
        %v793 = vpop.f32.mrf.mxu0
        %794 = vmatprep.mubr.f32.mxu0 0.0
        %795 = vmatmul.mubr.f32.gmra.mxu0 %v648
        %v796 = vpop.f32.mrf.mxu0
        %v797 = vadd.f32 %v585, %v796
        %v798 = vpop.f32.mrf.mxu0
        %799 = vmatprep.mubr.f32.mxu0 0.0
        %800 = vmatmul.mubr.f32.gmra.mxu0 %v650
        %v801 = vpop.f32.mrf.mxu0
        %v802 = vadd.f32 %v585, %v801
        %v803 = vpop.f32.mrf.mxu0
        %804 = vmatprep.mubr.f32.mxu0 0.0
        %805 = vmatmul.mubr.f32.gmra.mxu0 %v652
        %v806 = vpop.f32.mrf.mxu0
        %v807 = vadd.f32 %v585, %v806
        %v808 = vpop.f32.mrf.mxu0
        %809 = vmatprep.mubr.f32.mxu0 0.0
        %810 = vmatmul.mubr.f32.gmra.mxu0 %v654
        %v811 = vpop.f32.mrf.mxu0
        %v812 = vadd.f32 %v585, %v811
        %v813 = vpop.f32.mrf.mxu0
        %814 = vmatprep.mubr.f32.mxu0 0.0
        %815 = vmatmul.mubr.f32.gmra.mxu0 %v656
        %v816 = vpop.f32.mrf.mxu0
        %v817 = vadd.f32 %v585, %v816
        %v818 = vpop.f32.mrf.mxu0
        %819 = vmatprep.mubr.f32.mxu0 0.0
        %820 = vmatmul.mubr.f32.gmra.mxu0 %v658
        %v821 = vpop.f32.mrf.mxu0
        %v822 = vadd.f32 %v585, %v821
        %v823 = vpop.f32.mrf.mxu0
        %824 = vmatprep.mubr.f32.mxu0 0.0
        %825 = vmatmul.mubr.f32.gmra.mxu0 %v660
        %v826 = vpop.f32.mrf.mxu0
        %v827 = vadd.f32 %v585, %v826
        %v828 = vpop.f32.mrf.mxu0
        %829 = vmatprep.mubr.f32.mxu0 0.0
        %830 = vmatmul.mubr.f32.gmra.mxu0 %v662
        %v831 = vpop.f32.mrf.mxu0
        %v832 = vadd.f32 %v585, %v831
        %v833 = vpop.f32.mrf.mxu0
        %834 = vmatprep.mubr.f32.mxu0 0.0
        %835 = vmatmul.mubr.f32.gmra.mxu0 %v664
        %v836 = vpop.f32.mrf.mxu0
        %v837 = vadd.f32 %v585, %v836
        %v838 = vpop.f32.mrf.mxu0
        %839 = vmatprep.mubr.f32.mxu0 0.0
        %840 = vmatmul.mubr.f32.gmra.mxu0 %v666
        %v841 = vpop.f32.mrf.mxu0
        %v842 = vadd.f32 %v585, %v841
        %v843 = vpop.f32.mrf.mxu0
        %844 = vdwg.mxu0
        %845 = vmax.xlane.f32.xlu0 %v767
        %v846 = vpop.xlane.xlu0 %845
        %847 = vmax.xlane.f32.xlu0 %v772
        %v848 = vpop.xlane.xlu0 %847
        %849 = vmax.xlane.f32.xlu0 %v777
        %v850 = vpop.xlane.xlu0 %849
        %851 = vmax.xlane.f32.xlu0 %v782
        %v852 = vpop.xlane.xlu0 %851
        %853 = vmax.xlane.f32.xlu0 %v787
        %v854 = vpop.xlane.xlu0 %853
        %855 = vmax.xlane.f32.xlu0 %v792
        %v856 = vpop.xlane.xlu0 %855
        %857 = vmax.xlane.f32.xlu0 %v797
        %v858 = vpop.xlane.xlu0 %857
        %859 = vmax.xlane.f32.xlu0 %v802
        %v860 = vpop.xlane.xlu0 %859
        %861 = vmax.xlane.f32.xlu0 %v807
        %v862 = vpop.xlane.xlu0 %861
        %863 = vmax.xlane.f32.xlu0 %v812
        %v864 = vpop.xlane.xlu0 %863
        %865 = vmax.xlane.f32.xlu0 %v817
        %v866 = vpop.xlane.xlu0 %865
        %867 = vmax.xlane.f32.xlu0 %v822
        %v868 = vpop.xlane.xlu0 %867
        %869 = vmax.xlane.f32.xlu0 %v827
        %v870 = vpop.xlane.xlu0 %869
        %871 = vmax.xlane.f32.xlu0 %v832
        %v872 = vpop.xlane.xlu0 %871
        %873 = vmax.xlane.f32.xlu0 %v837
        %v874 = vpop.xlane.xlu0 %873
        %875 = vmax.xlane.f32.xlu0 %v842
        %v876 = vpop.xlane.xlu0 %875
        %v877 = vsub.f32 %v767, %v846
        %v878 = vsub.f32 %v772, %v848
        %v879 = vsub.f32 %v777, %v850
        %v880 = vsub.f32 %v782, %v852
        %v881 = vsub.f32 %v787, %v854
        %v882 = vsub.f32 %v792, %v856
        %v883 = vsub.f32 %v797, %v858
        %v884 = vsub.f32 %v802, %v860
        %v885 = vsub.f32 %v807, %v862
        %v886 = vsub.f32 %v812, %v864
        %v887 = vsub.f32 %v817, %v866
        %v888 = vsub.f32 %v822, %v868
        %v889 = vsub.f32 %v827, %v870
        %v890 = vsub.f32 %v832, %v872
        %v891 = vsub.f32 %v837, %v874
        %v892 = vsub.f32 %v842, %v876
        %v893 = vmul.f32 %v877, 1.442695
        %v894 = vpow.pop %v893
        %v895 = vmul.f32 %v878, 1.442695
        %v896 = vpow.pop %v895
        %v897 = vmul.f32 %v879, 1.442695
        %v898 = vpow.pop %v897
        %v899 = vmul.f32 %v880, 1.442695
        %v900 = vpow.pop %v899
        %v901 = vmul.f32 %v881, 1.442695
        %v902 = vpow.pop %v901
        %v903 = vmul.f32 %v882, 1.442695
        %v904 = vpow.pop %v903
        %v905 = vmul.f32 %v883, 1.442695
        %v906 = vpow.pop %v905
        %v907 = vmul.f32 %v884, 1.442695
        %v908 = vpow.pop %v907
        %v909 = vmul.f32 %v885, 1.442695
        %v910 = vpow.pop %v909
        %v911 = vmul.f32 %v886, 1.442695
        %v912 = vpow.pop %v911
        %v913 = vmul.f32 %v887, 1.442695
        %v914 = vpow.pop %v913
        %v915 = vmul.f32 %v888, 1.442695
        %v916 = vpow.pop %v915
        %v917 = vmul.f32 %v889, 1.442695
        %v918 = vpow.pop %v917
        %v919 = vmul.f32 %v890, 1.442695
        %v920 = vpow.pop %v919
        %v921 = vmul.f32 %v891, 1.442695
        %v922 = vpow.pop %v921
        %v923 = vmul.f32 %v892, 1.442695
        %v924 = vpow.pop %v923
        %925 = vadd.xlane.f32.xlu0 %v894
        %v926 = vpop.xlane.xlu0 %925
        %927 = vadd.xlane.f32.xlu0 %v896
        %v928 = vpop.xlane.xlu0 %927
        %929 = vadd.xlane.f32.xlu0 %v898
        %v930 = vpop.xlane.xlu0 %929
        %931 = vadd.xlane.f32.xlu0 %v900
        %v932 = vpop.xlane.xlu0 %931
        %933 = vadd.xlane.f32.xlu0 %v902
        %v934 = vpop.xlane.xlu0 %933
        %935 = vadd.xlane.f32.xlu0 %v904
        %v936 = vpop.xlane.xlu0 %935
        %937 = vadd.xlane.f32.xlu0 %v906
        %v938 = vpop.xlane.xlu0 %937
        %939 = vadd.xlane.f32.xlu0 %v908
        %v940 = vpop.xlane.xlu0 %939
        %941 = vadd.xlane.f32.xlu0 %v910
        %v942 = vpop.xlane.xlu0 %941
        %943 = vadd.xlane.f32.xlu0 %v912
        %v944 = vpop.xlane.xlu0 %943
        %945 = vadd.xlane.f32.xlu0 %v914
        %v946 = vpop.xlane.xlu0 %945
        %947 = vadd.xlane.f32.xlu0 %v916
        %v948 = vpop.xlane.xlu0 %947
        %949 = vadd.xlane.f32.xlu0 %v918
        %v950 = vpop.xlane.xlu0 %949
        %951 = vadd.xlane.f32.xlu0 %v920
        %v952 = vpop.xlane.xlu0 %951
        %953 = vadd.xlane.f32.xlu0 %v922
        %v954 = vpop.xlane.xlu0 %953
        %955 = vadd.xlane.f32.xlu0 %v924
        %v956 = vpop.xlane.xlu0 %955
        %v957 = vrcp.pop %v926
        %v958 = vrcp.pop %v928
        %v959 = vrcp.pop %v930
        %v960 = vrcp.pop %v932
        %v961 = vrcp.pop %v934
        %v962 = vrcp.pop %v936
        %v963 = vrcp.pop %v938
        %v964 = vrcp.pop %v940
        %v965 = vrcp.pop %v942
        %v966 = vrcp.pop %v944
        %v967 = vrcp.pop %v946
        %v968 = vrcp.pop %v948
        %v969 = vrcp.pop %v950
        %v970 = vrcp.pop %v952
        %v971 = vrcp.pop %v954
        %v972 = vrcp.pop %v956
        %v973 = vmul.f32 %v926, %v957
        %v974 = vmul.f32 %v928, %v958
        %v975 = vmul.f32 %v930, %v959
        %v976 = vmul.f32 %v932, %v960
        %v977 = vmul.f32 %v934, %v961
        %v978 = vmul.f32 %v936, %v962
        %v979 = vmul.f32 %v938, %v963
        %v980 = vmul.f32 %v940, %v964
        %v981 = vmul.f32 %v942, %v965
        %v982 = vmul.f32 %v944, %v966
        %v983 = vmul.f32 %v946, %v967
        %v984 = vmul.f32 %v948, %v968
        %v985 = vmul.f32 %v950, %v969
        %v986 = vmul.f32 %v952, %v970
        %v987 = vmul.f32 %v954, %v971
        %v988 = vmul.f32 %v956, %v972
        %v989 = vsub.f32 2.0, %v973
        %v990 = vsub.f32 2.0, %v974
        %v991 = vsub.f32 2.0, %v975
        %v992 = vsub.f32 2.0, %v976
        %v993 = vsub.f32 2.0, %v977
        %v994 = vsub.f32 2.0, %v978
        %v995 = vsub.f32 2.0, %v979
        %v996 = vsub.f32 2.0, %v980
        %v997 = vsub.f32 2.0, %v981
        %v998 = vsub.f32 2.0, %v982
        %v999 = vsub.f32 2.0, %v983
        %v1000 = vsub.f32 2.0, %v984
        %v1001 = vsub.f32 2.0, %v985
        %v1002 = vsub.f32 2.0, %v986
        %v1003 = vsub.f32 2.0, %v987
        %v1004 = vsub.f32 2.0, %v988
        %v1005 = vmul.f32 %v957, %v989
        %v1006 = vmul.f32 %v958, %v990
        %v1007 = vmul.f32 %v959, %v991
        %v1008 = vmul.f32 %v960, %v992
        %v1009 = vmul.f32 %v961, %v993
        %v1010 = vmul.f32 %v962, %v994
        %v1011 = vmul.f32 %v963, %v995
        %v1012 = vmul.f32 %v964, %v996
        %v1013 = vmul.f32 %v965, %v997
        %v1014 = vmul.f32 %v966, %v998
        %v1015 = vmul.f32 %v967, %v999
        %v1016 = vmul.f32 %v968, %v1000
        %v1017 = vmul.f32 %v969, %v1001
        %v1018 = vmul.f32 %v970, %v1002
        %v1019 = vmul.f32 %v971, %v1003
        %v1020 = vmul.f32 %v972, %v1004
        %v1021 = vmul.f32 %v894, %v1005
        %v1022 = vmul.f32 %v896, %v1006
        %v1023 = vmul.f32 %v898, %v1007
        %v1024 = vmul.f32 %v900, %v1008
        %v1025 = vmul.f32 %v902, %v1009
        %v1026 = vmul.f32 %v904, %v1010
        %v1027 = vmul.f32 %v906, %v1011
        %v1028 = vmul.f32 %v908, %v1012
        %v1029 = vmul.f32 %v910, %v1013
        %v1030 = vmul.f32 %v912, %v1014
        %v1031 = vmul.f32 %v914, %v1015
        %v1032 = vmul.f32 %v916, %v1016
        %v1033 = vmul.f32 %v918, %v1017
        %v1034 = vmul.f32 %v920, %v1018
        %v1035 = vmul.f32 %v922, %v1019
        %v1036 = vmul.f32 %v924, %v1020
        %1037 = vst [vmem:[%s334] sm:$0xff] %v1021
        %1038 = vst [vmem:[%s334 + $0x8] sm:$0xff] %v1022
        %1039 = vst [vmem:[%s334 + $0x10] sm:$0xff] %v1023
        %1040 = vst [vmem:[%s334 + $0x18] sm:$0xff] %v1024
        %1041 = vst [vmem:[%s334 + $0x20] sm:$0xff] %v1025
        %1042 = vst [vmem:[%s334 + $0x28] sm:$0xff] %v1026
        %1043 = vst [vmem:[%s334 + $0x30] sm:$0xff] %v1027
        %1044 = vst [vmem:[%s334 + $0x38] sm:$0xff] %v1028
        %1045 = vst [vmem:[%s334 + $0x40] sm:$0xff] %v1029
        %1046 = vst [vmem:[%s334 + $0x48] sm:$0xff] %v1030
        %1047 = vst [vmem:[%s334 + $0x50] sm:$0xff] %v1031
        %1048 = vst [vmem:[%s334 + $0x58] sm:$0xff] %v1032
        %1049 = vst [vmem:[%s334 + $0x60] sm:$0xff] %v1033
        %1050 = vst [vmem:[%s334 + $0x68] sm:$0xff] %v1034
        %1051 = vst [vmem:[%s334 + $0x70] sm:$0xff] %v1035
        %1052 = vst [vmem:[%s334 + $0x78] sm:$0xff] %v1036
        %1053 = vrot.lane.b32.xlu0 %v502, 64
        %v1054 = vpop.permute.xlu0 %1053
        %1055 = vrot.lane.b32.xlu0 %v507, 64
        %v1056 = vpop.permute.xlu0 %1055
        %1057 = vrot.lane.b32.xlu0 %v512, 64
        %v1058 = vpop.permute.xlu0 %1057
        %1059 = vrot.lane.b32.xlu0 %v517, 64
        %v1060 = vpop.permute.xlu0 %1059
        %1061 = vrot.lane.b32.xlu0 %v522, 64
        %v1062 = vpop.permute.xlu0 %1061
        %1063 = vrot.lane.b32.xlu0 %v527, 64
        %v1064 = vpop.permute.xlu0 %1063
        %1065 = vrot.lane.b32.xlu0 %v532, 64
        %v1066 = vpop.permute.xlu0 %1065
        %1067 = vrot.lane.b32.xlu0 %v537, 64
        %v1068 = vpop.permute.xlu0 %1067
        %1069 = vrot.lane.b32.xlu0 %v542, 64
        %v1070 = vpop.permute.xlu0 %1069
        %1071 = vrot.lane.b32.xlu0 %v547, 64
        %v1072 = vpop.permute.xlu0 %1071
        %1073 = vrot.lane.b32.xlu0 %v552, 64
        %v1074 = vpop.permute.xlu0 %1073
        %1075 = vrot.lane.b32.xlu0 %v557, 64
        %v1076 = vpop.permute.xlu0 %1075
        %1077 = vrot.lane.b32.xlu0 %v562, 64
        %v1078 = vpop.permute.xlu0 %1077
        %1079 = vrot.lane.b32.xlu0 %v567, 64
        %v1080 = vpop.permute.xlu0 %1079
        %1081 = vrot.lane.b32.xlu0 %v572, 64
        %v1082 = vpop.permute.xlu0 %1081
        %1083 = vrot.lane.b32.xlu0 %v577, 64
        %v1084 = vpop.permute.xlu0 %1083
        %1101 = vmatprep.subr.mxu0 0.0
        %1102 = vmatpush1.msra.mxu0 %v1084
        %1103 = vmatprep.subr.mxu0 0.0
        %1104 = vmatpush1.msra.mxu0 %v1082
        %1105 = vmatprep.subr.mxu0 0.0
        %1106 = vmatpush1.msra.mxu0 %v1080
        %1107 = vmatprep.subr.mxu0 0.0
        %1108 = vmatpush1.msra.mxu0 %v1078
        %1109 = vmatprep.subr.mxu0 0.0
        %1110 = vmatpush1.msra.mxu0 %v1076
        %1111 = vmatprep.subr.mxu0 0.0
        %1112 = vmatpush1.msra.mxu0 %v1074
        %1113 = vmatprep.subr.mxu0 0.0
        %1114 = vmatpush1.msra.mxu0 %v1072
        %1115 = vmatprep.subr.mxu0 0.0
        %1116 = vmatpush1.msra.mxu0 %v1070
        %1117 = vmatprep.subr.mxu0 0.0
        %1118 = vmatpush1.msra.mxu0 %v1068
        %1119 = vmatprep.subr.mxu0 0.0
        %1120 = vmatpush1.msra.mxu0 %v1066
        %1121 = vmatprep.subr.mxu0 0.0
        %1122 = vmatpush1.msra.mxu0 %v1064
        %1123 = vmatprep.subr.mxu0 0.0
        %1124 = vmatpush1.msra.mxu0 %v1062
        %1125 = vmatprep.subr.mxu0 0.0
        %1126 = vmatpush1.msra.mxu0 %v1060
        %1127 = vmatprep.subr.mxu0 0.0
        %1128 = vmatpush1.msra.mxu0 %v1058
        %1129 = vmatprep.subr.mxu0 0.0
        %1130 = vmatpush1.msra.mxu0 %v1056
        %1131 = vmatprep.subr.mxu0 0.0
        %1132 = vmatpush1.msra.mxu0 %v1054
        %1133 = vmatprep.subr.mxu0 0.0
        %1134 = vmatpush2.msra.mxu0 0.0
        %1135 = vmatprep.subr.mxu0 0.0
        %1136 = vmatpush2.msra.mxu0 0.0
        %1137 = vmatprep.subr.mxu0 0.0
        %1138 = vmatpush2.msra.mxu0 0.0
        %1139 = vmatprep.subr.mxu0 0.0
        %1140 = vmatpush2.msra.mxu0 0.0
        %1141 = vmatprep.subr.mxu0 0.0
        %1142 = vmatpush2.msra.mxu0 0.0
        %1143 = vmatprep.subr.mxu0 0.0
        %1144 = vmatpush2.msra.mxu0 0.0
        %1145 = vmatprep.subr.mxu0 0.0
        %1146 = vmatpush2.msra.mxu0 0.0
        %1147 = vmatprep.subr.mxu0 0.0
        %1148 = vmatpush2.msra.mxu0 0.0
        %1149 = vmatprep.subr.mxu0 0.0
        %1150 = vmatpush2.msra.mxu0 0.0
        %1151 = vmatprep.subr.mxu0 0.0
        %1152 = vmatpush2.msra.mxu0 0.0
        %1153 = vmatprep.subr.mxu0 0.0
        %1154 = vmatpush2.msra.mxu0 0.0
        %1155 = vmatprep.subr.mxu0 0.0
        %1156 = vmatpush2.msra.mxu0 0.0
        %1157 = vmatprep.subr.mxu0 0.0
        %1158 = vmatpush2.msra.mxu0 0.0
        %1159 = vmatprep.subr.mxu0 0.0
        %1160 = vmatpush2.msra.mxu0 0.0
        %1161 = vmatprep.subr.mxu0 0.0
        %1162 = vmatpush2.msra.mxu0 0.0
        %1163 = vmatprep.subr.mxu0 0.0
        %1164 = vmatpush2.msra.mxu0 0.0
        %1165 = vmatprep.mubr.f32.mxu0 0.0
        %1166 = vmatmul.mubr.f32.gmra.mxu0 %v1021
        %v1167 = vpop.f32.mrf.mxu0
        %v1168 = vadd.f32 0.0, %v1167
        %v1169 = vpop.f32.mrf.mxu0
        %1170 = vmatprep.mubr.f32.mxu0 0.0
        %1171 = vmatmul.mubr.f32.gmra.mxu0 %v1022
        %v1172 = vpop.f32.mrf.mxu0
        %v1173 = vadd.f32 0.0, %v1172
        %v1174 = vpop.f32.mrf.mxu0
        %1175 = vmatprep.mubr.f32.mxu0 0.0
        %1176 = vmatmul.mubr.f32.gmra.mxu0 %v1023
        %v1177 = vpop.f32.mrf.mxu0
        %v1178 = vadd.f32 0.0, %v1177
        %v1179 = vpop.f32.mrf.mxu0
        %1180 = vmatprep.mubr.f32.mxu0 0.0
        %1181 = vmatmul.mubr.f32.gmra.mxu0 %v1024
        %v1182 = vpop.f32.mrf.mxu0
        %v1183 = vadd.f32 0.0, %v1182
        %v1184 = vpop.f32.mrf.mxu0
        %1185 = vmatprep.mubr.f32.mxu0 0.0
        %1186 = vmatmul.mubr.f32.gmra.mxu0 %v1025
        %v1187 = vpop.f32.mrf.mxu0
        %v1188 = vadd.f32 0.0, %v1187
        %v1189 = vpop.f32.mrf.mxu0
        %1190 = vmatprep.mubr.f32.mxu0 0.0
        %1191 = vmatmul.mubr.f32.gmra.mxu0 %v1026
        %v1192 = vpop.f32.mrf.mxu0
        %v1193 = vadd.f32 0.0, %v1192
        %v1194 = vpop.f32.mrf.mxu0
        %1195 = vmatprep.mubr.f32.mxu0 0.0
        %1196 = vmatmul.mubr.f32.gmra.mxu0 %v1027
        %v1197 = vpop.f32.mrf.mxu0
        %v1198 = vadd.f32 0.0, %v1197
        %v1199 = vpop.f32.mrf.mxu0
        %1200 = vmatprep.mubr.f32.mxu0 0.0
        %1201 = vmatmul.mubr.f32.gmra.mxu0 %v1028
        %v1202 = vpop.f32.mrf.mxu0
        %v1203 = vadd.f32 0.0, %v1202
        %v1204 = vpop.f32.mrf.mxu0
        %1205 = vmatprep.mubr.f32.mxu0 0.0
        %1206 = vmatmul.mubr.f32.gmra.mxu0 %v1029
        %v1207 = vpop.f32.mrf.mxu0
        %v1208 = vadd.f32 0.0, %v1207
        %v1209 = vpop.f32.mrf.mxu0
        %1210 = vmatprep.mubr.f32.mxu0 0.0
        %1211 = vmatmul.mubr.f32.gmra.mxu0 %v1030
        %v1212 = vpop.f32.mrf.mxu0
        %v1213 = vadd.f32 0.0, %v1212
        %v1214 = vpop.f32.mrf.mxu0
        %1215 = vmatprep.mubr.f32.mxu0 0.0
        %1216 = vmatmul.mubr.f32.gmra.mxu0 %v1031
        %v1217 = vpop.f32.mrf.mxu0
        %v1218 = vadd.f32 0.0, %v1217
        %v1219 = vpop.f32.mrf.mxu0
        %1220 = vmatprep.mubr.f32.mxu0 0.0
        %1221 = vmatmul.mubr.f32.gmra.mxu0 %v1032
        %v1222 = vpop.f32.mrf.mxu0
        %v1223 = vadd.f32 0.0, %v1222
        %v1224 = vpop.f32.mrf.mxu0
        %1225 = vmatprep.mubr.f32.mxu0 0.0
        %1226 = vmatmul.mubr.f32.gmra.mxu0 %v1033
        %v1227 = vpop.f32.mrf.mxu0
        %v1228 = vadd.f32 0.0, %v1227
        %v1229 = vpop.f32.mrf.mxu0
        %1230 = vmatprep.mubr.f32.mxu0 0.0
        %1231 = vmatmul.mubr.f32.gmra.mxu0 %v1034
        %v1232 = vpop.f32.mrf.mxu0
        %v1233 = vadd.f32 0.0, %v1232
        %v1234 = vpop.f32.mrf.mxu0
        %1235 = vmatprep.mubr.f32.mxu0 0.0
        %1236 = vmatmul.mubr.f32.gmra.mxu0 %v1035
        %v1237 = vpop.f32.mrf.mxu0
        %v1238 = vadd.f32 0.0, %v1237
        %v1239 = vpop.f32.mrf.mxu0
        %1240 = vmatprep.mubr.f32.mxu0 0.0
        %1241 = vmatmul.mubr.f32.gmra.mxu0 %v1036
        %v1242 = vpop.f32.mrf.mxu0
        %v1243 = vadd.f32 0.0, %v1242
        %v1244 = vpop.f32.mrf.mxu0
        %1245 = vdwg.mxu0
        %v1246 = vld [vmem:[%s5] sm:$0x1]
        %v1248 = vlaneseq
        %v1249 = vshrl.u32 %v1248, 7
        %v1250 = vsub.s32 0, %v1249
        %v1251 = vrot.slane %v1246, %v1250
        %1253 = vrot.lane.b32.xlu0 %v502, 120
        %v1254 = vpop.permute.xlu0 %1253
        %1255 = vrot.lane.b32.xlu0 %v507, 120
        %v1256 = vpop.permute.xlu0 %1255
        %1257 = vrot.lane.b32.xlu0 %v512, 120
        %v1258 = vpop.permute.xlu0 %1257
        %1259 = vrot.lane.b32.xlu0 %v517, 120
        %v1260 = vpop.permute.xlu0 %1259
        %1261 = vrot.lane.b32.xlu0 %v522, 120
        %v1262 = vpop.permute.xlu0 %1261
        %1263 = vrot.lane.b32.xlu0 %v527, 120
        %v1264 = vpop.permute.xlu0 %1263
        %1265 = vrot.lane.b32.xlu0 %v532, 120
        %v1266 = vpop.permute.xlu0 %1265
        %1267 = vrot.lane.b32.xlu0 %v537, 120
        %v1268 = vpop.permute.xlu0 %1267
        %1269 = vrot.lane.b32.xlu0 %v542, 120
        %v1270 = vpop.permute.xlu0 %1269
        %1271 = vrot.lane.b32.xlu0 %v547, 120
        %v1272 = vpop.permute.xlu0 %1271
        %1273 = vrot.lane.b32.xlu0 %v552, 120
        %v1274 = vpop.permute.xlu0 %1273
        %1275 = vrot.lane.b32.xlu0 %v557, 120
        %v1276 = vpop.permute.xlu0 %1275
        %1277 = vrot.lane.b32.xlu0 %v562, 120
        %v1278 = vpop.permute.xlu0 %1277
        %1279 = vrot.lane.b32.xlu0 %v567, 120
        %v1280 = vpop.permute.xlu0 %1279
        %1281 = vrot.lane.b32.xlu0 %v572, 120
        %v1282 = vpop.permute.xlu0 %1281
        %1283 = vrot.lane.b32.xlu0 %v577, 120
        %v1284 = vpop.permute.xlu0 %1283
        %1285 = vrot.lane.b32.xlu0 %v502, 88
        %v1286 = vpop.permute.xlu0 %1285
        %1287 = vrot.lane.b32.xlu0 %v507, 88
        %v1288 = vpop.permute.xlu0 %1287
        %1289 = vrot.lane.b32.xlu0 %v512, 88
        %v1290 = vpop.permute.xlu0 %1289
        %1291 = vrot.lane.b32.xlu0 %v517, 88
        %v1292 = vpop.permute.xlu0 %1291
        %1293 = vrot.lane.b32.xlu0 %v522, 88
        %v1294 = vpop.permute.xlu0 %1293
        %1295 = vrot.lane.b32.xlu0 %v527, 88
        %v1296 = vpop.permute.xlu0 %1295
        %1297 = vrot.lane.b32.xlu0 %v532, 88
        %v1298 = vpop.permute.xlu0 %1297
        %1299 = vrot.lane.b32.xlu0 %v537, 88
        %v1300 = vpop.permute.xlu0 %1299
        %1301 = vrot.lane.b32.xlu0 %v542, 88
        %v1302 = vpop.permute.xlu0 %1301
        %1303 = vrot.lane.b32.xlu0 %v547, 88
        %v1304 = vpop.permute.xlu0 %1303
        %1305 = vrot.lane.b32.xlu0 %v552, 88
        %v1306 = vpop.permute.xlu0 %1305
        %1307 = vrot.lane.b32.xlu0 %v557, 88
        %v1308 = vpop.permute.xlu0 %1307
        %1309 = vrot.lane.b32.xlu0 %v562, 88
        %v1310 = vpop.permute.xlu0 %1309
        %1311 = vrot.lane.b32.xlu0 %v567, 88
        %v1312 = vpop.permute.xlu0 %1311
        %1313 = vrot.lane.b32.xlu0 %v572, 88
        %v1314 = vpop.permute.xlu0 %1313
        %1315 = vrot.lane.b32.xlu0 %v577, 88
        %v1316 = vpop.permute.xlu0 %1315
        %v1317 = vsel %vm635, %v1254, 0
        %v1319 = vsel %vm635, %v1256, 0
        %v1321 = vsel %vm635, %v1258, 0
        %v1323 = vsel %vm635, %v1260, 0
        %v1325 = vsel %vm635, %v1262, 0
        %v1327 = vsel %vm635, %v1264, 0
        %v1329 = vsel %vm635, %v1266, 0
        %v1331 = vsel %vm635, %v1268, 0
        %v1333 = vsel %vm635, %v1270, 0
        %v1335 = vsel %vm635, %v1272, 0
        %v1337 = vsel %vm635, %v1274, 0
        %v1339 = vsel %vm635, %v1276, 0
        %v1341 = vsel %vm635, %v1278, 0
        %v1343 = vsel %vm635, %v1280, 0
        %v1345 = vsel %vm635, %v1282, 0
        %v1347 = vsel %vm635, %v1284, 0
        %v1349 = vsel %vm635, %v1286, 0
        %v1351 = vsel %vm635, %v1288, 0
        %v1353 = vsel %vm635, %v1290, 0
        %v1355 = vsel %vm635, %v1292, 0
        %v1357 = vsel %vm635, %v1294, 0
        %v1359 = vsel %vm635, %v1296, 0
        %v1361 = vsel %vm635, %v1298, 0
        %v1363 = vsel %vm635, %v1300, 0
        %v1365 = vsel %vm635, %v1302, 0
        %v1367 = vsel %vm635, %v1304, 0
        %v1369 = vsel %vm635, %v1306, 0
        %v1371 = vsel %vm635, %v1308, 0
        %v1373 = vsel %vm635, %v1310, 0
        %v1375 = vsel %vm635, %v1312, 0
        %v1377 = vsel %vm635, %v1314, 0
        %v1379 = vsel %vm635, %v1316, 0
        %1381 = vmatprep.subr.mxu0 0.0
        %1382 = vmatpush1.xpose.msra.mxu0 %v1379
        %1383 = vmatprep.subr.mxu0 0.0
        %1384 = vmatpush1.xpose.msra.mxu0 %v1377
        %1385 = vmatprep.subr.mxu0 0.0
        %1386 = vmatpush1.xpose.msra.mxu0 %v1375
        %1387 = vmatprep.subr.mxu0 0.0
        %1388 = vmatpush1.xpose.msra.mxu0 %v1373
        %1389 = vmatprep.subr.mxu0 0.0
        %1390 = vmatpush1.xpose.msra.mxu0 %v1371
        %1391 = vmatprep.subr.mxu0 0.0
        %1392 = vmatpush1.xpose.msra.mxu0 %v1369
        %1393 = vmatprep.subr.mxu0 0.0
        %1394 = vmatpush1.xpose.msra.mxu0 %v1367
        %1395 = vmatprep.subr.mxu0 0.0
        %1396 = vmatpush1.xpose.msra.mxu0 %v1365
        %1397 = vmatprep.subr.mxu0 0.0
        %1398 = vmatpush1.xpose.msra.mxu0 %v1363
        %1399 = vmatprep.subr.mxu0 0.0
        %1400 = vmatpush1.xpose.msra.mxu0 %v1361
        %1401 = vmatprep.subr.mxu0 0.0
        %1402 = vmatpush1.xpose.msra.mxu0 %v1359
        %1403 = vmatprep.subr.mxu0 0.0
        %1404 = vmatpush1.xpose.msra.mxu0 %v1357
        %1405 = vmatprep.subr.mxu0 0.0
        %1406 = vmatpush1.xpose.msra.mxu0 %v1355
        %1407 = vmatprep.subr.mxu0 0.0
        %1408 = vmatpush1.xpose.msra.mxu0 %v1353
        %1409 = vmatprep.subr.mxu0 0.0
        %1410 = vmatpush1.xpose.msra.mxu0 %v1351
        %1411 = vmatprep.subr.mxu0 0.0
        %1412 = vmatpush1.xpose.msra.mxu0 %v1349
        %1413 = vmatprep.subr.mxu0 0.0
        %1414 = vmatpush2.xpose.msra.mxu0 0.0
        %1415 = vmatprep.subr.mxu0 0.0
        %1416 = vmatpush2.xpose.msra.mxu0 0.0
        %1417 = vmatprep.subr.mxu0 0.0
        %1418 = vmatpush2.xpose.msra.mxu0 0.0
        %1419 = vmatprep.subr.mxu0 0.0
        %1420 = vmatpush2.xpose.msra.mxu0 0.0
        %1421 = vmatprep.subr.mxu0 0.0
        %1422 = vmatpush2.xpose.msra.mxu0 0.0
        %1423 = vmatprep.subr.mxu0 0.0
        %1424 = vmatpush2.xpose.msra.mxu0 0.0
        %1425 = vmatprep.subr.mxu0 0.0
        %1426 = vmatpush2.xpose.msra.mxu0 0.0
        %1427 = vmatprep.subr.mxu0 0.0
        %1428 = vmatpush2.xpose.msra.mxu0 0.0
        %1429 = vmatprep.subr.mxu0 0.0
        %1430 = vmatpush2.xpose.msra.mxu0 0.0
        %1431 = vmatprep.subr.mxu0 0.0
        %1432 = vmatpush2.xpose.msra.mxu0 0.0
        %1433 = vmatprep.subr.mxu0 0.0
        %1434 = vmatpush2.xpose.msra.mxu0 0.0
        %1435 = vmatprep.subr.mxu0 0.0
        %1436 = vmatpush2.xpose.msra.mxu0 0.0
        %1437 = vmatprep.subr.mxu0 0.0
        %1438 = vmatpush2.xpose.msra.mxu0 0.0
        %1439 = vmatprep.subr.mxu0 0.0
        %1440 = vmatpush2.xpose.msra.mxu0 0.0
        %1441 = vmatprep.subr.mxu0 0.0
        %1442 = vmatpush2.xpose.msra.mxu0 0.0
        %1443 = vmatprep.subr.mxu0 0.0
        %1444 = vmatpush2.xpose.msra.mxu0 0.0
        %1445 = vmatprep.mubr.f32.mxu0 0.0
        %1446 = vmatmul.mubr.f32.gmra.mxu0 %v1317
        %v1447 = vpop.f32.mrf.mxu0
        %v1448 = vadd.f32 %v1251, %v1447
        %v1449 = vpop.f32.mrf.mxu0
        %1450 = vmatprep.mubr.f32.mxu0 0.0
        %1451 = vmatmul.mubr.f32.gmra.mxu0 %v1319
        %v1452 = vpop.f32.mrf.mxu0
        %v1453 = vadd.f32 %v1251, %v1452
        %v1454 = vpop.f32.mrf.mxu0
        %1455 = vmatprep.mubr.f32.mxu0 0.0
        %1456 = vmatmul.mubr.f32.gmra.mxu0 %v1321
        %v1457 = vpop.f32.mrf.mxu0
        %v1458 = vadd.f32 %v1251, %v1457
        %v1459 = vpop.f32.mrf.mxu0
        %1460 = vmatprep.mubr.f32.mxu0 0.0
        %1461 = vmatmul.mubr.f32.gmra.mxu0 %v1323
        %v1462 = vpop.f32.mrf.mxu0
        %v1463 = vadd.f32 %v1251, %v1462
        %v1464 = vpop.f32.mrf.mxu0
        %1465 = vmatprep.mubr.f32.mxu0 0.0
        %1466 = vmatmul.mubr.f32.gmra.mxu0 %v1325
        %v1467 = vpop.f32.mrf.mxu0
        %v1468 = vadd.f32 %v1251, %v1467
        %v1469 = vpop.f32.mrf.mxu0
        %1470 = vmatprep.mubr.f32.mxu0 0.0
        %1471 = vmatmul.mubr.f32.gmra.mxu0 %v1327
        %v1472 = vpop.f32.mrf.mxu0
        %v1473 = vadd.f32 %v1251, %v1472
        %v1474 = vpop.f32.mrf.mxu0
        %1475 = vmatprep.mubr.f32.mxu0 0.0
        %1476 = vmatmul.mubr.f32.gmra.mxu0 %v1329
        %v1477 = vpop.f32.mrf.mxu0
        %v1478 = vadd.f32 %v1251, %v1477
        %v1479 = vpop.f32.mrf.mxu0
        %1480 = vmatprep.mubr.f32.mxu0 0.0
        %1481 = vmatmul.mubr.f32.gmra.mxu0 %v1331
        %v1482 = vpop.f32.mrf.mxu0
        %v1483 = vadd.f32 %v1251, %v1482
        %v1484 = vpop.f32.mrf.mxu0
        %1485 = vmatprep.mubr.f32.mxu0 0.0
        %1486 = vmatmul.mubr.f32.gmra.mxu0 %v1333
        %v1487 = vpop.f32.mrf.mxu0
        %v1488 = vadd.f32 %v1251, %v1487
        %v1489 = vpop.f32.mrf.mxu0
        %1490 = vmatprep.mubr.f32.mxu0 0.0
        %1491 = vmatmul.mubr.f32.gmra.mxu0 %v1335
        %v1492 = vpop.f32.mrf.mxu0
        %v1493 = vadd.f32 %v1251, %v1492
        %v1494 = vpop.f32.mrf.mxu0
        %1495 = vmatprep.mubr.f32.mxu0 0.0
        %1496 = vmatmul.mubr.f32.gmra.mxu0 %v1337
        %v1497 = vpop.f32.mrf.mxu0
        %v1498 = vadd.f32 %v1251, %v1497
        %v1499 = vpop.f32.mrf.mxu0
        %1500 = vmatprep.mubr.f32.mxu0 0.0
        %1501 = vmatmul.mubr.f32.gmra.mxu0 %v1339
        %v1502 = vpop.f32.mrf.mxu0
        %v1503 = vadd.f32 %v1251, %v1502
        %v1504 = vpop.f32.mrf.mxu0
        %1505 = vmatprep.mubr.f32.mxu0 0.0
        %1506 = vmatmul.mubr.f32.gmra.mxu0 %v1341
        %v1507 = vpop.f32.mrf.mxu0
        %v1508 = vadd.f32 %v1251, %v1507
        %v1509 = vpop.f32.mrf.mxu0
        %1510 = vmatprep.mubr.f32.mxu0 0.0
        %1511 = vmatmul.mubr.f32.gmra.mxu0 %v1343
        %v1512 = vpop.f32.mrf.mxu0
        %v1513 = vadd.f32 %v1251, %v1512
        %v1514 = vpop.f32.mrf.mxu0
        %1515 = vmatprep.mubr.f32.mxu0 0.0
        %1516 = vmatmul.mubr.f32.gmra.mxu0 %v1345
        %v1517 = vpop.f32.mrf.mxu0
        %v1518 = vadd.f32 %v1251, %v1517
        %v1519 = vpop.f32.mrf.mxu0
        %1520 = vmatprep.mubr.f32.mxu0 0.0
        %1521 = vmatmul.mubr.f32.gmra.mxu0 %v1347
        %v1522 = vpop.f32.mrf.mxu0
        %v1523 = vadd.f32 %v1251, %v1522
        %v1524 = vpop.f32.mrf.mxu0
        %1525 = vdwg.mxu0
        %1526 = vmax.xlane.f32.xlu0 %v1448
        %v1527 = vpop.xlane.xlu0 %1526
        %1528 = vmax.xlane.f32.xlu0 %v1453
        %v1529 = vpop.xlane.xlu0 %1528
        %1530 = vmax.xlane.f32.xlu0 %v1458
        %v1531 = vpop.xlane.xlu0 %1530
        %1532 = vmax.xlane.f32.xlu0 %v1463
        %v1533 = vpop.xlane.xlu0 %1532
        %1534 = vmax.xlane.f32.xlu0 %v1468
        %v1535 = vpop.xlane.xlu0 %1534
        %1536 = vmax.xlane.f32.xlu0 %v1473
        %v1537 = vpop.xlane.xlu0 %1536
        %1538 = vmax.xlane.f32.xlu0 %v1478
        %v1539 = vpop.xlane.xlu0 %1538
        %1540 = vmax.xlane.f32.xlu0 %v1483
        %v1541 = vpop.xlane.xlu0 %1540
        %1542 = vmax.xlane.f32.xlu0 %v1488
        %v1543 = vpop.xlane.xlu0 %1542
        %1544 = vmax.xlane.f32.xlu0 %v1493
        %v1545 = vpop.xlane.xlu0 %1544
        %1546 = vmax.xlane.f32.xlu0 %v1498
        %v1547 = vpop.xlane.xlu0 %1546
        %1548 = vmax.xlane.f32.xlu0 %v1503
        %v1549 = vpop.xlane.xlu0 %1548
        %1550 = vmax.xlane.f32.xlu0 %v1508
        %v1551 = vpop.xlane.xlu0 %1550
        %1552 = vmax.xlane.f32.xlu0 %v1513
        %v1553 = vpop.xlane.xlu0 %1552
        %1554 = vmax.xlane.f32.xlu0 %v1518
        %v1555 = vpop.xlane.xlu0 %1554
        %1556 = vmax.xlane.f32.xlu0 %v1523
        %v1557 = vpop.xlane.xlu0 %1556
        %v1558 = vsub.f32 %v1448, %v1527
        %v1559 = vsub.f32 %v1453, %v1529
        %v1560 = vsub.f32 %v1458, %v1531
        %v1561 = vsub.f32 %v1463, %v1533
        %v1562 = vsub.f32 %v1468, %v1535
        %v1563 = vsub.f32 %v1473, %v1537
        %v1564 = vsub.f32 %v1478, %v1539
        %v1565 = vsub.f32 %v1483, %v1541
        %v1566 = vsub.f32 %v1488, %v1543
        %v1567 = vsub.f32 %v1493, %v1545
        %v1568 = vsub.f32 %v1498, %v1547
        %v1569 = vsub.f32 %v1503, %v1549
        %v1570 = vsub.f32 %v1508, %v1551
        %v1571 = vsub.f32 %v1513, %v1553
        %v1572 = vsub.f32 %v1518, %v1555
        %v1573 = vsub.f32 %v1523, %v1557
        %v1574 = vmul.f32 %v1558, 1.442695
        %v1575 = vpow.pop %v1574
        %v1576 = vmul.f32 %v1559, 1.442695
        %v1577 = vpow.pop %v1576
        %v1578 = vmul.f32 %v1560, 1.442695
        %v1579 = vpow.pop %v1578
        %v1580 = vmul.f32 %v1561, 1.442695
        %v1581 = vpow.pop %v1580
        %v1582 = vmul.f32 %v1562, 1.442695
        %v1583 = vpow.pop %v1582
        %v1584 = vmul.f32 %v1563, 1.442695
        %v1585 = vpow.pop %v1584
        %v1586 = vmul.f32 %v1564, 1.442695
        %v1587 = vpow.pop %v1586
        %v1588 = vmul.f32 %v1565, 1.442695
        %v1589 = vpow.pop %v1588
        %v1590 = vmul.f32 %v1566, 1.442695
        %v1591 = vpow.pop %v1590
        %v1592 = vmul.f32 %v1567, 1.442695
        %v1593 = vpow.pop %v1592
        %v1594 = vmul.f32 %v1568, 1.442695
        %v1595 = vpow.pop %v1594
        %v1596 = vmul.f32 %v1569, 1.442695
        %v1597 = vpow.pop %v1596
        %v1598 = vmul.f32 %v1570, 1.442695
        %v1599 = vpow.pop %v1598
        %v1600 = vmul.f32 %v1571, 1.442695
        %v1601 = vpow.pop %v1600
        %v1602 = vmul.f32 %v1572, 1.442695
        %v1603 = vpow.pop %v1602
        %v1604 = vmul.f32 %v1573, 1.442695
        %v1605 = vpow.pop %v1604
        %1606 = vadd.xlane.f32.xlu0 %v1575
        %v1607 = vpop.xlane.xlu0 %1606
        %1608 = vadd.xlane.f32.xlu0 %v1577
        %v1609 = vpop.xlane.xlu0 %1608
        %1610 = vadd.xlane.f32.xlu0 %v1579
        %v1611 = vpop.xlane.xlu0 %1610
        %1612 = vadd.xlane.f32.xlu0 %v1581
        %v1613 = vpop.xlane.xlu0 %1612
        %1614 = vadd.xlane.f32.xlu0 %v1583
        %v1615 = vpop.xlane.xlu0 %1614
        %1616 = vadd.xlane.f32.xlu0 %v1585
        %v1617 = vpop.xlane.xlu0 %1616
        %1618 = vadd.xlane.f32.xlu0 %v1587
        %v1619 = vpop.xlane.xlu0 %1618
        %1620 = vadd.xlane.f32.xlu0 %v1589
        %v1621 = vpop.xlane.xlu0 %1620
        %1622 = vadd.xlane.f32.xlu0 %v1591
        %v1623 = vpop.xlane.xlu0 %1622
        %1624 = vadd.xlane.f32.xlu0 %v1593
        %v1625 = vpop.xlane.xlu0 %1624
        %1626 = vadd.xlane.f32.xlu0 %v1595
        %v1627 = vpop.xlane.xlu0 %1626
        %1628 = vadd.xlane.f32.xlu0 %v1597
        %v1629 = vpop.xlane.xlu0 %1628
        %1630 = vadd.xlane.f32.xlu0 %v1599
        %v1631 = vpop.xlane.xlu0 %1630
        %1632 = vadd.xlane.f32.xlu0 %v1601
        %v1633 = vpop.xlane.xlu0 %1632
        %1634 = vadd.xlane.f32.xlu0 %v1603
        %v1635 = vpop.xlane.xlu0 %1634
        %1636 = vadd.xlane.f32.xlu0 %v1605
        %v1637 = vpop.xlane.xlu0 %1636
        %v1638 = vrcp.pop %v1607
        %v1639 = vrcp.pop %v1609
        %v1640 = vrcp.pop %v1611
        %v1641 = vrcp.pop %v1613
        %v1642 = vrcp.pop %v1615
        %v1643 = vrcp.pop %v1617
        %v1644 = vrcp.pop %v1619
        %v1645 = vrcp.pop %v1621
        %v1646 = vrcp.pop %v1623
        %v1647 = vrcp.pop %v1625
        %v1648 = vrcp.pop %v1627
        %v1649 = vrcp.pop %v1629
        %v1650 = vrcp.pop %v1631
        %v1651 = vrcp.pop %v1633
        %v1652 = vrcp.pop %v1635
        %v1653 = vrcp.pop %v1637
        %v1654 = vmul.f32 %v1607, %v1638
        %v1655 = vmul.f32 %v1609, %v1639
        %v1656 = vmul.f32 %v1611, %v1640
        %v1657 = vmul.f32 %v1613, %v1641
        %v1658 = vmul.f32 %v1615, %v1642
        %v1659 = vmul.f32 %v1617, %v1643
        %v1660 = vmul.f32 %v1619, %v1644
        %v1661 = vmul.f32 %v1621, %v1645
        %v1662 = vmul.f32 %v1623, %v1646
        %v1663 = vmul.f32 %v1625, %v1647
        %v1664 = vmul.f32 %v1627, %v1648
        %v1665 = vmul.f32 %v1629, %v1649
        %v1666 = vmul.f32 %v1631, %v1650
        %v1667 = vmul.f32 %v1633, %v1651
        %v1668 = vmul.f32 %v1635, %v1652
        %v1669 = vmul.f32 %v1637, %v1653
        %v1670 = vsub.f32 2.0, %v1654
        %v1671 = vsub.f32 2.0, %v1655
        %v1672 = vsub.f32 2.0, %v1656
        %v1673 = vsub.f32 2.0, %v1657
        %v1674 = vsub.f32 2.0, %v1658
        %v1675 = vsub.f32 2.0, %v1659
        %v1676 = vsub.f32 2.0, %v1660
        %v1677 = vsub.f32 2.0, %v1661
        %v1678 = vsub.f32 2.0, %v1662
        %v1679 = vsub.f32 2.0, %v1663
        %v1680 = vsub.f32 2.0, %v1664
        %v1681 = vsub.f32 2.0, %v1665
        %v1682 = vsub.f32 2.0, %v1666
        %v1683 = vsub.f32 2.0, %v1667
        %v1684 = vsub.f32 2.0, %v1668
        %v1685 = vsub.f32 2.0, %v1669
        %v1686 = vmul.f32 %v1638, %v1670
        %v1687 = vmul.f32 %v1639, %v1671
        %v1688 = vmul.f32 %v1640, %v1672
        %v1689 = vmul.f32 %v1641, %v1673
        %v1690 = vmul.f32 %v1642, %v1674
        %v1691 = vmul.f32 %v1643, %v1675
        %v1692 = vmul.f32 %v1644, %v1676
        %v1693 = vmul.f32 %v1645, %v1677
        %v1694 = vmul.f32 %v1646, %v1678
        %v1695 = vmul.f32 %v1647, %v1679
        %v1696 = vmul.f32 %v1648, %v1680
        %v1697 = vmul.f32 %v1649, %v1681
        %v1698 = vmul.f32 %v1650, %v1682
        %v1699 = vmul.f32 %v1651, %v1683
        %v1700 = vmul.f32 %v1652, %v1684
        %v1701 = vmul.f32 %v1653, %v1685
        %v1702 = vmul.f32 %v1575, %v1686
        %v1703 = vmul.f32 %v1577, %v1687
        %v1704 = vmul.f32 %v1579, %v1688
        %v1705 = vmul.f32 %v1581, %v1689
        %v1706 = vmul.f32 %v1583, %v1690
        %v1707 = vmul.f32 %v1585, %v1691
        %v1708 = vmul.f32 %v1587, %v1692
        %v1709 = vmul.f32 %v1589, %v1693
        %v1710 = vmul.f32 %v1591, %v1694
        %v1711 = vmul.f32 %v1593, %v1695
        %v1712 = vmul.f32 %v1595, %v1696
        %v1713 = vmul.f32 %v1597, %v1697
        %v1714 = vmul.f32 %v1599, %v1698
        %v1715 = vmul.f32 %v1601, %v1699
        %v1716 = vmul.f32 %v1603, %v1700
        %v1717 = vmul.f32 %v1605, %v1701
        %s1718 = scalar_lea.vmem %s334, 128 [#allocation3]
        %1719 = vst [vmem:[%s1718] sm:$0xff] %v1702
        %1720 = vst [vmem:[%s1718 + $0x8] sm:$0xff] %v1703
        %1721 = vst [vmem:[%s1718 + $0x10] sm:$0xff] %v1704
        %1722 = vst [vmem:[%s1718 + $0x18] sm:$0xff] %v1705
        %1723 = vst [vmem:[%s1718 + $0x20] sm:$0xff] %v1706
        %1724 = vst [vmem:[%s1718 + $0x28] sm:$0xff] %v1707
        %1725 = vst [vmem:[%s1718 + $0x30] sm:$0xff] %v1708
        %1726 = vst [vmem:[%s1718 + $0x38] sm:$0xff] %v1709
        %1727 = vst [vmem:[%s1718 + $0x40] sm:$0xff] %v1710
        %1728 = vst [vmem:[%s1718 + $0x48] sm:$0xff] %v1711
        %1729 = vst [vmem:[%s1718 + $0x50] sm:$0xff] %v1712
        %1730 = vst [vmem:[%s1718 + $0x58] sm:$0xff] %v1713
        %1731 = vst [vmem:[%s1718 + $0x60] sm:$0xff] %v1714
        %1732 = vst [vmem:[%s1718 + $0x68] sm:$0xff] %v1715
        %1733 = vst [vmem:[%s1718 + $0x70] sm:$0xff] %v1716
        %1734 = vst [vmem:[%s1718 + $0x78] sm:$0xff] %v1717
        %1735 = vrot.lane.b32.xlu0 %v502, 56
        %v1736 = vpop.permute.xlu0 %1735
        %1737 = vrot.lane.b32.xlu0 %v507, 56
        %v1738 = vpop.permute.xlu0 %1737
        %1739 = vrot.lane.b32.xlu0 %v512, 56
        %v1740 = vpop.permute.xlu0 %1739
        %1741 = vrot.lane.b32.xlu0 %v517, 56
        %v1742 = vpop.permute.xlu0 %1741
        %1743 = vrot.lane.b32.xlu0 %v522, 56
        %v1744 = vpop.permute.xlu0 %1743
        %1745 = vrot.lane.b32.xlu0 %v527, 56
        %v1746 = vpop.permute.xlu0 %1745
        %1747 = vrot.lane.b32.xlu0 %v532, 56
        %v1748 = vpop.permute.xlu0 %1747
        %1749 = vrot.lane.b32.xlu0 %v537, 56
        %v1750 = vpop.permute.xlu0 %1749
        %1751 = vrot.lane.b32.xlu0 %v542, 56
        %v1752 = vpop.permute.xlu0 %1751
        %1753 = vrot.lane.b32.xlu0 %v547, 56
        %v1754 = vpop.permute.xlu0 %1753
        %1755 = vrot.lane.b32.xlu0 %v552, 56
        %v1756 = vpop.permute.xlu0 %1755
        %1757 = vrot.lane.b32.xlu0 %v557, 56
        %v1758 = vpop.permute.xlu0 %1757
        %1759 = vrot.lane.b32.xlu0 %v562, 56
        %v1760 = vpop.permute.xlu0 %1759
        %1761 = vrot.lane.b32.xlu0 %v567, 56
        %v1762 = vpop.permute.xlu0 %1761
        %1763 = vrot.lane.b32.xlu0 %v572, 56
        %v1764 = vpop.permute.xlu0 %1763
        %1765 = vrot.lane.b32.xlu0 %v577, 56
        %v1766 = vpop.permute.xlu0 %1765
        %1783 = vmatprep.subr.mxu0 0.0
        %1784 = vmatpush1.msra.mxu0 %v1766
        %1785 = vmatprep.subr.mxu0 0.0
        %1786 = vmatpush1.msra.mxu0 %v1764
        %1787 = vmatprep.subr.mxu0 0.0
        %1788 = vmatpush1.msra.mxu0 %v1762
        %1789 = vmatprep.subr.mxu0 0.0
        %1790 = vmatpush1.msra.mxu0 %v1760
        %1791 = vmatprep.subr.mxu0 0.0
        %1792 = vmatpush1.msra.mxu0 %v1758
        %1793 = vmatprep.subr.mxu0 0.0
        %1794 = vmatpush1.msra.mxu0 %v1756
        %1795 = vmatprep.subr.mxu0 0.0
        %1796 = vmatpush1.msra.mxu0 %v1754
        %1797 = vmatprep.subr.mxu0 0.0
        %1798 = vmatpush1.msra.mxu0 %v1752
        %1799 = vmatprep.subr.mxu0 0.0
        %1800 = vmatpush1.msra.mxu0 %v1750
        %1801 = vmatprep.subr.mxu0 0.0
        %1802 = vmatpush1.msra.mxu0 %v1748
        %1803 = vmatprep.subr.mxu0 0.0
        %1804 = vmatpush1.msra.mxu0 %v1746
        %1805 = vmatprep.subr.mxu0 0.0
        %1806 = vmatpush1.msra.mxu0 %v1744
        %1807 = vmatprep.subr.mxu0 0.0
        %1808 = vmatpush1.msra.mxu0 %v1742
        %1809 = vmatprep.subr.mxu0 0.0
        %1810 = vmatpush1.msra.mxu0 %v1740
        %1811 = vmatprep.subr.mxu0 0.0
        %1812 = vmatpush1.msra.mxu0 %v1738
        %1813 = vmatprep.subr.mxu0 0.0
        %1814 = vmatpush1.msra.mxu0 %v1736
        %1815 = vmatprep.subr.mxu0 0.0
        %1816 = vmatpush2.msra.mxu0 0.0
        %1817 = vmatprep.subr.mxu0 0.0
        %1818 = vmatpush2.msra.mxu0 0.0
        %1819 = vmatprep.subr.mxu0 0.0
        %1820 = vmatpush2.msra.mxu0 0.0
        %1821 = vmatprep.subr.mxu0 0.0
        %1822 = vmatpush2.msra.mxu0 0.0
        %1823 = vmatprep.subr.mxu0 0.0
        %1824 = vmatpush2.msra.mxu0 0.0
        %1825 = vmatprep.subr.mxu0 0.0
        %1826 = vmatpush2.msra.mxu0 0.0
        %1827 = vmatprep.subr.mxu0 0.0
        %1828 = vmatpush2.msra.mxu0 0.0
        %1829 = vmatprep.subr.mxu0 0.0
        %1830 = vmatpush2.msra.mxu0 0.0
        %1831 = vmatprep.subr.mxu0 0.0
        %1832 = vmatpush2.msra.mxu0 0.0
        %1833 = vmatprep.subr.mxu0 0.0
        %1834 = vmatpush2.msra.mxu0 0.0
        %1835 = vmatprep.subr.mxu0 0.0
        %1836 = vmatpush2.msra.mxu0 0.0
        %1837 = vmatprep.subr.mxu0 0.0
        %1838 = vmatpush2.msra.mxu0 0.0
        %1839 = vmatprep.subr.mxu0 0.0
        %1840 = vmatpush2.msra.mxu0 0.0
        %1841 = vmatprep.subr.mxu0 0.0
        %1842 = vmatpush2.msra.mxu0 0.0
        %1843 = vmatprep.subr.mxu0 0.0
        %1844 = vmatpush2.msra.mxu0 0.0
        %1845 = vmatprep.subr.mxu0 0.0
        %1846 = vmatpush2.msra.mxu0 0.0
        %1847 = vmatprep.mubr.f32.mxu0 0.0
        %1848 = vmatmul.mubr.f32.gmra.mxu0 %v1702
        %v1849 = vpop.f32.mrf.mxu0
        %v1850 = vadd.f32 0.0, %v1849
        %v1851 = vpop.f32.mrf.mxu0
        %1852 = vmatprep.mubr.f32.mxu0 0.0
        %1853 = vmatmul.mubr.f32.gmra.mxu0 %v1703
        %v1854 = vpop.f32.mrf.mxu0
        %v1855 = vadd.f32 0.0, %v1854
        %v1856 = vpop.f32.mrf.mxu0
        %1857 = vmatprep.mubr.f32.mxu0 0.0
        %1858 = vmatmul.mubr.f32.gmra.mxu0 %v1704
        %v1859 = vpop.f32.mrf.mxu0
        %v1860 = vadd.f32 0.0, %v1859
        %v1861 = vpop.f32.mrf.mxu0
        %1862 = vmatprep.mubr.f32.mxu0 0.0
        %1863 = vmatmul.mubr.f32.gmra.mxu0 %v1705
        %v1864 = vpop.f32.mrf.mxu0
        %v1865 = vadd.f32 0.0, %v1864
        %v1866 = vpop.f32.mrf.mxu0
        %1867 = vmatprep.mubr.f32.mxu0 0.0
        %1868 = vmatmul.mubr.f32.gmra.mxu0 %v1706
        %v1869 = vpop.f32.mrf.mxu0
        %v1870 = vadd.f32 0.0, %v1869
        %v1871 = vpop.f32.mrf.mxu0
        %1872 = vmatprep.mubr.f32.mxu0 0.0
        %1873 = vmatmul.mubr.f32.gmra.mxu0 %v1707
        %v1874 = vpop.f32.mrf.mxu0
        %v1875 = vadd.f32 0.0, %v1874
        %v1876 = vpop.f32.mrf.mxu0
        %1877 = vmatprep.mubr.f32.mxu0 0.0
        %1878 = vmatmul.mubr.f32.gmra.mxu0 %v1708
        %v1879 = vpop.f32.mrf.mxu0
        %v1880 = vadd.f32 0.0, %v1879
        %v1881 = vpop.f32.mrf.mxu0
        %1882 = vmatprep.mubr.f32.mxu0 0.0
        %1883 = vmatmul.mubr.f32.gmra.mxu0 %v1709
        %v1884 = vpop.f32.mrf.mxu0
        %v1885 = vadd.f32 0.0, %v1884
        %v1886 = vpop.f32.mrf.mxu0
        %1887 = vmatprep.mubr.f32.mxu0 0.0
        %1888 = vmatmul.mubr.f32.gmra.mxu0 %v1710
        %v1889 = vpop.f32.mrf.mxu0
        %v1890 = vadd.f32 0.0, %v1889
        %v1891 = vpop.f32.mrf.mxu0
        %1892 = vmatprep.mubr.f32.mxu0 0.0
        %1893 = vmatmul.mubr.f32.gmra.mxu0 %v1711
        %v1894 = vpop.f32.mrf.mxu0
        %v1895 = vadd.f32 0.0, %v1894
        %v1896 = vpop.f32.mrf.mxu0
        %1897 = vmatprep.mubr.f32.mxu0 0.0
        %1898 = vmatmul.mubr.f32.gmra.mxu0 %v1712
        %v1899 = vpop.f32.mrf.mxu0
        %v1900 = vadd.f32 0.0, %v1899
        %v1901 = vpop.f32.mrf.mxu0
        %1902 = vmatprep.mubr.f32.mxu0 0.0
        %1903 = vmatmul.mubr.f32.gmra.mxu0 %v1713
        %v1904 = vpop.f32.mrf.mxu0
        %v1905 = vadd.f32 0.0, %v1904
        %v1906 = vpop.f32.mrf.mxu0
        %1907 = vmatprep.mubr.f32.mxu0 0.0
        %1908 = vmatmul.mubr.f32.gmra.mxu0 %v1714
        %v1909 = vpop.f32.mrf.mxu0
        %v1910 = vadd.f32 0.0, %v1909
        %v1911 = vpop.f32.mrf.mxu0
        %1912 = vmatprep.mubr.f32.mxu0 0.0
        %1913 = vmatmul.mubr.f32.gmra.mxu0 %v1715
        %v1914 = vpop.f32.mrf.mxu0
        %v1915 = vadd.f32 0.0, %v1914
        %v1916 = vpop.f32.mrf.mxu0
        %1917 = vmatprep.mubr.f32.mxu0 0.0
        %1918 = vmatmul.mubr.f32.gmra.mxu0 %v1716
        %v1919 = vpop.f32.mrf.mxu0
        %v1920 = vadd.f32 0.0, %v1919
        %v1921 = vpop.f32.mrf.mxu0
        %1922 = vmatprep.mubr.f32.mxu0 0.0
        %1923 = vmatmul.mubr.f32.gmra.mxu0 %v1717
        %v1924 = vpop.f32.mrf.mxu0
        %v1925 = vadd.f32 0.0, %v1924
        %v1926 = vpop.f32.mrf.mxu0
        %1927 = vdwg.mxu0
        %v1928 = vld [vmem:[%s5] sm:$0x1]
        %v1930 = vlaneseq
        %v1931 = vshrl.u32 %v1930, 7
        %v1932 = vsub.s32 0, %v1931
        %v1933 = vrot.slane %v1928, %v1932
        %1935 = vrot.lane.b32.xlu0 %v502, 112
        %v1936 = vpop.permute.xlu0 %1935
        %1937 = vrot.lane.b32.xlu0 %v507, 112
        %v1938 = vpop.permute.xlu0 %1937
        %1939 = vrot.lane.b32.xlu0 %v512, 112
        %v1940 = vpop.permute.xlu0 %1939
        %1941 = vrot.lane.b32.xlu0 %v517, 112
        %v1942 = vpop.permute.xlu0 %1941
        %1943 = vrot.lane.b32.xlu0 %v522, 112
        %v1944 = vpop.permute.xlu0 %1943
        %1945 = vrot.lane.b32.xlu0 %v527, 112
        %v1946 = vpop.permute.xlu0 %1945
        %1947 = vrot.lane.b32.xlu0 %v532, 112
        %v1948 = vpop.permute.xlu0 %1947
        %1949 = vrot.lane.b32.xlu0 %v537, 112
        %v1950 = vpop.permute.xlu0 %1949
        %1951 = vrot.lane.b32.xlu0 %v542, 112
        %v1952 = vpop.permute.xlu0 %1951
        %1953 = vrot.lane.b32.xlu0 %v547, 112
        %v1954 = vpop.permute.xlu0 %1953
        %1955 = vrot.lane.b32.xlu0 %v552, 112
        %v1956 = vpop.permute.xlu0 %1955
        %1957 = vrot.lane.b32.xlu0 %v557, 112
        %v1958 = vpop.permute.xlu0 %1957
        %1959 = vrot.lane.b32.xlu0 %v562, 112
        %v1960 = vpop.permute.xlu0 %1959
        %1961 = vrot.lane.b32.xlu0 %v567, 112
        %v1962 = vpop.permute.xlu0 %1961
        %1963 = vrot.lane.b32.xlu0 %v572, 112
        %v1964 = vpop.permute.xlu0 %1963
        %1965 = vrot.lane.b32.xlu0 %v577, 112
        %v1966 = vpop.permute.xlu0 %1965
        %1967 = vrot.lane.b32.xlu0 %v502, 80
        %v1968 = vpop.permute.xlu0 %1967
        %1969 = vrot.lane.b32.xlu0 %v507, 80
        %v1970 = vpop.permute.xlu0 %1969
        %1971 = vrot.lane.b32.xlu0 %v512, 80
        %v1972 = vpop.permute.xlu0 %1971
        %1973 = vrot.lane.b32.xlu0 %v517, 80
        %v1974 = vpop.permute.xlu0 %1973
        %1975 = vrot.lane.b32.xlu0 %v522, 80
        %v1976 = vpop.permute.xlu0 %1975
        %1977 = vrot.lane.b32.xlu0 %v527, 80
        %v1978 = vpop.permute.xlu0 %1977
        %1979 = vrot.lane.b32.xlu0 %v532, 80
        %v1980 = vpop.permute.xlu0 %1979
        %1981 = vrot.lane.b32.xlu0 %v537, 80
        %v1982 = vpop.permute.xlu0 %1981
        %1983 = vrot.lane.b32.xlu0 %v542, 80
        %v1984 = vpop.permute.xlu0 %1983
        %1985 = vrot.lane.b32.xlu0 %v547, 80
        %v1986 = vpop.permute.xlu0 %1985
        %1987 = vrot.lane.b32.xlu0 %v552, 80
        %v1988 = vpop.permute.xlu0 %1987
        %1989 = vrot.lane.b32.xlu0 %v557, 80
        %v1990 = vpop.permute.xlu0 %1989
        %1991 = vrot.lane.b32.xlu0 %v562, 80
        %v1992 = vpop.permute.xlu0 %1991
        %1993 = vrot.lane.b32.xlu0 %v567, 80
        %v1994 = vpop.permute.xlu0 %1993
        %1995 = vrot.lane.b32.xlu0 %v572, 80
        %v1996 = vpop.permute.xlu0 %1995
        %1997 = vrot.lane.b32.xlu0 %v577, 80
        %v1998 = vpop.permute.xlu0 %1997
        %v1999 = vsel %vm635, %v1936, 0
        %v2001 = vsel %vm635, %v1938, 0
        %v2003 = vsel %vm635, %v1940, 0
        %v2005 = vsel %vm635, %v1942, 0
        %v2007 = vsel %vm635, %v1944, 0
        %v2009 = vsel %vm635, %v1946, 0
        %v2011 = vsel %vm635, %v1948, 0
        %v2013 = vsel %vm635, %v1950, 0
        %v2015 = vsel %vm635, %v1952, 0
        %v2017 = vsel %vm635, %v1954, 0
        %v2019 = vsel %vm635, %v1956, 0
        %v2021 = vsel %vm635, %v1958, 0
        %v2023 = vsel %vm635, %v1960, 0
        %v2025 = vsel %vm635, %v1962, 0
        %v2027 = vsel %vm635, %v1964, 0
        %v2029 = vsel %vm635, %v1966, 0
        %v2031 = vsel %vm635, %v1968, 0
        %v2033 = vsel %vm635, %v1970, 0
        %v2035 = vsel %vm635, %v1972, 0
        %v2037 = vsel %vm635, %v1974, 0
        %v2039 = vsel %vm635, %v1976, 0
        %v2041 = vsel %vm635, %v1978, 0
        %v2043 = vsel %vm635, %v1980, 0
        %v2045 = vsel %vm635, %v1982, 0
        %v2047 = vsel %vm635, %v1984, 0
        %v2049 = vsel %vm635, %v1986, 0
        %v2051 = vsel %vm635, %v1988, 0
        %v2053 = vsel %vm635, %v1990, 0
        %v2055 = vsel %vm635, %v1992, 0
        %v2057 = vsel %vm635, %v1994, 0
        %v2059 = vsel %vm635, %v1996, 0
        %v2061 = vsel %vm635, %v1998, 0
        %2063 = vmatprep.subr.mxu0 0.0
        %2064 = vmatpush1.xpose.msra.mxu0 %v2061
        %2065 = vmatprep.subr.mxu0 0.0
        %2066 = vmatpush1.xpose.msra.mxu0 %v2059
        %2067 = vmatprep.subr.mxu0 0.0
        %2068 = vmatpush1.xpose.msra.mxu0 %v2057
        %2069 = vmatprep.subr.mxu0 0.0
        %2070 = vmatpush1.xpose.msra.mxu0 %v2055
        %2071 = vmatprep.subr.mxu0 0.0
        %2072 = vmatpush1.xpose.msra.mxu0 %v2053
        %2073 = vmatprep.subr.mxu0 0.0
        %2074 = vmatpush1.xpose.msra.mxu0 %v2051
        %2075 = vmatprep.subr.mxu0 0.0
        %2076 = vmatpush1.xpose.msra.mxu0 %v2049
        %2077 = vmatprep.subr.mxu0 0.0
        %2078 = vmatpush1.xpose.msra.mxu0 %v2047
        %2079 = vmatprep.subr.mxu0 0.0
        %2080 = vmatpush1.xpose.msra.mxu0 %v2045
        %2081 = vmatprep.subr.mxu0 0.0
        %2082 = vmatpush1.xpose.msra.mxu0 %v2043
        %2083 = vmatprep.subr.mxu0 0.0
        %2084 = vmatpush1.xpose.msra.mxu0 %v2041
        %2085 = vmatprep.subr.mxu0 0.0
        %2086 = vmatpush1.xpose.msra.mxu0 %v2039
        %2087 = vmatprep.subr.mxu0 0.0
        %2088 = vmatpush1.xpose.msra.mxu0 %v2037
        %2089 = vmatprep.subr.mxu0 0.0
        %2090 = vmatpush1.xpose.msra.mxu0 %v2035
        %2091 = vmatprep.subr.mxu0 0.0
        %2092 = vmatpush1.xpose.msra.mxu0 %v2033
        %2093 = vmatprep.subr.mxu0 0.0
        %2094 = vmatpush1.xpose.msra.mxu0 %v2031
        %2095 = vmatprep.subr.mxu0 0.0
        %2096 = vmatpush2.xpose.msra.mxu0 0.0
        %2097 = vmatprep.subr.mxu0 0.0
        %2098 = vmatpush2.xpose.msra.mxu0 0.0
        %2099 = vmatprep.subr.mxu0 0.0
        %2100 = vmatpush2.xpose.msra.mxu0 0.0
        %2101 = vmatprep.subr.mxu0 0.0
        %2102 = vmatpush2.xpose.msra.mxu0 0.0
        %2103 = vmatprep.subr.mxu0 0.0
        %2104 = vmatpush2.xpose.msra.mxu0 0.0
        %2105 = vmatprep.subr.mxu0 0.0
        %2106 = vmatpush2.xpose.msra.mxu0 0.0
        %2107 = vmatprep.subr.mxu0 0.0
        %2108 = vmatpush2.xpose.msra.mxu0 0.0
        %2109 = vmatprep.subr.mxu0 0.0
        %2110 = vmatpush2.xpose.msra.mxu0 0.0
        %2111 = vmatprep.subr.mxu0 0.0
        %2112 = vmatpush2.xpose.msra.mxu0 0.0
        %2113 = vmatprep.subr.mxu0 0.0
        %2114 = vmatpush2.xpose.msra.mxu0 0.0
        %2115 = vmatprep.subr.mxu0 0.0
        %2116 = vmatpush2.xpose.msra.mxu0 0.0
        %2117 = vmatprep.subr.mxu0 0.0
        %2118 = vmatpush2.xpose.msra.mxu0 0.0
        %2119 = vmatprep.subr.mxu0 0.0
        %2120 = vmatpush2.xpose.msra.mxu0 0.0
        %2121 = vmatprep.subr.mxu0 0.0
        %2122 = vmatpush2.xpose.msra.mxu0 0.0
        %2123 = vmatprep.subr.mxu0 0.0
        %2124 = vmatpush2.xpose.msra.mxu0 0.0
        %2125 = vmatprep.subr.mxu0 0.0
        %2126 = vmatpush2.xpose.msra.mxu0 0.0
        %2127 = vmatprep.mubr.f32.mxu0 0.0
        %2128 = vmatmul.mubr.f32.gmra.mxu0 %v1999
        %v2129 = vpop.f32.mrf.mxu0
        %v2130 = vadd.f32 %v1933, %v2129
        %v2131 = vpop.f32.mrf.mxu0
        %2132 = vmatprep.mubr.f32.mxu0 0.0
        %2133 = vmatmul.mubr.f32.gmra.mxu0 %v2001
        %v2134 = vpop.f32.mrf.mxu0
        %v2135 = vadd.f32 %v1933, %v2134
        %v2136 = vpop.f32.mrf.mxu0
        %2137 = vmatprep.mubr.f32.mxu0 0.0
        %2138 = vmatmul.mubr.f32.gmra.mxu0 %v2003
        %v2139 = vpop.f32.mrf.mxu0
        %v2140 = vadd.f32 %v1933, %v2139
        %v2141 = vpop.f32.mrf.mxu0
        %2142 = vmatprep.mubr.f32.mxu0 0.0
        %2143 = vmatmul.mubr.f32.gmra.mxu0 %v2005
        %v2144 = vpop.f32.mrf.mxu0
        %v2145 = vadd.f32 %v1933, %v2144
        %v2146 = vpop.f32.mrf.mxu0
        %2147 = vmatprep.mubr.f32.mxu0 0.0
        %2148 = vmatmul.mubr.f32.gmra.mxu0 %v2007
        %v2149 = vpop.f32.mrf.mxu0
        %v2150 = vadd.f32 %v1933, %v2149
        %v2151 = vpop.f32.mrf.mxu0
        %2152 = vmatprep.mubr.f32.mxu0 0.0
        %2153 = vmatmul.mubr.f32.gmra.mxu0 %v2009
        %v2154 = vpop.f32.mrf.mxu0
        %v2155 = vadd.f32 %v1933, %v2154
        %v2156 = vpop.f32.mrf.mxu0
        %2157 = vmatprep.mubr.f32.mxu0 0.0
        %2158 = vmatmul.mubr.f32.gmra.mxu0 %v2011
        %v2159 = vpop.f32.mrf.mxu0
        %v2160 = vadd.f32 %v1933, %v2159
        %v2161 = vpop.f32.mrf.mxu0
        %2162 = vmatprep.mubr.f32.mxu0 0.0
        %2163 = vmatmul.mubr.f32.gmra.mxu0 %v2013
        %v2164 = vpop.f32.mrf.mxu0
        %v2165 = vadd.f32 %v1933, %v2164
        %v2166 = vpop.f32.mrf.mxu0
        %2167 = vmatprep.mubr.f32.mxu0 0.0
        %2168 = vmatmul.mubr.f32.gmra.mxu0 %v2015
        %v2169 = vpop.f32.mrf.mxu0
        %v2170 = vadd.f32 %v1933, %v2169
        %v2171 = vpop.f32.mrf.mxu0
        %2172 = vmatprep.mubr.f32.mxu0 0.0
        %2173 = vmatmul.mubr.f32.gmra.mxu0 %v2017
        %v2174 = vpop.f32.mrf.mxu0
        %v2175 = vadd.f32 %v1933, %v2174
        %v2176 = vpop.f32.mrf.mxu0
        %2177 = vmatprep.mubr.f32.mxu0 0.0
        %2178 = vmatmul.mubr.f32.gmra.mxu0 %v2019
        %v2179 = vpop.f32.mrf.mxu0
        %v2180 = vadd.f32 %v1933, %v2179
        %v2181 = vpop.f32.mrf.mxu0
        %2182 = vmatprep.mubr.f32.mxu0 0.0
        %2183 = vmatmul.mubr.f32.gmra.mxu0 %v2021
        %v2184 = vpop.f32.mrf.mxu0
        %v2185 = vadd.f32 %v1933, %v2184
        %v2186 = vpop.f32.mrf.mxu0
        %2187 = vmatprep.mubr.f32.mxu0 0.0
        %2188 = vmatmul.mubr.f32.gmra.mxu0 %v2023
        %v2189 = vpop.f32.mrf.mxu0
        %v2190 = vadd.f32 %v1933, %v2189
        %v2191 = vpop.f32.mrf.mxu0
        %2192 = vmatprep.mubr.f32.mxu0 0.0
        %2193 = vmatmul.mubr.f32.gmra.mxu0 %v2025
        %v2194 = vpop.f32.mrf.mxu0
        %v2195 = vadd.f32 %v1933, %v2194
        %v2196 = vpop.f32.mrf.mxu0
        %2197 = vmatprep.mubr.f32.mxu0 0.0
        %2198 = vmatmul.mubr.f32.gmra.mxu0 %v2027
        %v2199 = vpop.f32.mrf.mxu0
        %v2200 = vadd.f32 %v1933, %v2199
        %v2201 = vpop.f32.mrf.mxu0
        %2202 = vmatprep.mubr.f32.mxu0 0.0
        %2203 = vmatmul.mubr.f32.gmra.mxu0 %v2029
        %v2204 = vpop.f32.mrf.mxu0
        %v2205 = vadd.f32 %v1933, %v2204
        %v2206 = vpop.f32.mrf.mxu0
        %2207 = vdwg.mxu0
        %2208 = vmax.xlane.f32.xlu0 %v2130
        %v2209 = vpop.xlane.xlu0 %2208
        %2210 = vmax.xlane.f32.xlu0 %v2135
        %v2211 = vpop.xlane.xlu0 %2210
        %2212 = vmax.xlane.f32.xlu0 %v2140
        %v2213 = vpop.xlane.xlu0 %2212
        %2214 = vmax.xlane.f32.xlu0 %v2145
        %v2215 = vpop.xlane.xlu0 %2214
        %2216 = vmax.xlane.f32.xlu0 %v2150
        %v2217 = vpop.xlane.xlu0 %2216
        %2218 = vmax.xlane.f32.xlu0 %v2155
        %v2219 = vpop.xlane.xlu0 %2218
        %2220 = vmax.xlane.f32.xlu0 %v2160
        %v2221 = vpop.xlane.xlu0 %2220
        %2222 = vmax.xlane.f32.xlu0 %v2165
        %v2223 = vpop.xlane.xlu0 %2222
        %2224 = vmax.xlane.f32.xlu0 %v2170
        %v2225 = vpop.xlane.xlu0 %2224
        %2226 = vmax.xlane.f32.xlu0 %v2175
        %v2227 = vpop.xlane.xlu0 %2226
        %2228 = vmax.xlane.f32.xlu0 %v2180
        %v2229 = vpop.xlane.xlu0 %2228
        %2230 = vmax.xlane.f32.xlu0 %v2185
        %v2231 = vpop.xlane.xlu0 %2230
        %2232 = vmax.xlane.f32.xlu0 %v2190
        %v2233 = vpop.xlane.xlu0 %2232
        %2234 = vmax.xlane.f32.xlu0 %v2195
        %v2235 = vpop.xlane.xlu0 %2234
        %2236 = vmax.xlane.f32.xlu0 %v2200
        %v2237 = vpop.xlane.xlu0 %2236
        %2238 = vmax.xlane.f32.xlu0 %v2205
        %v2239 = vpop.xlane.xlu0 %2238
        %v2240 = vsub.f32 %v2130, %v2209
        %v2241 = vsub.f32 %v2135, %v2211
        %v2242 = vsub.f32 %v2140, %v2213
        %v2243 = vsub.f32 %v2145, %v2215
        %v2244 = vsub.f32 %v2150, %v2217
        %v2245 = vsub.f32 %v2155, %v2219
        %v2246 = vsub.f32 %v2160, %v2221
        %v2247 = vsub.f32 %v2165, %v2223
        %v2248 = vsub.f32 %v2170, %v2225
        %v2249 = vsub.f32 %v2175, %v2227
        %v2250 = vsub.f32 %v2180, %v2229
        %v2251 = vsub.f32 %v2185, %v2231
        %v2252 = vsub.f32 %v2190, %v2233
        %v2253 = vsub.f32 %v2195, %v2235
        %v2254 = vsub.f32 %v2200, %v2237
        %v2255 = vsub.f32 %v2205, %v2239
        %v2256 = vmul.f32 %v2240, 1.442695
        %v2257 = vpow.pop %v2256
        %v2258 = vmul.f32 %v2241, 1.442695
        %v2259 = vpow.pop %v2258
        %v2260 = vmul.f32 %v2242, 1.442695
        %v2261 = vpow.pop %v2260
        %v2262 = vmul.f32 %v2243, 1.442695
        %v2263 = vpow.pop %v2262
        %v2264 = vmul.f32 %v2244, 1.442695
        %v2265 = vpow.pop %v2264
        %v2266 = vmul.f32 %v2245, 1.442695
        %v2267 = vpow.pop %v2266
        %v2268 = vmul.f32 %v2246, 1.442695
        %v2269 = vpow.pop %v2268
        %v2270 = vmul.f32 %v2247, 1.442695
        %v2271 = vpow.pop %v2270
        %v2272 = vmul.f32 %v2248, 1.442695
        %v2273 = vpow.pop %v2272
        %v2274 = vmul.f32 %v2249, 1.442695
        %v2275 = vpow.pop %v2274
        %v2276 = vmul.f32 %v2250, 1.442695
        %v2277 = vpow.pop %v2276
        %v2278 = vmul.f32 %v2251, 1.442695
        %v2279 = vpow.pop %v2278
        %v2280 = vmul.f32 %v2252, 1.442695
        %v2281 = vpow.pop %v2280
        %v2282 = vmul.f32 %v2253, 1.442695
        %v2283 = vpow.pop %v2282
        %v2284 = vmul.f32 %v2254, 1.442695
        %v2285 = vpow.pop %v2284
        %v2286 = vmul.f32 %v2255, 1.442695
        %v2287 = vpow.pop %v2286
        %2288 = vadd.xlane.f32.xlu0 %v2257
        %v2289 = vpop.xlane.xlu0 %2288
        %2290 = vadd.xlane.f32.xlu0 %v2259
        %v2291 = vpop.xlane.xlu0 %2290
        %2292 = vadd.xlane.f32.xlu0 %v2261
        %v2293 = vpop.xlane.xlu0 %2292
        %2294 = vadd.xlane.f32.xlu0 %v2263
        %v2295 = vpop.xlane.xlu0 %2294
        %2296 = vadd.xlane.f32.xlu0 %v2265
        %v2297 = vpop.xlane.xlu0 %2296
        %2298 = vadd.xlane.f32.xlu0 %v2267
        %v2299 = vpop.xlane.xlu0 %2298
        %2300 = vadd.xlane.f32.xlu0 %v2269
        %v2301 = vpop.xlane.xlu0 %2300
        %2302 = vadd.xlane.f32.xlu0 %v2271
        %v2303 = vpop.xlane.xlu0 %2302
        %2304 = vadd.xlane.f32.xlu0 %v2273
        %v2305 = vpop.xlane.xlu0 %2304
        %2306 = vadd.xlane.f32.xlu0 %v2275
        %v2307 = vpop.xlane.xlu0 %2306
        %2308 = vadd.xlane.f32.xlu0 %v2277
        %v2309 = vpop.xlane.xlu0 %2308
        %2310 = vadd.xlane.f32.xlu0 %v2279
        %v2311 = vpop.xlane.xlu0 %2310
        %2312 = vadd.xlane.f32.xlu0 %v2281
        %v2313 = vpop.xlane.xlu0 %2312
        %2314 = vadd.xlane.f32.xlu0 %v2283
        %v2315 = vpop.xlane.xlu0 %2314
        %2316 = vadd.xlane.f32.xlu0 %v2285
        %v2317 = vpop.xlane.xlu0 %2316
        %2318 = vadd.xlane.f32.xlu0 %v2287
        %v2319 = vpop.xlane.xlu0 %2318
        %v2320 = vrcp.pop %v2289
        %v2321 = vrcp.pop %v2291
        %v2322 = vrcp.pop %v2293
        %v2323 = vrcp.pop %v2295
        %v2324 = vrcp.pop %v2297
        %v2325 = vrcp.pop %v2299
        %v2326 = vrcp.pop %v2301
        %v2327 = vrcp.pop %v2303
        %v2328 = vrcp.pop %v2305
        %v2329 = vrcp.pop %v2307
        %v2330 = vrcp.pop %v2309
        %v2331 = vrcp.pop %v2311
        %v2332 = vrcp.pop %v2313
        %v2333 = vrcp.pop %v2315
        %v2334 = vrcp.pop %v2317
        %v2335 = vrcp.pop %v2319
        %v2336 = vmul.f32 %v2289, %v2320
        %v2337 = vmul.f32 %v2291, %v2321
        %v2338 = vmul.f32 %v2293, %v2322
        %v2339 = vmul.f32 %v2295, %v2323
        %v2340 = vmul.f32 %v2297, %v2324
        %v2341 = vmul.f32 %v2299, %v2325
        %v2342 = vmul.f32 %v2301, %v2326
        %v2343 = vmul.f32 %v2303, %v2327
        %v2344 = vmul.f32 %v2305, %v2328
        %v2345 = vmul.f32 %v2307, %v2329
        %v2346 = vmul.f32 %v2309, %v2330
        %v2347 = vmul.f32 %v2311, %v2331
        %v2348 = vmul.f32 %v2313, %v2332
        %v2349 = vmul.f32 %v2315, %v2333
        %v2350 = vmul.f32 %v2317, %v2334
        %v2351 = vmul.f32 %v2319, %v2335
        %v2352 = vsub.f32 2.0, %v2336
        %v2353 = vsub.f32 2.0, %v2337
        %v2354 = vsub.f32 2.0, %v2338
        %v2355 = vsub.f32 2.0, %v2339
        %v2356 = vsub.f32 2.0, %v2340
        %v2357 = vsub.f32 2.0, %v2341
        %v2358 = vsub.f32 2.0, %v2342
        %v2359 = vsub.f32 2.0, %v2343
        %v2360 = vsub.f32 2.0, %v2344
        %v2361 = vsub.f32 2.0, %v2345
        %v2362 = vsub.f32 2.0, %v2346
        %v2363 = vsub.f32 2.0, %v2347
        %v2364 = vsub.f32 2.0, %v2348
        %v2365 = vsub.f32 2.0, %v2349
        %v2366 = vsub.f32 2.0, %v2350
        %v2367 = vsub.f32 2.0, %v2351
        %v2368 = vmul.f32 %v2320, %v2352
        %v2369 = vmul.f32 %v2321, %v2353
        %v2370 = vmul.f32 %v2322, %v2354
        %v2371 = vmul.f32 %v2323, %v2355
        %v2372 = vmul.f32 %v2324, %v2356
        %v2373 = vmul.f32 %v2325, %v2357
        %v2374 = vmul.f32 %v2326, %v2358
        %v2375 = vmul.f32 %v2327, %v2359
        %v2376 = vmul.f32 %v2328, %v2360
        %v2377 = vmul.f32 %v2329, %v2361
        %v2378 = vmul.f32 %v2330, %v2362
        %v2379 = vmul.f32 %v2331, %v2363
        %v2380 = vmul.f32 %v2332, %v2364
        %v2381 = vmul.f32 %v2333, %v2365
        %v2382 = vmul.f32 %v2334, %v2366
        %v2383 = vmul.f32 %v2335, %v2367
        %v2384 = vmul.f32 %v2257, %v2368
        %v2385 = vmul.f32 %v2259, %v2369
        %v2386 = vmul.f32 %v2261, %v2370
        %v2387 = vmul.f32 %v2263, %v2371
        %v2388 = vmul.f32 %v2265, %v2372
        %v2389 = vmul.f32 %v2267, %v2373
        %v2390 = vmul.f32 %v2269, %v2374
        %v2391 = vmul.f32 %v2271, %v2375
        %v2392 = vmul.f32 %v2273, %v2376
        %v2393 = vmul.f32 %v2275, %v2377
        %v2394 = vmul.f32 %v2277, %v2378
        %v2395 = vmul.f32 %v2279, %v2379
        %v2396 = vmul.f32 %v2281, %v2380
        %v2397 = vmul.f32 %v2283, %v2381
        %v2398 = vmul.f32 %v2285, %v2382
        %v2399 = vmul.f32 %v2287, %v2383
        %s2400 = scalar_lea.vmem %s334, 256 [#allocation3]
        %2401 = vst [vmem:[%s2400] sm:$0xff] %v2384
        %2402 = vst [vmem:[%s2400 + $0x8] sm:$0xff] %v2385
        %2403 = vst [vmem:[%s2400 + $0x10] sm:$0xff] %v2386
        %2404 = vst [vmem:[%s2400 + $0x18] sm:$0xff] %v2387
        %2405 = vst [vmem:[%s2400 + $0x20] sm:$0xff] %v2388
        %2406 = vst [vmem:[%s2400 + $0x28] sm:$0xff] %v2389
        %2407 = vst [vmem:[%s2400 + $0x30] sm:$0xff] %v2390
        %2408 = vst [vmem:[%s2400 + $0x38] sm:$0xff] %v2391
        %2409 = vst [vmem:[%s2400 + $0x40] sm:$0xff] %v2392
        %2410 = vst [vmem:[%s2400 + $0x48] sm:$0xff] %v2393
        %2411 = vst [vmem:[%s2400 + $0x50] sm:$0xff] %v2394
        %2412 = vst [vmem:[%s2400 + $0x58] sm:$0xff] %v2395
        %2413 = vst [vmem:[%s2400 + $0x60] sm:$0xff] %v2396
        %2414 = vst [vmem:[%s2400 + $0x68] sm:$0xff] %v2397
        %2415 = vst [vmem:[%s2400 + $0x70] sm:$0xff] %v2398
        %2416 = vst [vmem:[%s2400 + $0x78] sm:$0xff] %v2399
        %2417 = vrot.lane.b32.xlu0 %v502, 48
        %v2418 = vpop.permute.xlu0 %2417
        %2419 = vrot.lane.b32.xlu0 %v507, 48
        %v2420 = vpop.permute.xlu0 %2419
        %2421 = vrot.lane.b32.xlu0 %v512, 48
        %v2422 = vpop.permute.xlu0 %2421
        %2423 = vrot.lane.b32.xlu0 %v517, 48
        %v2424 = vpop.permute.xlu0 %2423
        %2425 = vrot.lane.b32.xlu0 %v522, 48
        %v2426 = vpop.permute.xlu0 %2425
        %2427 = vrot.lane.b32.xlu0 %v527, 48
        %v2428 = vpop.permute.xlu0 %2427
        %2429 = vrot.lane.b32.xlu0 %v532, 48
        %v2430 = vpop.permute.xlu0 %2429
        %2431 = vrot.lane.b32.xlu0 %v537, 48
        %v2432 = vpop.permute.xlu0 %2431
        %2433 = vrot.lane.b32.xlu0 %v542, 48
        %v2434 = vpop.permute.xlu0 %2433
        %2435 = vrot.lane.b32.xlu0 %v547, 48
        %v2436 = vpop.permute.xlu0 %2435
        %2437 = vrot.lane.b32.xlu0 %v552, 48
        %v2438 = vpop.permute.xlu0 %2437
        %2439 = vrot.lane.b32.xlu0 %v557, 48
        %v2440 = vpop.permute.xlu0 %2439
        %2441 = vrot.lane.b32.xlu0 %v562, 48
        %v2442 = vpop.permute.xlu0 %2441
        %2443 = vrot.lane.b32.xlu0 %v567, 48
        %v2444 = vpop.permute.xlu0 %2443
        %2445 = vrot.lane.b32.xlu0 %v572, 48
        %v2446 = vpop.permute.xlu0 %2445
        %2447 = vrot.lane.b32.xlu0 %v577, 48
        %v2448 = vpop.permute.xlu0 %2447
        %2465 = vmatprep.subr.mxu0 0.0
        %2466 = vmatpush1.msra.mxu0 %v2448
        %2467 = vmatprep.subr.mxu0 0.0
        %2468 = vmatpush1.msra.mxu0 %v2446
        %2469 = vmatprep.subr.mxu0 0.0
        %2470 = vmatpush1.msra.mxu0 %v2444
        %2471 = vmatprep.subr.mxu0 0.0
        %2472 = vmatpush1.msra.mxu0 %v2442
        %2473 = vmatprep.subr.mxu0 0.0
        %2474 = vmatpush1.msra.mxu0 %v2440
        %2475 = vmatprep.subr.mxu0 0.0
        %2476 = vmatpush1.msra.mxu0 %v2438
        %2477 = vmatprep.subr.mxu0 0.0
        %2478 = vmatpush1.msra.mxu0 %v2436
        %2479 = vmatprep.subr.mxu0 0.0
        %2480 = vmatpush1.msra.mxu0 %v2434
        %2481 = vmatprep.subr.mxu0 0.0
        %2482 = vmatpush1.msra.mxu0 %v2432
        %2483 = vmatprep.subr.mxu0 0.0
        %2484 = vmatpush1.msra.mxu0 %v2430
        %2485 = vmatprep.subr.mxu0 0.0
        %2486 = vmatpush1.msra.mxu0 %v2428
        %2487 = vmatprep.subr.mxu0 0.0
        %2488 = vmatpush1.msra.mxu0 %v2426
        %2489 = vmatprep.subr.mxu0 0.0
        %2490 = vmatpush1.msra.mxu0 %v2424
        %2491 = vmatprep.subr.mxu0 0.0
        %2492 = vmatpush1.msra.mxu0 %v2422
        %2493 = vmatprep.subr.mxu0 0.0
        %2494 = vmatpush1.msra.mxu0 %v2420
        %2495 = vmatprep.subr.mxu0 0.0
        %2496 = vmatpush1.msra.mxu0 %v2418
        %2497 = vmatprep.subr.mxu0 0.0
        %2498 = vmatpush2.msra.mxu0 0.0
        %2499 = vmatprep.subr.mxu0 0.0
        %2500 = vmatpush2.msra.mxu0 0.0
        %2501 = vmatprep.subr.mxu0 0.0
        %2502 = vmatpush2.msra.mxu0 0.0
        %2503 = vmatprep.subr.mxu0 0.0
        %2504 = vmatpush2.msra.mxu0 0.0
        %2505 = vmatprep.subr.mxu0 0.0
        %2506 = vmatpush2.msra.mxu0 0.0
        %2507 = vmatprep.subr.mxu0 0.0
        %2508 = vmatpush2.msra.mxu0 0.0
        %2509 = vmatprep.subr.mxu0 0.0
        %2510 = vmatpush2.msra.mxu0 0.0
        %2511 = vmatprep.subr.mxu0 0.0
        %2512 = vmatpush2.msra.mxu0 0.0
        %2513 = vmatprep.subr.mxu0 0.0
        %2514 = vmatpush2.msra.mxu0 0.0
        %2515 = vmatprep.subr.mxu0 0.0
        %2516 = vmatpush2.msra.mxu0 0.0
        %2517 = vmatprep.subr.mxu0 0.0
        %2518 = vmatpush2.msra.mxu0 0.0
        %2519 = vmatprep.subr.mxu0 0.0
        %2520 = vmatpush2.msra.mxu0 0.0
        %2521 = vmatprep.subr.mxu0 0.0
        %2522 = vmatpush2.msra.mxu0 0.0
        %2523 = vmatprep.subr.mxu0 0.0
        %2524 = vmatpush2.msra.mxu0 0.0
        %2525 = vmatprep.subr.mxu0 0.0
        %2526 = vmatpush2.msra.mxu0 0.0
        %2527 = vmatprep.subr.mxu0 0.0
        %2528 = vmatpush2.msra.mxu0 0.0
        %2529 = vmatprep.mubr.f32.mxu0 0.0
        %2530 = vmatmul.mubr.f32.gmra.mxu0 %v2384
        %v2531 = vpop.f32.mrf.mxu0
        %v2532 = vadd.f32 0.0, %v2531
        %v2533 = vpop.f32.mrf.mxu0
        %2534 = vmatprep.mubr.f32.mxu0 0.0
        %2535 = vmatmul.mubr.f32.gmra.mxu0 %v2385
        %v2536 = vpop.f32.mrf.mxu0
        %v2537 = vadd.f32 0.0, %v2536
        %v2538 = vpop.f32.mrf.mxu0
        %2539 = vmatprep.mubr.f32.mxu0 0.0
        %2540 = vmatmul.mubr.f32.gmra.mxu0 %v2386
        %v2541 = vpop.f32.mrf.mxu0
        %v2542 = vadd.f32 0.0, %v2541
        %v2543 = vpop.f32.mrf.mxu0
        %2544 = vmatprep.mubr.f32.mxu0 0.0
        %2545 = vmatmul.mubr.f32.gmra.mxu0 %v2387
        %v2546 = vpop.f32.mrf.mxu0
        %v2547 = vadd.f32 0.0, %v2546
        %v2548 = vpop.f32.mrf.mxu0
        %2549 = vmatprep.mubr.f32.mxu0 0.0
        %2550 = vmatmul.mubr.f32.gmra.mxu0 %v2388
        %v2551 = vpop.f32.mrf.mxu0
        %v2552 = vadd.f32 0.0, %v2551
        %v2553 = vpop.f32.mrf.mxu0
        %2554 = vmatprep.mubr.f32.mxu0 0.0
        %2555 = vmatmul.mubr.f32.gmra.mxu0 %v2389
        %v2556 = vpop.f32.mrf.mxu0
        %v2557 = vadd.f32 0.0, %v2556
        %v2558 = vpop.f32.mrf.mxu0
        %2559 = vmatprep.mubr.f32.mxu0 0.0
        %2560 = vmatmul.mubr.f32.gmra.mxu0 %v2390
        %v2561 = vpop.f32.mrf.mxu0
        %v2562 = vadd.f32 0.0, %v2561
        %v2563 = vpop.f32.mrf.mxu0
        %2564 = vmatprep.mubr.f32.mxu0 0.0
        %2565 = vmatmul.mubr.f32.gmra.mxu0 %v2391
        %v2566 = vpop.f32.mrf.mxu0
        %v2567 = vadd.f32 0.0, %v2566
        %v2568 = vpop.f32.mrf.mxu0
        %2569 = vmatprep.mubr.f32.mxu0 0.0
        %2570 = vmatmul.mubr.f32.gmra.mxu0 %v2392
        %v2571 = vpop.f32.mrf.mxu0
        %v2572 = vadd.f32 0.0, %v2571
        %v2573 = vpop.f32.mrf.mxu0
        %2574 = vmatprep.mubr.f32.mxu0 0.0
        %2575 = vmatmul.mubr.f32.gmra.mxu0 %v2393
        %v2576 = vpop.f32.mrf.mxu0
        %v2577 = vadd.f32 0.0, %v2576
        %v2578 = vpop.f32.mrf.mxu0
        %2579 = vmatprep.mubr.f32.mxu0 0.0
        %2580 = vmatmul.mubr.f32.gmra.mxu0 %v2394
        %v2581 = vpop.f32.mrf.mxu0
        %v2582 = vadd.f32 0.0, %v2581
        %v2583 = vpop.f32.mrf.mxu0
        %2584 = vmatprep.mubr.f32.mxu0 0.0
        %2585 = vmatmul.mubr.f32.gmra.mxu0 %v2395
        %v2586 = vpop.f32.mrf.mxu0
        %v2587 = vadd.f32 0.0, %v2586
        %v2588 = vpop.f32.mrf.mxu0
        %2589 = vmatprep.mubr.f32.mxu0 0.0
        %2590 = vmatmul.mubr.f32.gmra.mxu0 %v2396
        %v2591 = vpop.f32.mrf.mxu0
        %v2592 = vadd.f32 0.0, %v2591
        %v2593 = vpop.f32.mrf.mxu0
        %2594 = vmatprep.mubr.f32.mxu0 0.0
        %2595 = vmatmul.mubr.f32.gmra.mxu0 %v2397
        %v2596 = vpop.f32.mrf.mxu0
        %v2597 = vadd.f32 0.0, %v2596
        %v2598 = vpop.f32.mrf.mxu0
        %2599 = vmatprep.mubr.f32.mxu0 0.0
        %2600 = vmatmul.mubr.f32.gmra.mxu0 %v2398
        %v2601 = vpop.f32.mrf.mxu0
        %v2602 = vadd.f32 0.0, %v2601
        %v2603 = vpop.f32.mrf.mxu0
        %2604 = vmatprep.mubr.f32.mxu0 0.0
        %2605 = vmatmul.mubr.f32.gmra.mxu0 %v2399
        %v2606 = vpop.f32.mrf.mxu0
        %v2607 = vadd.f32 0.0, %v2606
        %v2608 = vpop.f32.mrf.mxu0
        %2609 = vdwg.mxu0
        %v2610 = vld [vmem:[%s5] sm:$0x1]
        %v2612 = vlaneseq
        %v2613 = vshrl.u32 %v2612, 7
        %v2614 = vsub.s32 0, %v2613
        %v2615 = vrot.slane %v2610, %v2614
        %2617 = vrot.lane.b32.xlu0 %v502, 104
        %v2618 = vpop.permute.xlu0 %2617
        %2619 = vrot.lane.b32.xlu0 %v507, 104
        %v2620 = vpop.permute.xlu0 %2619
        %2621 = vrot.lane.b32.xlu0 %v512, 104
        %v2622 = vpop.permute.xlu0 %2621
        %2623 = vrot.lane.b32.xlu0 %v517, 104
        %v2624 = vpop.permute.xlu0 %2623
        %2625 = vrot.lane.b32.xlu0 %v522, 104
        %v2626 = vpop.permute.xlu0 %2625
        %2627 = vrot.lane.b32.xlu0 %v527, 104
        %v2628 = vpop.permute.xlu0 %2627
        %2629 = vrot.lane.b32.xlu0 %v532, 104
        %v2630 = vpop.permute.xlu0 %2629
        %2631 = vrot.lane.b32.xlu0 %v537, 104
        %v2632 = vpop.permute.xlu0 %2631
        %2633 = vrot.lane.b32.xlu0 %v542, 104
        %v2634 = vpop.permute.xlu0 %2633
        %2635 = vrot.lane.b32.xlu0 %v547, 104
        %v2636 = vpop.permute.xlu0 %2635
        %2637 = vrot.lane.b32.xlu0 %v552, 104
        %v2638 = vpop.permute.xlu0 %2637
        %2639 = vrot.lane.b32.xlu0 %v557, 104
        %v2640 = vpop.permute.xlu0 %2639
        %2641 = vrot.lane.b32.xlu0 %v562, 104
        %v2642 = vpop.permute.xlu0 %2641
        %2643 = vrot.lane.b32.xlu0 %v567, 104
        %v2644 = vpop.permute.xlu0 %2643
        %2645 = vrot.lane.b32.xlu0 %v572, 104
        %v2646 = vpop.permute.xlu0 %2645
        %2647 = vrot.lane.b32.xlu0 %v577, 104
        %v2648 = vpop.permute.xlu0 %2647
        %2649 = vrot.lane.b32.xlu0 %v502, 72
        %v2650 = vpop.permute.xlu0 %2649
        %2651 = vrot.lane.b32.xlu0 %v507, 72
        %v2652 = vpop.permute.xlu0 %2651
        %2653 = vrot.lane.b32.xlu0 %v512, 72
        %v2654 = vpop.permute.xlu0 %2653
        %2655 = vrot.lane.b32.xlu0 %v517, 72
        %v2656 = vpop.permute.xlu0 %2655
        %2657 = vrot.lane.b32.xlu0 %v522, 72
        %v2658 = vpop.permute.xlu0 %2657
        %2659 = vrot.lane.b32.xlu0 %v527, 72
        %v2660 = vpop.permute.xlu0 %2659
        %2661 = vrot.lane.b32.xlu0 %v532, 72
        %v2662 = vpop.permute.xlu0 %2661
        %2663 = vrot.lane.b32.xlu0 %v537, 72
        %v2664 = vpop.permute.xlu0 %2663
        %2665 = vrot.lane.b32.xlu0 %v542, 72
        %v2666 = vpop.permute.xlu0 %2665
        %2667 = vrot.lane.b32.xlu0 %v547, 72
        %v2668 = vpop.permute.xlu0 %2667
        %2669 = vrot.lane.b32.xlu0 %v552, 72
        %v2670 = vpop.permute.xlu0 %2669
        %2671 = vrot.lane.b32.xlu0 %v557, 72
        %v2672 = vpop.permute.xlu0 %2671
        %2673 = vrot.lane.b32.xlu0 %v562, 72
        %v2674 = vpop.permute.xlu0 %2673
        %2675 = vrot.lane.b32.xlu0 %v567, 72
        %v2676 = vpop.permute.xlu0 %2675
        %2677 = vrot.lane.b32.xlu0 %v572, 72
        %v2678 = vpop.permute.xlu0 %2677
        %2679 = vrot.lane.b32.xlu0 %v577, 72
        %v2680 = vpop.permute.xlu0 %2679
        %v2681 = vsel %vm635, %v2618, 0
        %v2683 = vsel %vm635, %v2620, 0
        %v2685 = vsel %vm635, %v2622, 0
        %v2687 = vsel %vm635, %v2624, 0
        %v2689 = vsel %vm635, %v2626, 0
        %v2691 = vsel %vm635, %v2628, 0
        %v2693 = vsel %vm635, %v2630, 0
        %v2695 = vsel %vm635, %v2632, 0
        %v2697 = vsel %vm635, %v2634, 0
        %v2699 = vsel %vm635, %v2636, 0
        %v2701 = vsel %vm635, %v2638, 0
        %v2703 = vsel %vm635, %v2640, 0
        %v2705 = vsel %vm635, %v2642, 0
        %v2707 = vsel %vm635, %v2644, 0
        %v2709 = vsel %vm635, %v2646, 0
        %v2711 = vsel %vm635, %v2648, 0
        %v2713 = vsel %vm635, %v2650, 0
        %v2715 = vsel %vm635, %v2652, 0
        %v2717 = vsel %vm635, %v2654, 0
        %v2719 = vsel %vm635, %v2656, 0
        %v2721 = vsel %vm635, %v2658, 0
        %v2723 = vsel %vm635, %v2660, 0
        %v2725 = vsel %vm635, %v2662, 0
        %v2727 = vsel %vm635, %v2664, 0
        %v2729 = vsel %vm635, %v2666, 0
        %v2731 = vsel %vm635, %v2668, 0
        %v2733 = vsel %vm635, %v2670, 0
        %v2735 = vsel %vm635, %v2672, 0
        %v2737 = vsel %vm635, %v2674, 0
        %v2739 = vsel %vm635, %v2676, 0
        %v2741 = vsel %vm635, %v2678, 0
        %v2743 = vsel %vm635, %v2680, 0
        %2745 = vmatprep.subr.mxu0 0.0
        %2746 = vmatpush1.xpose.msra.mxu0 %v2743
        %2747 = vmatprep.subr.mxu0 0.0
        %2748 = vmatpush1.xpose.msra.mxu0 %v2741
        %2749 = vmatprep.subr.mxu0 0.0
        %2750 = vmatpush1.xpose.msra.mxu0 %v2739
        %2751 = vmatprep.subr.mxu0 0.0
        %2752 = vmatpush1.xpose.msra.mxu0 %v2737
        %2753 = vmatprep.subr.mxu0 0.0
        %2754 = vmatpush1.xpose.msra.mxu0 %v2735
        %2755 = vmatprep.subr.mxu0 0.0
        %2756 = vmatpush1.xpose.msra.mxu0 %v2733
        %2757 = vmatprep.subr.mxu0 0.0
        %2758 = vmatpush1.xpose.msra.mxu0 %v2731
        %2759 = vmatprep.subr.mxu0 0.0
        %2760 = vmatpush1.xpose.msra.mxu0 %v2729
        %2761 = vmatprep.subr.mxu0 0.0
        %2762 = vmatpush1.xpose.msra.mxu0 %v2727
        %2763 = vmatprep.subr.mxu0 0.0
        %2764 = vmatpush1.xpose.msra.mxu0 %v2725
        %2765 = vmatprep.subr.mxu0 0.0
        %2766 = vmatpush1.xpose.msra.mxu0 %v2723
        %2767 = vmatprep.subr.mxu0 0.0
        %2768 = vmatpush1.xpose.msra.mxu0 %v2721
        %2769 = vmatprep.subr.mxu0 0.0
        %2770 = vmatpush1.xpose.msra.mxu0 %v2719
        %2771 = vmatprep.subr.mxu0 0.0
        %2772 = vmatpush1.xpose.msra.mxu0 %v2717
        %2773 = vmatprep.subr.mxu0 0.0
        %2774 = vmatpush1.xpose.msra.mxu0 %v2715
        %2775 = vmatprep.subr.mxu0 0.0
        %2776 = vmatpush1.xpose.msra.mxu0 %v2713
        %2777 = vmatprep.subr.mxu0 0.0
        %2778 = vmatpush2.xpose.msra.mxu0 0.0
        %2779 = vmatprep.subr.mxu0 0.0
        %2780 = vmatpush2.xpose.msra.mxu0 0.0
        %2781 = vmatprep.subr.mxu0 0.0
        %2782 = vmatpush2.xpose.msra.mxu0 0.0
        %2783 = vmatprep.subr.mxu0 0.0
        %2784 = vmatpush2.xpose.msra.mxu0 0.0
        %2785 = vmatprep.subr.mxu0 0.0
        %2786 = vmatpush2.xpose.msra.mxu0 0.0
        %2787 = vmatprep.subr.mxu0 0.0
        %2788 = vmatpush2.xpose.msra.mxu0 0.0
        %2789 = vmatprep.subr.mxu0 0.0
        %2790 = vmatpush2.xpose.msra.mxu0 0.0
        %2791 = vmatprep.subr.mxu0 0.0
        %2792 = vmatpush2.xpose.msra.mxu0 0.0
        %2793 = vmatprep.subr.mxu0 0.0
        %2794 = vmatpush2.xpose.msra.mxu0 0.0
        %2795 = vmatprep.subr.mxu0 0.0
        %2796 = vmatpush2.xpose.msra.mxu0 0.0
        %2797 = vmatprep.subr.mxu0 0.0
        %2798 = vmatpush2.xpose.msra.mxu0 0.0
        %2799 = vmatprep.subr.mxu0 0.0
        %2800 = vmatpush2.xpose.msra.mxu0 0.0
        %2801 = vmatprep.subr.mxu0 0.0
        %2802 = vmatpush2.xpose.msra.mxu0 0.0
        %2803 = vmatprep.subr.mxu0 0.0
        %2804 = vmatpush2.xpose.msra.mxu0 0.0
        %2805 = vmatprep.subr.mxu0 0.0
        %2806 = vmatpush2.xpose.msra.mxu0 0.0
        %2807 = vmatprep.subr.mxu0 0.0
        %2808 = vmatpush2.xpose.msra.mxu0 0.0
        %2809 = vmatprep.mubr.f32.mxu0 0.0
        %2810 = vmatmul.mubr.f32.gmra.mxu0 %v2681
        %v2811 = vpop.f32.mrf.mxu0
        %v2812 = vadd.f32 %v2615, %v2811
        %v2813 = vpop.f32.mrf.mxu0
        %2814 = vmatprep.mubr.f32.mxu0 0.0
        %2815 = vmatmul.mubr.f32.gmra.mxu0 %v2683
        %v2816 = vpop.f32.mrf.mxu0
        %v2817 = vadd.f32 %v2615, %v2816
        %v2818 = vpop.f32.mrf.mxu0
        %2819 = vmatprep.mubr.f32.mxu0 0.0
        %2820 = vmatmul.mubr.f32.gmra.mxu0 %v2685
        %v2821 = vpop.f32.mrf.mxu0
        %v2822 = vadd.f32 %v2615, %v2821
        %v2823 = vpop.f32.mrf.mxu0
        %2824 = vmatprep.mubr.f32.mxu0 0.0
        %2825 = vmatmul.mubr.f32.gmra.mxu0 %v2687
        %v2826 = vpop.f32.mrf.mxu0
        %v2827 = vadd.f32 %v2615, %v2826
        %v2828 = vpop.f32.mrf.mxu0
        %2829 = vmatprep.mubr.f32.mxu0 0.0
        %2830 = vmatmul.mubr.f32.gmra.mxu0 %v2689
        %v2831 = vpop.f32.mrf.mxu0
        %v2832 = vadd.f32 %v2615, %v2831
        %v2833 = vpop.f32.mrf.mxu0
        %2834 = vmatprep.mubr.f32.mxu0 0.0
        %2835 = vmatmul.mubr.f32.gmra.mxu0 %v2691
        %v2836 = vpop.f32.mrf.mxu0
        %v2837 = vadd.f32 %v2615, %v2836
        %v2838 = vpop.f32.mrf.mxu0
        %2839 = vmatprep.mubr.f32.mxu0 0.0
        %2840 = vmatmul.mubr.f32.gmra.mxu0 %v2693
        %v2841 = vpop.f32.mrf.mxu0
        %v2842 = vadd.f32 %v2615, %v2841
        %v2843 = vpop.f32.mrf.mxu0
        %2844 = vmatprep.mubr.f32.mxu0 0.0
        %2845 = vmatmul.mubr.f32.gmra.mxu0 %v2695
        %v2846 = vpop.f32.mrf.mxu0
        %v2847 = vadd.f32 %v2615, %v2846
        %v2848 = vpop.f32.mrf.mxu0
        %2849 = vmatprep.mubr.f32.mxu0 0.0
        %2850 = vmatmul.mubr.f32.gmra.mxu0 %v2697
        %v2851 = vpop.f32.mrf.mxu0
        %v2852 = vadd.f32 %v2615, %v2851
        %v2853 = vpop.f32.mrf.mxu0
        %2854 = vmatprep.mubr.f32.mxu0 0.0
        %2855 = vmatmul.mubr.f32.gmra.mxu0 %v2699
        %v2856 = vpop.f32.mrf.mxu0
        %v2857 = vadd.f32 %v2615, %v2856
        %v2858 = vpop.f32.mrf.mxu0
        %2859 = vmatprep.mubr.f32.mxu0 0.0
        %2860 = vmatmul.mubr.f32.gmra.mxu0 %v2701
        %v2861 = vpop.f32.mrf.mxu0
        %v2862 = vadd.f32 %v2615, %v2861
        %v2863 = vpop.f32.mrf.mxu0
        %2864 = vmatprep.mubr.f32.mxu0 0.0
        %2865 = vmatmul.mubr.f32.gmra.mxu0 %v2703
        %v2866 = vpop.f32.mrf.mxu0
        %v2867 = vadd.f32 %v2615, %v2866
        %v2868 = vpop.f32.mrf.mxu0
        %2869 = vmatprep.mubr.f32.mxu0 0.0
        %2870 = vmatmul.mubr.f32.gmra.mxu0 %v2705
        %v2871 = vpop.f32.mrf.mxu0
        %v2872 = vadd.f32 %v2615, %v2871
        %v2873 = vpop.f32.mrf.mxu0
        %2874 = vmatprep.mubr.f32.mxu0 0.0
        %2875 = vmatmul.mubr.f32.gmra.mxu0 %v2707
        %v2876 = vpop.f32.mrf.mxu0
        %v2877 = vadd.f32 %v2615, %v2876
        %v2878 = vpop.f32.mrf.mxu0
        %2879 = vmatprep.mubr.f32.mxu0 0.0
        %2880 = vmatmul.mubr.f32.gmra.mxu0 %v2709
        %v2881 = vpop.f32.mrf.mxu0
        %v2882 = vadd.f32 %v2615, %v2881
        %v2883 = vpop.f32.mrf.mxu0
        %2884 = vmatprep.mubr.f32.mxu0 0.0
        %2885 = vmatmul.mubr.f32.gmra.mxu0 %v2711
        %v2886 = vpop.f32.mrf.mxu0
        %v2887 = vadd.f32 %v2615, %v2886
        %v2888 = vpop.f32.mrf.mxu0
        %2889 = vdwg.mxu0
        %2890 = vmax.xlane.f32.xlu0 %v2812
        %v2891 = vpop.xlane.xlu0 %2890
        %2892 = vmax.xlane.f32.xlu0 %v2817
        %v2893 = vpop.xlane.xlu0 %2892
        %2894 = vmax.xlane.f32.xlu0 %v2822
        %v2895 = vpop.xlane.xlu0 %2894
        %2896 = vmax.xlane.f32.xlu0 %v2827
        %v2897 = vpop.xlane.xlu0 %2896
        %2898 = vmax.xlane.f32.xlu0 %v2832
        %v2899 = vpop.xlane.xlu0 %2898
        %2900 = vmax.xlane.f32.xlu0 %v2837
        %v2901 = vpop.xlane.xlu0 %2900
        %2902 = vmax.xlane.f32.xlu0 %v2842
        %v2903 = vpop.xlane.xlu0 %2902
        %2904 = vmax.xlane.f32.xlu0 %v2847
        %v2905 = vpop.xlane.xlu0 %2904
        %2906 = vmax.xlane.f32.xlu0 %v2852
        %v2907 = vpop.xlane.xlu0 %2906
        %2908 = vmax.xlane.f32.xlu0 %v2857
        %v2909 = vpop.xlane.xlu0 %2908
        %2910 = vmax.xlane.f32.xlu0 %v2862
        %v2911 = vpop.xlane.xlu0 %2910
        %2912 = vmax.xlane.f32.xlu0 %v2867
        %v2913 = vpop.xlane.xlu0 %2912
        %2914 = vmax.xlane.f32.xlu0 %v2872
        %v2915 = vpop.xlane.xlu0 %2914
        %2916 = vmax.xlane.f32.xlu0 %v2877
        %v2917 = vpop.xlane.xlu0 %2916
        %2918 = vmax.xlane.f32.xlu0 %v2882
        %v2919 = vpop.xlane.xlu0 %2918
        %2920 = vmax.xlane.f32.xlu0 %v2887
        %v2921 = vpop.xlane.xlu0 %2920
        %v2922 = vsub.f32 %v2812, %v2891
        %v2923 = vsub.f32 %v2817, %v2893
        %v2924 = vsub.f32 %v2822, %v2895
        %v2925 = vsub.f32 %v2827, %v2897
        %v2926 = vsub.f32 %v2832, %v2899
        %v2927 = vsub.f32 %v2837, %v2901
        %v2928 = vsub.f32 %v2842, %v2903
        %v2929 = vsub.f32 %v2847, %v2905
        %v2930 = vsub.f32 %v2852, %v2907
        %v2931 = vsub.f32 %v2857, %v2909
        %v2932 = vsub.f32 %v2862, %v2911
        %v2933 = vsub.f32 %v2867, %v2913
        %v2934 = vsub.f32 %v2872, %v2915
        %v2935 = vsub.f32 %v2877, %v2917
        %v2936 = vsub.f32 %v2882, %v2919
        %v2937 = vsub.f32 %v2887, %v2921
        %v2938 = vmul.f32 %v2922, 1.442695
        %v2939 = vpow.pop %v2938
        %v2940 = vmul.f32 %v2923, 1.442695
        %v2941 = vpow.pop %v2940
        %v2942 = vmul.f32 %v2924, 1.442695
        %v2943 = vpow.pop %v2942
        %v2944 = vmul.f32 %v2925, 1.442695
        %v2945 = vpow.pop %v2944
        %v2946 = vmul.f32 %v2926, 1.442695
        %v2947 = vpow.pop %v2946
        %v2948 = vmul.f32 %v2927, 1.442695
        %v2949 = vpow.pop %v2948
        %v2950 = vmul.f32 %v2928, 1.442695
        %v2951 = vpow.pop %v2950
        %v2952 = vmul.f32 %v2929, 1.442695
        %v2953 = vpow.pop %v2952
        %v2954 = vmul.f32 %v2930, 1.442695
        %v2955 = vpow.pop %v2954
        %v2956 = vmul.f32 %v2931, 1.442695
        %v2957 = vpow.pop %v2956
        %v2958 = vmul.f32 %v2932, 1.442695
        %v2959 = vpow.pop %v2958
        %v2960 = vmul.f32 %v2933, 1.442695
        %v2961 = vpow.pop %v2960
        %v2962 = vmul.f32 %v2934, 1.442695
        %v2963 = vpow.pop %v2962
        %v2964 = vmul.f32 %v2935, 1.442695
        %v2965 = vpow.pop %v2964
        %v2966 = vmul.f32 %v2936, 1.442695
        %v2967 = vpow.pop %v2966
        %v2968 = vmul.f32 %v2937, 1.442695
        %v2969 = vpow.pop %v2968
        %2970 = vadd.xlane.f32.xlu0 %v2939
        %v2971 = vpop.xlane.xlu0 %2970
        %2972 = vadd.xlane.f32.xlu0 %v2941
        %v2973 = vpop.xlane.xlu0 %2972
        %2974 = vadd.xlane.f32.xlu0 %v2943
        %v2975 = vpop.xlane.xlu0 %2974
        %2976 = vadd.xlane.f32.xlu0 %v2945
        %v2977 = vpop.xlane.xlu0 %2976
        %2978 = vadd.xlane.f32.xlu0 %v2947
        %v2979 = vpop.xlane.xlu0 %2978
        %2980 = vadd.xlane.f32.xlu0 %v2949
        %v2981 = vpop.xlane.xlu0 %2980
        %2982 = vadd.xlane.f32.xlu0 %v2951
        %v2983 = vpop.xlane.xlu0 %2982
        %2984 = vadd.xlane.f32.xlu0 %v2953
        %v2985 = vpop.xlane.xlu0 %2984
        %2986 = vadd.xlane.f32.xlu0 %v2955
        %v2987 = vpop.xlane.xlu0 %2986
        %2988 = vadd.xlane.f32.xlu0 %v2957
        %v2989 = vpop.xlane.xlu0 %2988
        %2990 = vadd.xlane.f32.xlu0 %v2959
        %v2991 = vpop.xlane.xlu0 %2990
        %2992 = vadd.xlane.f32.xlu0 %v2961
        %v2993 = vpop.xlane.xlu0 %2992
        %2994 = vadd.xlane.f32.xlu0 %v2963
        %v2995 = vpop.xlane.xlu0 %2994
        %2996 = vadd.xlane.f32.xlu0 %v2965
        %v2997 = vpop.xlane.xlu0 %2996
        %2998 = vadd.xlane.f32.xlu0 %v2967
        %v2999 = vpop.xlane.xlu0 %2998
        %3000 = vadd.xlane.f32.xlu0 %v2969
        %v3001 = vpop.xlane.xlu0 %3000
        %v3002 = vrcp.pop %v2971
        %v3003 = vrcp.pop %v2973
        %v3004 = vrcp.pop %v2975
        %v3005 = vrcp.pop %v2977
        %v3006 = vrcp.pop %v2979
        %v3007 = vrcp.pop %v2981
        %v3008 = vrcp.pop %v2983
        %v3009 = vrcp.pop %v2985
        %v3010 = vrcp.pop %v2987
        %v3011 = vrcp.pop %v2989
        %v3012 = vrcp.pop %v2991
        %v3013 = vrcp.pop %v2993
        %v3014 = vrcp.pop %v2995
        %v3015 = vrcp.pop %v2997
        %v3016 = vrcp.pop %v2999
        %v3017 = vrcp.pop %v3001
        %v3018 = vmul.f32 %v2971, %v3002
        %v3019 = vmul.f32 %v2973, %v3003
        %v3020 = vmul.f32 %v2975, %v3004
        %v3021 = vmul.f32 %v2977, %v3005
        %v3022 = vmul.f32 %v2979, %v3006
        %v3023 = vmul.f32 %v2981, %v3007
        %v3024 = vmul.f32 %v2983, %v3008
        %v3025 = vmul.f32 %v2985, %v3009
        %v3026 = vmul.f32 %v2987, %v3010
        %v3027 = vmul.f32 %v2989, %v3011
        %v3028 = vmul.f32 %v2991, %v3012
        %v3029 = vmul.f32 %v2993, %v3013
        %v3030 = vmul.f32 %v2995, %v3014
        %v3031 = vmul.f32 %v2997, %v3015
        %v3032 = vmul.f32 %v2999, %v3016
        %v3033 = vmul.f32 %v3001, %v3017
        %v3034 = vsub.f32 2.0, %v3018
        %v3035 = vsub.f32 2.0, %v3019
        %v3036 = vsub.f32 2.0, %v3020
        %v3037 = vsub.f32 2.0, %v3021
        %v3038 = vsub.f32 2.0, %v3022
        %v3039 = vsub.f32 2.0, %v3023
        %v3040 = vsub.f32 2.0, %v3024
        %v3041 = vsub.f32 2.0, %v3025
        %v3042 = vsub.f32 2.0, %v3026
        %v3043 = vsub.f32 2.0, %v3027
        %v3044 = vsub.f32 2.0, %v3028
        %v3045 = vsub.f32 2.0, %v3029
        %v3046 = vsub.f32 2.0, %v3030
        %v3047 = vsub.f32 2.0, %v3031
        %v3048 = vsub.f32 2.0, %v3032
        %v3049 = vsub.f32 2.0, %v3033
        %v3050 = vmul.f32 %v3002, %v3034
        %v3051 = vmul.f32 %v3003, %v3035
        %v3052 = vmul.f32 %v3004, %v3036
        %v3053 = vmul.f32 %v3005, %v3037
        %v3054 = vmul.f32 %v3006, %v3038
        %v3055 = vmul.f32 %v3007, %v3039
        %v3056 = vmul.f32 %v3008, %v3040
        %v3057 = vmul.f32 %v3009, %v3041
        %v3058 = vmul.f32 %v3010, %v3042
        %v3059 = vmul.f32 %v3011, %v3043
        %v3060 = vmul.f32 %v3012, %v3044
        %v3061 = vmul.f32 %v3013, %v3045
        %v3062 = vmul.f32 %v3014, %v3046
        %v3063 = vmul.f32 %v3015, %v3047
        %v3064 = vmul.f32 %v3016, %v3048
        %v3065 = vmul.f32 %v3017, %v3049
        %v3066 = vmul.f32 %v2939, %v3050
        %v3067 = vmul.f32 %v2941, %v3051
        %v3068 = vmul.f32 %v2943, %v3052
        %v3069 = vmul.f32 %v2945, %v3053
        %v3070 = vmul.f32 %v2947, %v3054
        %v3071 = vmul.f32 %v2949, %v3055
        %v3072 = vmul.f32 %v2951, %v3056
        %v3073 = vmul.f32 %v2953, %v3057
        %v3074 = vmul.f32 %v2955, %v3058
        %v3075 = vmul.f32 %v2957, %v3059
        %v3076 = vmul.f32 %v2959, %v3060
        %v3077 = vmul.f32 %v2961, %v3061
        %v3078 = vmul.f32 %v2963, %v3062
        %v3079 = vmul.f32 %v2965, %v3063
        %v3080 = vmul.f32 %v2967, %v3064
        %v3081 = vmul.f32 %v2969, %v3065
        %s3082 = scalar_lea.vmem %s334, 384 [#allocation3]
        %3083 = vst [vmem:[%s3082] sm:$0xff] %v3066
        %3084 = vst [vmem:[%s3082 + $0x8] sm:$0xff] %v3067
        %3085 = vst [vmem:[%s3082 + $0x10] sm:$0xff] %v3068
        %3086 = vst [vmem:[%s3082 + $0x18] sm:$0xff] %v3069
        %3087 = vst [vmem:[%s3082 + $0x20] sm:$0xff] %v3070
        %3088 = vst [vmem:[%s3082 + $0x28] sm:$0xff] %v3071
        %3089 = vst [vmem:[%s3082 + $0x30] sm:$0xff] %v3072
        %3090 = vst [vmem:[%s3082 + $0x38] sm:$0xff] %v3073
        %3091 = vst [vmem:[%s3082 + $0x40] sm:$0xff] %v3074
        %3092 = vst [vmem:[%s3082 + $0x48] sm:$0xff] %v3075
        %3093 = vst [vmem:[%s3082 + $0x50] sm:$0xff] %v3076
        %3094 = vst [vmem:[%s3082 + $0x58] sm:$0xff] %v3077
        %3095 = vst [vmem:[%s3082 + $0x60] sm:$0xff] %v3078
        %3096 = vst [vmem:[%s3082 + $0x68] sm:$0xff] %v3079
        %3097 = vst [vmem:[%s3082 + $0x70] sm:$0xff] %v3080
        %3098 = vst [vmem:[%s3082 + $0x78] sm:$0xff] %v3081
        %3099 = vrot.lane.b32.xlu0 %v502, 40
        %v3100 = vpop.permute.xlu0 %3099
        %3101 = vrot.lane.b32.xlu0 %v507, 40
        %v3102 = vpop.permute.xlu0 %3101
        %3103 = vrot.lane.b32.xlu0 %v512, 40
        %v3104 = vpop.permute.xlu0 %3103
        %3105 = vrot.lane.b32.xlu0 %v517, 40
        %v3106 = vpop.permute.xlu0 %3105
        %3107 = vrot.lane.b32.xlu0 %v522, 40
        %v3108 = vpop.permute.xlu0 %3107
        %3109 = vrot.lane.b32.xlu0 %v527, 40
        %v3110 = vpop.permute.xlu0 %3109
        %3111 = vrot.lane.b32.xlu0 %v532, 40
        %v3112 = vpop.permute.xlu0 %3111
        %3113 = vrot.lane.b32.xlu0 %v537, 40
        %v3114 = vpop.permute.xlu0 %3113
        %3115 = vrot.lane.b32.xlu0 %v542, 40
        %v3116 = vpop.permute.xlu0 %3115
        %3117 = vrot.lane.b32.xlu0 %v547, 40
        %v3118 = vpop.permute.xlu0 %3117
        %3119 = vrot.lane.b32.xlu0 %v552, 40
        %v3120 = vpop.permute.xlu0 %3119
        %3121 = vrot.lane.b32.xlu0 %v557, 40
        %v3122 = vpop.permute.xlu0 %3121
        %3123 = vrot.lane.b32.xlu0 %v562, 40
        %v3124 = vpop.permute.xlu0 %3123
        %3125 = vrot.lane.b32.xlu0 %v567, 40
        %v3126 = vpop.permute.xlu0 %3125
        %3127 = vrot.lane.b32.xlu0 %v572, 40
        %v3128 = vpop.permute.xlu0 %3127
        %3129 = vrot.lane.b32.xlu0 %v577, 40
        %v3130 = vpop.permute.xlu0 %3129
        %3147 = vmatprep.subr.mxu0 0.0
        %3148 = vmatpush1.msra.mxu0 %v3130
        %3149 = vmatprep.subr.mxu0 0.0
        %3150 = vmatpush1.msra.mxu0 %v3128
        %3151 = vmatprep.subr.mxu0 0.0
        %3152 = vmatpush1.msra.mxu0 %v3126
        %3153 = vmatprep.subr.mxu0 0.0
        %3154 = vmatpush1.msra.mxu0 %v3124
        %3155 = vmatprep.subr.mxu0 0.0
        %3156 = vmatpush1.msra.mxu0 %v3122
        %3157 = vmatprep.subr.mxu0 0.0
        %3158 = vmatpush1.msra.mxu0 %v3120
        %3159 = vmatprep.subr.mxu0 0.0
        %3160 = vmatpush1.msra.mxu0 %v3118
        %3161 = vmatprep.subr.mxu0 0.0
        %3162 = vmatpush1.msra.mxu0 %v3116
        %3163 = vmatprep.subr.mxu0 0.0
        %3164 = vmatpush1.msra.mxu0 %v3114
        %3165 = vmatprep.subr.mxu0 0.0
        %3166 = vmatpush1.msra.mxu0 %v3112
        %3167 = vmatprep.subr.mxu0 0.0
        %3168 = vmatpush1.msra.mxu0 %v3110
        %3169 = vmatprep.subr.mxu0 0.0
        %3170 = vmatpush1.msra.mxu0 %v3108
        %3171 = vmatprep.subr.mxu0 0.0
        %3172 = vmatpush1.msra.mxu0 %v3106
        %3173 = vmatprep.subr.mxu0 0.0
        %3174 = vmatpush1.msra.mxu0 %v3104
        %3175 = vmatprep.subr.mxu0 0.0
        %3176 = vmatpush1.msra.mxu0 %v3102
        %3177 = vmatprep.subr.mxu0 0.0
        %3178 = vmatpush1.msra.mxu0 %v3100
        %3179 = vmatprep.subr.mxu0 0.0
        %3180 = vmatpush2.msra.mxu0 0.0
        %3181 = vmatprep.subr.mxu0 0.0
        %3182 = vmatpush2.msra.mxu0 0.0
        %3183 = vmatprep.subr.mxu0 0.0
        %3184 = vmatpush2.msra.mxu0 0.0
        %3185 = vmatprep.subr.mxu0 0.0
        %3186 = vmatpush2.msra.mxu0 0.0
        %3187 = vmatprep.subr.mxu0 0.0
        %3188 = vmatpush2.msra.mxu0 0.0
        %3189 = vmatprep.subr.mxu0 0.0
        %3190 = vmatpush2.msra.mxu0 0.0
        %3191 = vmatprep.subr.mxu0 0.0
        %3192 = vmatpush2.msra.mxu0 0.0
        %3193 = vmatprep.subr.mxu0 0.0
        %3194 = vmatpush2.msra.mxu0 0.0
        %3195 = vmatprep.subr.mxu0 0.0
        %3196 = vmatpush2.msra.mxu0 0.0
        %3197 = vmatprep.subr.mxu0 0.0
        %3198 = vmatpush2.msra.mxu0 0.0
        %3199 = vmatprep.subr.mxu0 0.0
        %3200 = vmatpush2.msra.mxu0 0.0
        %3201 = vmatprep.subr.mxu0 0.0
        %3202 = vmatpush2.msra.mxu0 0.0
        %3203 = vmatprep.subr.mxu0 0.0
        %3204 = vmatpush2.msra.mxu0 0.0
        %3205 = vmatprep.subr.mxu0 0.0
        %3206 = vmatpush2.msra.mxu0 0.0
        %3207 = vmatprep.subr.mxu0 0.0
        %3208 = vmatpush2.msra.mxu0 0.0
        %3209 = vmatprep.subr.mxu0 0.0
        %3210 = vmatpush2.msra.mxu0 0.0
        %3211 = vmatprep.mubr.f32.mxu0 0.0
        %3212 = vmatmul.mubr.f32.gmra.mxu0 %v3066
        %v3213 = vpop.f32.mrf.mxu0
        %v3214 = vadd.f32 0.0, %v3213
        %v3215 = vpop.f32.mrf.mxu0
        %3216 = vmatprep.mubr.f32.mxu0 0.0
        %3217 = vmatmul.mubr.f32.gmra.mxu0 %v3067
        %v3218 = vpop.f32.mrf.mxu0
        %v3219 = vadd.f32 0.0, %v3218
        %v3220 = vpop.f32.mrf.mxu0
        %3221 = vmatprep.mubr.f32.mxu0 0.0
        %3222 = vmatmul.mubr.f32.gmra.mxu0 %v3068
        %v3223 = vpop.f32.mrf.mxu0
        %v3224 = vadd.f32 0.0, %v3223
        %v3225 = vpop.f32.mrf.mxu0
        %3226 = vmatprep.mubr.f32.mxu0 0.0
        %3227 = vmatmul.mubr.f32.gmra.mxu0 %v3069
        %v3228 = vpop.f32.mrf.mxu0
        %v3229 = vadd.f32 0.0, %v3228
        %v3230 = vpop.f32.mrf.mxu0
        %3231 = vmatprep.mubr.f32.mxu0 0.0
        %3232 = vmatmul.mubr.f32.gmra.mxu0 %v3070
        %v3233 = vpop.f32.mrf.mxu0
        %v3234 = vadd.f32 0.0, %v3233
        %v3235 = vpop.f32.mrf.mxu0
        %3236 = vmatprep.mubr.f32.mxu0 0.0
        %3237 = vmatmul.mubr.f32.gmra.mxu0 %v3071
        %v3238 = vpop.f32.mrf.mxu0
        %v3239 = vadd.f32 0.0, %v3238
        %v3240 = vpop.f32.mrf.mxu0
        %3241 = vmatprep.mubr.f32.mxu0 0.0
        %3242 = vmatmul.mubr.f32.gmra.mxu0 %v3072
        %v3243 = vpop.f32.mrf.mxu0
        %v3244 = vadd.f32 0.0, %v3243
        %v3245 = vpop.f32.mrf.mxu0
        %3246 = vmatprep.mubr.f32.mxu0 0.0
        %3247 = vmatmul.mubr.f32.gmra.mxu0 %v3073
        %v3248 = vpop.f32.mrf.mxu0
        %v3249 = vadd.f32 0.0, %v3248
        %v3250 = vpop.f32.mrf.mxu0
        %3251 = vmatprep.mubr.f32.mxu0 0.0
        %3252 = vmatmul.mubr.f32.gmra.mxu0 %v3074
        %v3253 = vpop.f32.mrf.mxu0
        %v3254 = vadd.f32 0.0, %v3253
        %v3255 = vpop.f32.mrf.mxu0
        %3256 = vmatprep.mubr.f32.mxu0 0.0
        %3257 = vmatmul.mubr.f32.gmra.mxu0 %v3075
        %v3258 = vpop.f32.mrf.mxu0
        %v3259 = vadd.f32 0.0, %v3258
        %v3260 = vpop.f32.mrf.mxu0
        %3261 = vmatprep.mubr.f32.mxu0 0.0
        %3262 = vmatmul.mubr.f32.gmra.mxu0 %v3076
        %v3263 = vpop.f32.mrf.mxu0
        %v3264 = vadd.f32 0.0, %v3263
        %v3265 = vpop.f32.mrf.mxu0
        %3266 = vmatprep.mubr.f32.mxu0 0.0
        %3267 = vmatmul.mubr.f32.gmra.mxu0 %v3077
        %v3268 = vpop.f32.mrf.mxu0
        %v3269 = vadd.f32 0.0, %v3268
        %v3270 = vpop.f32.mrf.mxu0
        %3271 = vmatprep.mubr.f32.mxu0 0.0
        %3272 = vmatmul.mubr.f32.gmra.mxu0 %v3078
        %v3273 = vpop.f32.mrf.mxu0
        %v3274 = vadd.f32 0.0, %v3273
        %v3275 = vpop.f32.mrf.mxu0
        %3276 = vmatprep.mubr.f32.mxu0 0.0
        %3277 = vmatmul.mubr.f32.gmra.mxu0 %v3079
        %v3278 = vpop.f32.mrf.mxu0
        %v3279 = vadd.f32 0.0, %v3278
        %v3280 = vpop.f32.mrf.mxu0
        %3281 = vmatprep.mubr.f32.mxu0 0.0
        %3282 = vmatmul.mubr.f32.gmra.mxu0 %v3080
        %v3283 = vpop.f32.mrf.mxu0
        %v3284 = vadd.f32 0.0, %v3283
        %v3285 = vpop.f32.mrf.mxu0
        %3286 = vmatprep.mubr.f32.mxu0 0.0
        %3287 = vmatmul.mubr.f32.gmra.mxu0 %v3081
        %v3288 = vpop.f32.mrf.mxu0
        %v3289 = vadd.f32 0.0, %v3288
        %v3290 = vpop.f32.mrf.mxu0
        %3291 = vdwg.mxu0
        %3308 = vrot.lane.b32.xlu0 %v1850, 8
        %v3309 = vpop.permute.xlu0 %3308
        %3310 = vrot.lane.b32.xlu0 %v1855, 8
        %v3311 = vpop.permute.xlu0 %3310
        %3312 = vrot.lane.b32.xlu0 %v1860, 8
        %v3313 = vpop.permute.xlu0 %3312
        %3314 = vrot.lane.b32.xlu0 %v1865, 8
        %v3315 = vpop.permute.xlu0 %3314
        %3316 = vrot.lane.b32.xlu0 %v1870, 8
        %v3317 = vpop.permute.xlu0 %3316
        %3318 = vrot.lane.b32.xlu0 %v1875, 8
        %v3319 = vpop.permute.xlu0 %3318
        %3320 = vrot.lane.b32.xlu0 %v1880, 8
        %v3321 = vpop.permute.xlu0 %3320
        %3322 = vrot.lane.b32.xlu0 %v1885, 8
        %v3323 = vpop.permute.xlu0 %3322
        %3324 = vrot.lane.b32.xlu0 %v1890, 8
        %v3325 = vpop.permute.xlu0 %3324
        %3326 = vrot.lane.b32.xlu0 %v1895, 8
        %v3327 = vpop.permute.xlu0 %3326
        %3328 = vrot.lane.b32.xlu0 %v1900, 8
        %v3329 = vpop.permute.xlu0 %3328
        %3330 = vrot.lane.b32.xlu0 %v1905, 8
        %v3331 = vpop.permute.xlu0 %3330
        %3332 = vrot.lane.b32.xlu0 %v1910, 8
        %v3333 = vpop.permute.xlu0 %3332
        %3334 = vrot.lane.b32.xlu0 %v1915, 8
        %v3335 = vpop.permute.xlu0 %3334
        %3336 = vrot.lane.b32.xlu0 %v1920, 8
        %v3337 = vpop.permute.xlu0 %3336
        %3338 = vrot.lane.b32.xlu0 %v1925, 8
        %v3339 = vpop.permute.xlu0 %3338
        %3372 = vrot.lane.b32.xlu0 %v2532, 16
        %v3373 = vpop.permute.xlu0 %3372
        %3374 = vrot.lane.b32.xlu0 %v2537, 16
        %v3375 = vpop.permute.xlu0 %3374
        %3376 = vrot.lane.b32.xlu0 %v2542, 16
        %v3377 = vpop.permute.xlu0 %3376
        %3378 = vrot.lane.b32.xlu0 %v2547, 16
        %v3379 = vpop.permute.xlu0 %3378
        %3380 = vrot.lane.b32.xlu0 %v2552, 16
        %v3381 = vpop.permute.xlu0 %3380
        %3382 = vrot.lane.b32.xlu0 %v2557, 16
        %v3383 = vpop.permute.xlu0 %3382
        %3384 = vrot.lane.b32.xlu0 %v2562, 16
        %v3385 = vpop.permute.xlu0 %3384
        %3386 = vrot.lane.b32.xlu0 %v2567, 16
        %v3387 = vpop.permute.xlu0 %3386
        %3388 = vrot.lane.b32.xlu0 %v2572, 16
        %v3389 = vpop.permute.xlu0 %3388
        %3390 = vrot.lane.b32.xlu0 %v2577, 16
        %v3391 = vpop.permute.xlu0 %3390
        %3392 = vrot.lane.b32.xlu0 %v2582, 16
        %v3393 = vpop.permute.xlu0 %3392
        %3394 = vrot.lane.b32.xlu0 %v2587, 16
        %v3395 = vpop.permute.xlu0 %3394
        %3396 = vrot.lane.b32.xlu0 %v2592, 16
        %v3397 = vpop.permute.xlu0 %3396
        %3398 = vrot.lane.b32.xlu0 %v2597, 16
        %v3399 = vpop.permute.xlu0 %3398
        %3400 = vrot.lane.b32.xlu0 %v2602, 16
        %v3401 = vpop.permute.xlu0 %3400
        %3402 = vrot.lane.b32.xlu0 %v2607, 16
        %v3403 = vpop.permute.xlu0 %3402
        %3436 = vrot.lane.b32.xlu0 %v3214, 24
        %v3437 = vpop.permute.xlu0 %3436
        %3438 = vrot.lane.b32.xlu0 %v3219, 24
        %v3439 = vpop.permute.xlu0 %3438
        %3440 = vrot.lane.b32.xlu0 %v3224, 24
        %v3441 = vpop.permute.xlu0 %3440
        %3442 = vrot.lane.b32.xlu0 %v3229, 24
        %v3443 = vpop.permute.xlu0 %3442
        %3444 = vrot.lane.b32.xlu0 %v3234, 24
        %v3445 = vpop.permute.xlu0 %3444
        %3446 = vrot.lane.b32.xlu0 %v3239, 24
        %v3447 = vpop.permute.xlu0 %3446
        %3448 = vrot.lane.b32.xlu0 %v3244, 24
        %v3449 = vpop.permute.xlu0 %3448
        %3450 = vrot.lane.b32.xlu0 %v3249, 24
        %v3451 = vpop.permute.xlu0 %3450
        %3452 = vrot.lane.b32.xlu0 %v3254, 24
        %v3453 = vpop.permute.xlu0 %3452
        %3454 = vrot.lane.b32.xlu0 %v3259, 24
        %v3455 = vpop.permute.xlu0 %3454
        %3456 = vrot.lane.b32.xlu0 %v3264, 24
        %v3457 = vpop.permute.xlu0 %3456
        %3458 = vrot.lane.b32.xlu0 %v3269, 24
        %v3459 = vpop.permute.xlu0 %3458
        %3460 = vrot.lane.b32.xlu0 %v3274, 24
        %v3461 = vpop.permute.xlu0 %3460
        %3462 = vrot.lane.b32.xlu0 %v3279, 24
        %v3463 = vpop.permute.xlu0 %3462
        %3464 = vrot.lane.b32.xlu0 %v3284, 24
        %v3465 = vpop.permute.xlu0 %3464
        %3466 = vrot.lane.b32.xlu0 %v3289, 24
        %v3467 = vpop.permute.xlu0 %3466
        %v3484 = vsel %vm635, %v1168, %v3309
        %v3485 = vsel %vm635, %v1173, %v3311
        %v3486 = vsel %vm635, %v1178, %v3313
        %v3487 = vsel %vm635, %v1183, %v3315
        %v3488 = vsel %vm635, %v1188, %v3317
        %v3489 = vsel %vm635, %v1193, %v3319
        %v3490 = vsel %vm635, %v1198, %v3321
        %v3491 = vsel %vm635, %v1203, %v3323
        %v3492 = vsel %vm635, %v1208, %v3325
        %v3493 = vsel %vm635, %v1213, %v3327
        %v3494 = vsel %vm635, %v1218, %v3329
        %v3495 = vsel %vm635, %v1223, %v3331
        %v3496 = vsel %vm635, %v1228, %v3333
        %v3497 = vsel %vm635, %v1233, %v3335
        %v3498 = vsel %vm635, %v1238, %v3337
        %v3499 = vsel %vm635, %v1243, %v3339
        %vm3500 = vcmask 130048
        %v3501 = vsel %vm3500, %v3484, %v3373
        %v3502 = vsel %vm3500, %v3485, %v3375
        %v3503 = vsel %vm3500, %v3486, %v3377
        %v3504 = vsel %vm3500, %v3487, %v3379
        %v3505 = vsel %vm3500, %v3488, %v3381
        %v3506 = vsel %vm3500, %v3489, %v3383
        %v3507 = vsel %vm3500, %v3490, %v3385
        %v3508 = vsel %vm3500, %v3491, %v3387
        %v3509 = vsel %vm3500, %v3492, %v3389
        %v3510 = vsel %vm3500, %v3493, %v3391
        %v3511 = vsel %vm3500, %v3494, %v3393
        %v3512 = vsel %vm3500, %v3495, %v3395
        %v3513 = vsel %vm3500, %v3496, %v3397
        %v3514 = vsel %vm3500, %v3497, %v3399
        %v3515 = vsel %vm3500, %v3498, %v3401
        %v3516 = vsel %vm3500, %v3499, %v3403
        %vm3517 = vcmask 195584
        %v3518 = vsel %vm3517, %v3501, %v3437
        %v3519 = vsel %vm3517, %v3502, %v3439
        %v3520 = vsel %vm3517, %v3503, %v3441
        %v3521 = vsel %vm3517, %v3504, %v3443
        %v3522 = vsel %vm3517, %v3505, %v3445
        %v3523 = vsel %vm3517, %v3506, %v3447
        %v3524 = vsel %vm3517, %v3507, %v3449
        %v3525 = vsel %vm3517, %v3508, %v3451
        %v3526 = vsel %vm3517, %v3509, %v3453
        %v3527 = vsel %vm3517, %v3510, %v3455
        %v3528 = vsel %vm3517, %v3511, %v3457
        %v3529 = vsel %vm3517, %v3512, %v3459
        %v3530 = vsel %vm3517, %v3513, %v3461
        %v3531 = vsel %vm3517, %v3514, %v3463
        %v3532 = vsel %vm3517, %v3515, %v3465
        %v3533 = vsel %vm3517, %v3516, %v3467
        %v3534 = vld [vmem:[%s352] sm:$0xff]
        %v3535 = vld [vmem:[%s352 + $0x8] sm:$0xff]
        %v3536 = vld [vmem:[%s352 + $0x10] sm:$0xff]
        %v3537 = vld [vmem:[%s352 + $0x18] sm:$0xff]
        %v3539 = vsel %vm386, %v3518, 0
        %v3542 = vsel %vm386, %v3519, 0
        %v3545 = vsel %vm386, %v3520, 0
        %v3548 = vsel %vm386, %v3521, 0
        %v3551 = vsel %vm386, %v3522, 0
        %v3554 = vsel %vm386, %v3523, 0
        %v3557 = vsel %vm386, %v3524, 0
        %v3560 = vsel %vm386, %v3525, 0
        %v3563 = vsel %vm386, %v3526, 0
        %v3566 = vsel %vm386, %v3527, 0
        %v3569 = vsel %vm386, %v3528, 0
        %v3572 = vsel %vm386, %v3529, 0
        %v3575 = vsel %vm386, %v3530, 0
        %v3578 = vsel %vm386, %v3531, 0
        %v3581 = vsel %vm386, %v3532, 0
        %v3584 = vsel %vm386, %v3533, 0
        %3586 = vmatprep.subr.mxu0 0.0
        %3587 = vmatpush1.msra.mxu0 0.0
        %3588 = vmatprep.subr.mxu0 0.0
        %3589 = vmatpush1.msra.mxu0 0.0
        %3590 = vmatprep.subr.mxu0 0.0
        %3591 = vmatpush1.msra.mxu0 0.0
        %3592 = vmatprep.subr.mxu0 0.0
        %3593 = vmatpush1.msra.mxu0 0.0
        %3594 = vmatprep.subr.mxu0 0.0
        %3595 = vmatpush1.msra.mxu0 0.0
        %3596 = vmatprep.subr.mxu0 0.0
        %3597 = vmatpush1.msra.mxu0 0.0
        %3598 = vmatprep.subr.mxu0 0.0
        %3599 = vmatpush1.msra.mxu0 0.0
        %3600 = vmatprep.subr.mxu0 0.0
        %3601 = vmatpush1.msra.mxu0 0.0
        %3602 = vmatprep.subr.mxu0 0.0
        %3603 = vmatpush1.msra.mxu0 0.0
        %3604 = vmatprep.subr.mxu0 0.0
        %3605 = vmatpush1.msra.mxu0 0.0
        %3606 = vmatprep.subr.mxu0 0.0
        %3607 = vmatpush1.msra.mxu0 0.0
        %3608 = vmatprep.subr.mxu0 0.0
        %3609 = vmatpush1.msra.mxu0 0.0
        %3610 = vmatprep.subr.mxu0 0.0
        %3611 = vmatpush1.msra.mxu0 %v3537
        %3612 = vmatprep.subr.mxu0 0.0
        %3613 = vmatpush1.msra.mxu0 %v3536
        %3614 = vmatprep.subr.mxu0 0.0
        %3615 = vmatpush1.msra.mxu0 %v3535
        %3616 = vmatprep.subr.mxu0 0.0
        %3617 = vmatpush1.msra.mxu0 %v3534
        %3618 = vmatprep.subr.mxu0 0.0
        %3619 = vmatpush2.msra.mxu0 0.0
        %3620 = vmatprep.subr.mxu0 0.0
        %3621 = vmatpush2.msra.mxu0 0.0
        %3622 = vmatprep.subr.mxu0 0.0
        %3623 = vmatpush2.msra.mxu0 0.0
        %3624 = vmatprep.subr.mxu0 0.0
        %3625 = vmatpush2.msra.mxu0 0.0
        %3626 = vmatprep.subr.mxu0 0.0
        %3627 = vmatpush2.msra.mxu0 0.0
        %3628 = vmatprep.subr.mxu0 0.0
        %3629 = vmatpush2.msra.mxu0 0.0
        %3630 = vmatprep.subr.mxu0 0.0
        %3631 = vmatpush2.msra.mxu0 0.0
        %3632 = vmatprep.subr.mxu0 0.0
        %3633 = vmatpush2.msra.mxu0 0.0
        %3634 = vmatprep.subr.mxu0 0.0
        %3635 = vmatpush2.msra.mxu0 0.0
        %3636 = vmatprep.subr.mxu0 0.0
        %3637 = vmatpush2.msra.mxu0 0.0
        %3638 = vmatprep.subr.mxu0 0.0
        %3639 = vmatpush2.msra.mxu0 0.0
        %3640 = vmatprep.subr.mxu0 0.0
        %3641 = vmatpush2.msra.mxu0 0.0
        %3642 = vmatprep.subr.mxu0 0.0
        %3643 = vmatpush2.msra.mxu0 0.0
        %3644 = vmatprep.subr.mxu0 0.0
        %3645 = vmatpush2.msra.mxu0 0.0
        %3646 = vmatprep.subr.mxu0 0.0
        %3647 = vmatpush2.msra.mxu0 0.0
        %3648 = vmatprep.subr.mxu0 0.0
        %3649 = vmatpush2.msra.mxu0 0.0
        %3650 = vmatprep.mubr.f32.mxu0 0.0
        %3651 = vmatmul.mubr.f32.gmra.mxu0 %v3539
        %v3652 = vpop.f32.mrf.mxu0
        %v3653 = vadd.f32 0.0, %v3652
        %v3654 = vpop.f32.mrf.mxu0
        %3655 = vmatprep.mubr.f32.mxu0 0.0
        %3656 = vmatmul.mubr.f32.gmra.mxu0 %v3542
        %v3657 = vpop.f32.mrf.mxu0
        %v3658 = vadd.f32 0.0, %v3657
        %v3659 = vpop.f32.mrf.mxu0
        %3660 = vmatprep.mubr.f32.mxu0 0.0
        %3661 = vmatmul.mubr.f32.gmra.mxu0 %v3545
        %v3662 = vpop.f32.mrf.mxu0
        %v3663 = vadd.f32 0.0, %v3662
        %v3664 = vpop.f32.mrf.mxu0
        %3665 = vmatprep.mubr.f32.mxu0 0.0
        %3666 = vmatmul.mubr.f32.gmra.mxu0 %v3548
        %v3667 = vpop.f32.mrf.mxu0
        %v3668 = vadd.f32 0.0, %v3667
        %v3669 = vpop.f32.mrf.mxu0
        %3670 = vmatprep.mubr.f32.mxu0 0.0
        %3671 = vmatmul.mubr.f32.gmra.mxu0 %v3551
        %v3672 = vpop.f32.mrf.mxu0
        %v3673 = vadd.f32 0.0, %v3672
        %v3674 = vpop.f32.mrf.mxu0
        %3675 = vmatprep.mubr.f32.mxu0 0.0
        %3676 = vmatmul.mubr.f32.gmra.mxu0 %v3554
        %v3677 = vpop.f32.mrf.mxu0
        %v3678 = vadd.f32 0.0, %v3677
        %v3679 = vpop.f32.mrf.mxu0
        %3680 = vmatprep.mubr.f32.mxu0 0.0
        %3681 = vmatmul.mubr.f32.gmra.mxu0 %v3557
        %v3682 = vpop.f32.mrf.mxu0
        %v3683 = vadd.f32 0.0, %v3682
        %v3684 = vpop.f32.mrf.mxu0
        %3685 = vmatprep.mubr.f32.mxu0 0.0
        %3686 = vmatmul.mubr.f32.gmra.mxu0 %v3560
        %v3687 = vpop.f32.mrf.mxu0
        %v3688 = vadd.f32 0.0, %v3687
        %v3689 = vpop.f32.mrf.mxu0
        %3690 = vmatprep.mubr.f32.mxu0 0.0
        %3691 = vmatmul.mubr.f32.gmra.mxu0 %v3563
        %v3692 = vpop.f32.mrf.mxu0
        %v3693 = vadd.f32 0.0, %v3692
        %v3694 = vpop.f32.mrf.mxu0
        %3695 = vmatprep.mubr.f32.mxu0 0.0
        %3696 = vmatmul.mubr.f32.gmra.mxu0 %v3566
        %v3697 = vpop.f32.mrf.mxu0
        %v3698 = vadd.f32 0.0, %v3697
        %v3699 = vpop.f32.mrf.mxu0
        %3700 = vmatprep.mubr.f32.mxu0 0.0
        %3701 = vmatmul.mubr.f32.gmra.mxu0 %v3569
        %v3702 = vpop.f32.mrf.mxu0
        %v3703 = vadd.f32 0.0, %v3702
        %v3704 = vpop.f32.mrf.mxu0
        %3705 = vmatprep.mubr.f32.mxu0 0.0
        %3706 = vmatmul.mubr.f32.gmra.mxu0 %v3572
        %v3707 = vpop.f32.mrf.mxu0
        %v3708 = vadd.f32 0.0, %v3707
        %v3709 = vpop.f32.mrf.mxu0
        %3710 = vmatprep.mubr.f32.mxu0 0.0
        %3711 = vmatmul.mubr.f32.gmra.mxu0 %v3575
        %v3712 = vpop.f32.mrf.mxu0
        %v3713 = vadd.f32 0.0, %v3712
        %v3714 = vpop.f32.mrf.mxu0
        %3715 = vmatprep.mubr.f32.mxu0 0.0
        %3716 = vmatmul.mubr.f32.gmra.mxu0 %v3578
        %v3717 = vpop.f32.mrf.mxu0
        %v3718 = vadd.f32 0.0, %v3717
        %v3719 = vpop.f32.mrf.mxu0
        %3720 = vmatprep.mubr.f32.mxu0 0.0
        %3721 = vmatmul.mubr.f32.gmra.mxu0 %v3581
        %v3722 = vpop.f32.mrf.mxu0
        %v3723 = vadd.f32 0.0, %v3722
        %v3724 = vpop.f32.mrf.mxu0
        %3725 = vmatprep.mubr.f32.mxu0 0.0
        %3726 = vmatmul.mubr.f32.gmra.mxu0 %v3584
        %v3727 = vpop.f32.mrf.mxu0
        %v3728 = vadd.f32 0.0, %v3727
        %v3729 = vpop.f32.mrf.mxu0
        %3730 = vdwg.mxu0
        %p3731 = scmp.eq.s32.totalorder %s27, 0
        // Predicated region
        $region45: #{tpu_custom_call.1} parent=43 // pred_check
          %p3732 = pneg %p3731
        $region46: #{tpu_custom_call.1} parent=43 // pred_check_branch
          %3734 = sbr.rel (%p3732) target = $region48
        $region47: #{tpu_custom_call.1} parent=43 // pred_region
          %v3735 = vld [vmem:[%s4] sm:$0x1]
          %v3737 = vlaneseq
          %v3738 = vshrl.u32 %v3737, 7
          %v3739 = vsub.s32 0, %v3738
          %v3740 = vrot.slane %v3735, %v3739
          %3742 = vst.msk [vmem:[#allocation2] sm:$0xff] %vm386, %v3740
          %3743 = vst.msk [vmem:[#allocation2 + $0x8] sm:$0xff] %vm386, %v3740
          %3744 = vst.msk [vmem:[#allocation2 + $0x10] sm:$0xff] %vm386, %v3740
          %3745 = vst.msk [vmem:[#allocation2 + $0x18] sm:$0xff] %vm386, %v3740
          %3746 = vst.msk [vmem:[#allocation2 + $0x20] sm:$0xff] %vm386, %v3740
          %3747 = vst.msk [vmem:[#allocation2 + $0x28] sm:$0xff] %vm386, %v3740
          %3748 = vst.msk [vmem:[#allocation2 + $0x30] sm:$0xff] %vm386, %v3740
          %3749 = vst.msk [vmem:[#allocation2 + $0x38] sm:$0xff] %vm386, %v3740
          %3750 = vst.msk [vmem:[#allocation2 + $0x40] sm:$0xff] %vm386, %v3740
          %3751 = vst.msk [vmem:[#allocation2 + $0x48] sm:$0xff] %vm386, %v3740
          %3752 = vst.msk [vmem:[#allocation2 + $0x50] sm:$0xff] %vm386, %v3740
          %3753 = vst.msk [vmem:[#allocation2 + $0x58] sm:$0xff] %vm386, %v3740
          %3754 = vst.msk [vmem:[#allocation2 + $0x60] sm:$0xff] %vm386, %v3740
          %3755 = vst.msk [vmem:[#allocation2 + $0x68] sm:$0xff] %vm386, %v3740
          %3756 = vst.msk [vmem:[#allocation2 + $0x70] sm:$0xff] %vm386, %v3740
          %3757 = vst.msk [vmem:[#allocation2 + $0x78] sm:$0xff] %vm386, %v3740
        $region48: #{tpu_custom_call.1} parent=43 // pred_fallthru
          _
        %p3758 = scmp.ne.s32.totalorder %s27, 0
        // Predicated region
        $region49: #{tpu_custom_call.1} parent=43 // pred_check
          %p3759 = pneg %p3758
        $region50: #{tpu_custom_call.1} parent=43 // pred_check_branch
          %3761 = sbr.rel (%p3759) target = $region52
        $region51: #{tpu_custom_call.1} parent=43 // pred_region
          %v3762 = vld [vmem:[#allocation2] sm:$0xff]
          %v3763 = vld [vmem:[#allocation2 + $0x8] sm:$0xff]
          %v3764 = vld [vmem:[#allocation2 + $0x10] sm:$0xff]
          %v3765 = vld [vmem:[#allocation2 + $0x18] sm:$0xff]
          %v3766 = vld [vmem:[#allocation2 + $0x20] sm:$0xff]
          %v3767 = vld [vmem:[#allocation2 + $0x28] sm:$0xff]
          %v3768 = vld [vmem:[#allocation2 + $0x30] sm:$0xff]
          %v3769 = vld [vmem:[#allocation2 + $0x38] sm:$0xff]
          %v3770 = vld [vmem:[#allocation2 + $0x40] sm:$0xff]
          %v3771 = vld [vmem:[#allocation2 + $0x48] sm:$0xff]
          %v3772 = vld [vmem:[#allocation2 + $0x50] sm:$0xff]
          %v3773 = vld [vmem:[#allocation2 + $0x58] sm:$0xff]
          %v3774 = vld [vmem:[#allocation2 + $0x60] sm:$0xff]
          %v3775 = vld [vmem:[#allocation2 + $0x68] sm:$0xff]
          %v3776 = vld [vmem:[#allocation2 + $0x70] sm:$0xff]
          %v3777 = vld [vmem:[#allocation2 + $0x78] sm:$0xff]
          %v3778 = vadd.f32 %v3762, %v3653
          %v3779 = vadd.f32 %v3763, %v3658
          %v3780 = vadd.f32 %v3764, %v3663
          %v3781 = vadd.f32 %v3765, %v3668
          %v3782 = vadd.f32 %v3766, %v3673
          %v3783 = vadd.f32 %v3767, %v3678
          %v3784 = vadd.f32 %v3768, %v3683
          %v3785 = vadd.f32 %v3769, %v3688
          %v3786 = vadd.f32 %v3770, %v3693
          %v3787 = vadd.f32 %v3771, %v3698
          %v3788 = vadd.f32 %v3772, %v3703
          %v3789 = vadd.f32 %v3773, %v3708
          %v3790 = vadd.f32 %v3774, %v3713
          %v3791 = vadd.f32 %v3775, %v3718
          %v3792 = vadd.f32 %v3776, %v3723
          %v3793 = vadd.f32 %v3777, %v3728
          %3794 = vst.msk [vmem:[#allocation2] sm:$0xff] %vm386, %v3778
          %3795 = vst.msk [vmem:[#allocation2 + $0x8] sm:$0xff] %vm386, %v3779
          %3796 = vst.msk [vmem:[#allocation2 + $0x10] sm:$0xff] %vm386, %v3780
          %3797 = vst.msk [vmem:[#allocation2 + $0x18] sm:$0xff] %vm386, %v3781
          %3798 = vst.msk [vmem:[#allocation2 + $0x20] sm:$0xff] %vm386, %v3782
          %3799 = vst.msk [vmem:[#allocation2 + $0x28] sm:$0xff] %vm386, %v3783
          %3800 = vst.msk [vmem:[#allocation2 + $0x30] sm:$0xff] %vm386, %v3784
          %3801 = vst.msk [vmem:[#allocation2 + $0x38] sm:$0xff] %vm386, %v3785
          %3802 = vst.msk [vmem:[#allocation2 + $0x40] sm:$0xff] %vm386, %v3786
          %3803 = vst.msk [vmem:[#allocation2 + $0x48] sm:$0xff] %vm386, %v3787
          %3804 = vst.msk [vmem:[#allocation2 + $0x50] sm:$0xff] %vm386, %v3788
          %3805 = vst.msk [vmem:[#allocation2 + $0x58] sm:$0xff] %vm386, %v3789
          %3806 = vst.msk [vmem:[#allocation2 + $0x60] sm:$0xff] %vm386, %v3790
          %3807 = vst.msk [vmem:[#allocation2 + $0x68] sm:$0xff] %vm386, %v3791
          %3808 = vst.msk [vmem:[#allocation2 + $0x70] sm:$0xff] %vm386, %v3792
          %3809 = vst.msk [vmem:[#allocation2 + $0x78] sm:$0xff] %vm386, %v3793
        $region52: #{tpu_custom_call.1} parent=43 // pred_fallthru
          _
        // Predicated region
        $region53: #{tpu_custom_call.1} parent=43 // pred_check
          %p3810 = pneg %p3731
        $region54: #{tpu_custom_call.1} parent=43 // pred_check_branch
          %3812 = sbr.rel (%p3810) target = $region56
        $region55: #{tpu_custom_call.1} parent=43 // pred_region
          %v3813 = vld [vmem:[#allocation2] sm:$0xff]
          %v3814 = vld [vmem:[#allocation2 + $0x8] sm:$0xff]
          %v3815 = vld [vmem:[#allocation2 + $0x10] sm:$0xff]
          %v3816 = vld [vmem:[#allocation2 + $0x18] sm:$0xff]
          %v3817 = vld [vmem:[#allocation2 + $0x20] sm:$0xff]
          %v3818 = vld [vmem:[#allocation2 + $0x28] sm:$0xff]
          %v3819 = vld [vmem:[#allocation2 + $0x30] sm:$0xff]
          %v3820 = vld [vmem:[#allocation2 + $0x38] sm:$0xff]
          %v3821 = vld [vmem:[#allocation2 + $0x40] sm:$0xff]
          %v3822 = vld [vmem:[#allocation2 + $0x48] sm:$0xff]
          %v3823 = vld [vmem:[#allocation2 + $0x50] sm:$0xff]
          %v3824 = vld [vmem:[#allocation2 + $0x58] sm:$0xff]
          %v3825 = vld [vmem:[#allocation2 + $0x60] sm:$0xff]
          %v3826 = vld [vmem:[#allocation2 + $0x68] sm:$0xff]
          %v3827 = vld [vmem:[#allocation2 + $0x70] sm:$0xff]
          %v3828 = vld [vmem:[#allocation2 + $0x78] sm:$0xff]
          %v3829 = vadd.f32 %v3813, %v3653
          %v3830 = vadd.f32 %v3814, %v3658
          %v3831 = vadd.f32 %v3815, %v3663
          %v3832 = vadd.f32 %v3816, %v3668
          %v3833 = vadd.f32 %v3817, %v3673
          %v3834 = vadd.f32 %v3818, %v3678
          %v3835 = vadd.f32 %v3819, %v3683
          %v3836 = vadd.f32 %v3820, %v3688
          %v3837 = vadd.f32 %v3821, %v3693
          %v3838 = vadd.f32 %v3822, %v3698
          %v3839 = vadd.f32 %v3823, %v3703
          %v3840 = vadd.f32 %v3824, %v3708
          %v3841 = vadd.f32 %v3825, %v3713
          %v3842 = vadd.f32 %v3826, %v3718
          %v3843 = vadd.f32 %v3827, %v3723
          %v3844 = vadd.f32 %v3828, %v3728
          %3845 = vst.msk [vmem:[%s357] sm:$0xff] %vm386, %v3829
          %3846 = vst.msk [vmem:[%s357 + $0x8] sm:$0xff] %vm386, %v3830
          %3847 = vst.msk [vmem:[%s357 + $0x10] sm:$0xff] %vm386, %v3831
          %3848 = vst.msk [vmem:[%s357 + $0x18] sm:$0xff] %vm386, %v3832
          %3849 = vst.msk [vmem:[%s357 + $0x20] sm:$0xff] %vm386, %v3833
          %3850 = vst.msk [vmem:[%s357 + $0x28] sm:$0xff] %vm386, %v3834
          %3851 = vst.msk [vmem:[%s357 + $0x30] sm:$0xff] %vm386, %v3835
          %3852 = vst.msk [vmem:[%s357 + $0x38] sm:$0xff] %vm386, %v3836
          %3853 = vst.msk [vmem:[%s357 + $0x40] sm:$0xff] %vm386, %v3837
          %3854 = vst.msk [vmem:[%s357 + $0x48] sm:$0xff] %vm386, %v3838
          %3855 = vst.msk [vmem:[%s357 + $0x50] sm:$0xff] %vm386, %v3839
          %3856 = vst.msk [vmem:[%s357 + $0x58] sm:$0xff] %vm386, %v3840
          %3857 = vst.msk [vmem:[%s357 + $0x60] sm:$0xff] %vm386, %v3841
          %3858 = vst.msk [vmem:[%s357 + $0x68] sm:$0xff] %vm386, %v3842
          %3859 = vst.msk [vmem:[%s357 + $0x70] sm:$0xff] %vm386, %v3843
          %3860 = vst.msk [vmem:[%s357 + $0x78] sm:$0xff] %vm386, %v3844
        $region56: #{tpu_custom_call.1} parent=43 // pred_fallthru
          _
        %p3861 = scmp.lt.s32.totalorder %s26, 1
        %s3862 = scalar_select %p3861, %s26, 1
        %s3863 = smul.addr %s3862, 16
        %s3864 = smul.addr %s3863, 8
        %s3865 = scalar_lea.vmem %s6, %s3864
        %s3866 = sand.u32 %s216, 1
        %s3867 = scalar_lea.sflag [#allocation4], %s3866
        %s3868 = sand.u32 %s216, 1
        %s3869 = smul.addr %s3868, 512
        %s3870 = scalar_lea.vmem [#allocation3], %s3869
        // Predicated region
        $region57: #{tpu_custom_call.1} parent=43 // pred_check
          %p3871 = pneg %p198
        $region58: #{tpu_custom_call.1} parent=43 // pred_check_branch
          %3873 = sbr.rel (%p3871) target = $region60
        $region59: #{tpu_custom_call.1} parent=43 // pred_region
          _
        $region60: #{tpu_custom_call.1} parent=43 // pred_fallthru
          _
        // Predicated region
        $region61: #{tpu_custom_call.1} parent=43 // pred_check
          %p3874 = pneg %p226
        $region62: #{tpu_custom_call.1} parent=43 // pred_check_branch
          %3876 = sbr.rel (%p3874) target = $region64
        $region63: #{tpu_custom_call.1} parent=43 // pred_region
          %s3877 = smul.u32 4, %s27
          %s3879 = ssub.s32 8192, 8192
          %3880 = vsyncadd %s3867, %s3879
          %s3881 = smul.addr %s3877, 16
          %s3882 = smul.addr %s26, 64
          %s3883 = sadd.s32 %s3881, %s3882
          %s3884 = smul.addr %s3883, 128
          %s3885 = scalar_lea.hbm %s7, %s3884
          %s3886 = sshll.u32 %s3870, 4
          %s3887 = int_to_ptr.vmem [resolvable:$true] %s3886
          %3892 = dma.vmem_to_hbm [thread:$0]  %s3887, 8192, %s3885, %s3867, 128, 128, 8
        $region64: #{tpu_custom_call.1} parent=43 // pred_fallthru
          _
      $region44: #{tpu_custom_call.1} parent=5 // pred_fallthru
        _
      %p3893 = scmp.le.s32.totalorder 2, %s17
      // Predicated region
      $region65: #{tpu_custom_call.1} parent=5 // pred_check
        %p3894 = pneg %p3893
      $region66: #{tpu_custom_call.1} parent=5 // pred_check_branch
        %3896 = sbr.rel (%p3894) target = $region68
      $region67: #{tpu_custom_call.1} parent=5 // pred_region
        %s3897 = ssub.s32 %s17, 2
        // Predicated region
        $region69: #{tpu_custom_call.1} parent=67 // pred_check
          %p3898 = pneg %p204
        $region70: #{tpu_custom_call.1} parent=67 // pred_check_branch
          %3900 = sbr.rel (%p3898) target = $region72
        $region71: #{tpu_custom_call.1} parent=67 // pred_region
          %p3901 = scmp.lt.s32.totalorder %s28, 1
          %s3902 = scalar_select %p3901, %s28, 1
          %s3903 = smul.addr %s3902, 16
          %s3904 = smul.addr %s3903, 8
          %s3905 = scalar_lea.vmem %s6, %s3904
        $region72: #{tpu_custom_call.1} parent=67 // pred_fallthru
          _
        // Predicated region
        $region73: #{tpu_custom_call.1} parent=67 // pred_check
          %p3906 = pneg %p232
        $region74: #{tpu_custom_call.1} parent=67 // pred_check_branch
          %3908 = sbr.rel (%p3906) target = $region76
        $region75: #{tpu_custom_call.1} parent=67 // pred_region
          %s3909 = sand.u32 %s217, 1
          %s3910 = scalar_lea.sflag [#allocation4], %s3909
          %s3911 = sand.u32 %s217, 1
          %s3912 = smul.addr %s3911, 512
          %s3913 = scalar_lea.vmem [#allocation3], %s3912
          %3914 = dma.done %s3910, 8192
        $region76: #{tpu_custom_call.1} parent=67 // pred_fallthru
          _
      $region68: #{tpu_custom_call.1} parent=5 // pred_fallthru
        _
    $region6: #{tpu_custom_call.1} parent=1 // loop_footer
      %s21 = sadd.s32 1, %s17
    $region7: #{tpu_custom_call.1} parent=1 // loop_footer_branch
      %16 = sbr.rel target = $region3
    $region8: #{tpu_custom_call.1} parent=1 // loop_exit
      _
    %3915 = vsyncpa [#allocation4], 1
    %s3916 = scalar_lea.sflag [#allocation4], 1
    %3917 = vsyncpa %s3916, 1

</llo_original>
